<compile_context>
chip_gen: v5e
topology: v5e:2x2
jax: 0.10.0
libtpu: 0.0.40
codegen_flags: <defaults>
</compile_context>

<pallas_src>
import functools
import math

import jax
import jax.numpy as jnp
from jax import lax
from jax.experimental import pallas as pl
from jax.experimental.pallas import tpu as pltpu  # noqa: F401  (TPU backend registration)

# ---- DDPM_Params (fixed hyper-parameters from the module) ----
BETA_MIN = 1e-4
BETA_MAX = 0.02
T0 = 1e-5
T1 = 1.0
INPUT_SIZE = (1, 28, 28)               # (C, H, W)
D = INPUT_SIZE[0] * INPUT_SIZE[1] * INPUT_SIZE[2]


def _round_up(x, m):
    return ((x + m - 1) // m) * m


def _num_steps(dt):
    # Fixed grid t_i = -t1 + i*dt with the last point clamped to -t0
    # (matches torchdiffeq/torchsde fixed-step grid construction).
    return int(math.ceil(((-T0) - (-T1)) / dt))


def _step_times(i, dt, n):
    """Return (t0, t1, h) for step i of the fixed time grid (i is a traced int32)."""
    i_f = i.astype(jnp.float32)
    dt_f = jnp.float32(dt)
    t0 = jnp.float32(-T1) + i_f * dt_f
    t1 = jnp.where(i == n - 1,
                   jnp.float32(-T0),
                   jnp.float32(-T1) + (i_f + 1.0) * dt_f)
    return t0, t1, t1 - t0


# ---------------------------------------------------------------------------
# Fused ODE kernel: all n RK4 (3/8-rule) steps of the probability-flow ODE.
# The state lives in o_ref (whole-array VMEM output); W is bf16 (I + W) resident in VMEM.
# ---------------------------------------------------------------------------
def _ode_kernel(dt, n, x_ref, w_ref, b_ref, o_ref):
    o_ref[...] = x_ref[...]

    def drift(t, z):
        # DDPM_Reverse.prob_flow_ode: 0.5*beta(-t)*(z + s_theta) with the 'z +' folded into W.
        tau = -t
        beta = jnp.float32(BETA_MIN) + tau * jnp.float32(BETA_MAX - BETA_MIN)
        s = jnp.dot(z.astype(jnp.bfloat16), w_ref[...],
                    preferred_element_type=jnp.float32)
        return (0.5 * beta) * (s + tau * b_ref[...])

    def step(i, carry):
        t0, t1, h = _step_times(i, dt, n)
        y = o_ref[...]
        # torchdiffeq method='rk4' (rk4_alt_step_func, the 3/8 rule), accumulator restructured
        # to keep the live set small around the 3rd/4th matmuls.
        k1 = drift(t0, y)
        k2 = drift(t0 + h * (1.0 / 3.0), y + (h * (1.0 / 3.0)) * k1)
        acc = k1 + 3.0 * k2
        k3 = drift(t0 + h * (2.0 / 3.0), y + h * (k2 - (1.0 / 3.0) * k1))
        z4 = y + h * (k1 - k2 + k3)
        acc = acc + 3.0 * k3
        k4 = drift(t1, z4)
        o_ref[...] = y + (h * 0.125) * (acc + k4)
        return carry

    lax.fori_loop(0, n, step, 0)


# ---------------------------------------------------------------------------
# Fused SDE kernel: all n Stratonovich-midpoint steps of the reverse SDE.
# W is bf16 (0.5*I + W); the full (n, Bp, Dp) noise tensor sits in VMEM for the whole solve.
# ---------------------------------------------------------------------------
def _sde_kernel(dt, n, x_ref, w_ref, b_ref, dw_ref, o_ref):
    o_ref[...] = x_ref[...]

    def f_and_g(t, z):
        # DDPM_Reverse.f: 0.5*beta*z + beta*s_theta = beta*(z @ (0.5I+W) + tau*b)
        # DDPM_Reverse.g: -sqrt(beta(-t))  (scalar, diagonal noise)
        tau = -t
        beta = jnp.float32(BETA_MIN) + tau * jnp.float32(BETA_MAX - BETA_MIN)
        s = jnp.dot(z.astype(jnp.bfloat16), w_ref[...],
                    preferred_element_type=jnp.float32)
        f = beta * (s + tau * b_ref[...])
        g = -jnp.sqrt(beta)
        return f, g

    def step(i, carry):
        t0, t1, h = _step_times(i, dt, n)
        y = o_ref[...]
        dw = dw_ref[i] * jnp.sqrt(h)     # standard normal -> Brownian increment
        # torchsde sdeint (stratonovich, diagonal noise -> default 'midpoint' scheme)
        f0, g0 = f_and_g(t0, y)
        y_mid = y + (0.5 * h) * f0 + (0.5 * g0) * dw
        fm, gm = f_and_g(t0 + 0.5 * h, y_mid)
        o_ref[...] = y + h * fm + gm * dw
        return carry

    lax.fori_loop(0, n, step, 0)


# ---------------------------------------------------------------------------
# pallas_call wrappers: single launch, no grid, all operands fully VMEM-resident.
# ---------------------------------------------------------------------------
def _ode_solve(x_pad, w_pad, b_pad, dt, n):
    Bp, Dp = x_pad.shape
    kern = functools.partial(_ode_kernel, float(dt), int(n))
    return pl.pallas_call(
        kern,
        out_shape=jax.ShapeDtypeStruct((Bp, Dp), jnp.float32),
    )(x_pad, w_pad, b_pad)


def _sde_solve(x_pad, w_pad, b_pad, dw, dt, n):
    Bp, Dp = x_pad.shape
    kern = functools.partial(_sde_kernel, float(dt), int(n))
    return pl.pallas_call(
        kern,
        out_shape=jax.ShapeDtypeStruct((Bp, Dp), jnp.float32),
    )(x_pad, w_pad, b_pad, dw)


# ---------------------------------------------------------------------------
# DDPM_Reverse.forward: integrate from t=-t1 to t=-t0, return states at both times.
# ---------------------------------------------------------------------------
def ddpm_reverse_forward(x_t, w, b, dt=0.01, use_sde=True, key=None):
    B = x_t.shape[0]
    x_flat = x_t.reshape(B, -1).astype(jnp.float32)
    Dv = x_flat.shape[1]

    # Pad to clean TPU tiles: batch -> multiple of 8 sublanes, features -> multiple of 128 lanes.
    Bp = _round_up(max(B, 8), 8)
    Dp = _round_up(Dv, 128)

    x_pad = jnp.zeros((Bp, Dp), jnp.float32).at[:B, :Dv].set(x_flat)

    # Fold the elementwise drift term into the weight matrix:
    #   ODE: 0.5*beta*(z + z@W + tau*b)       = 0.5*beta*(z@(I   + W) + tau*b)
    #   SDE: 0.5*beta*z + beta*(z@W + tau*b)  =     beta*(z@(0.5I + W) + tau*b)
    eye_scale = 0.5 if use_sde else 1.0
    w_eff = w.astype(jnp.float32) + eye_scale * jnp.eye(Dv, dtype=jnp.float32)
    # bf16 weights (f32 MXU accumulation via preferred_element_type); pad rows/cols are zero.
    w_pad = jnp.zeros((Dp, Dp), jnp.bfloat16).at[:Dv, :Dv].set(w_eff.astype(jnp.bfloat16))
    b_pad = jnp.zeros((1, Dp), jnp.float32).at[:, :Dv].set(b.astype(jnp.float32))

    n = _num_steps(dt)

    if use_sde:
        # Noise generated directly at the padded shape: pad rows/cols of dw only perturb
        # pad rows/cols of y (W pad rows are zero), which are sliced off below.
        dw = jax.random.normal(key, (n, Bp, Dp), jnp.float32)
        y_final_pad = _sde_solve(x_pad, w_pad, b_pad, dw, dt, n)
    else:
        y_final_pad = _ode_solve(x_pad, w_pad, b_pad, dt, n)

    x0_final = y_final_pad[:B, :Dv]
    # sdeint/odeint return the solution at t = [-t1, -t0]: initial state, final state.
    out = jnp.stack([x_flat, x0_final], axis=0)
    return out.reshape((2,) + x_t.shape)


if __name__ == "__main__":
    key = jax.random.PRNGKey(0)
    k_x, k_w, k_b, k_noise = jax.random.split(key, 4)

    B = 2
    x_t = jax.random.normal(k_x, (B,) + INPUT_SIZE, jnp.float32)
    # deterministic synthetic score-net parameters (small init so the SDE stays well-behaved)
    w = jax.random.normal(k_w, (D, D), jnp.float32) * (0.02 / math.sqrt(D))
    b = jax.random.normal(k_b, (1, D), jnp.float32) * 0.02

    fwd = jax.jit(ddpm_reverse_forward, static_argnums=(3, 4))

    out_sde = fwd(x_t, w, b, 0.01, True, k_noise)    # default path: use_sde=True
    out_ode = fwd(x_t, w, b, 0.01, False, k_noise)   # prob-flow ODE path (rk4)
    jax.block_until_ready((out_sde, out_ode))

    assert out_sde.shape == (2, B) + INPUT_SIZE
    assert out_ode.shape == (2, B) + INPUT_SIZE
    assert bool(jnp.isfinite(out_sde).all())
    assert bool(jnp.isfinite(out_ode).all())
    # first time-slice must be the (flattened-and-reshaped) initial state x_t
    assert bool(jnp.allclose(out_ode[0], x_t))
    assert bool(jnp.allclose(out_sde[0], x_t))

    print("KERNEL_OK")
</pallas_src>

<mosaic_0001>
module attributes {stable_mosaic.version = 11 : i64} {
  func.func @_sde_kernel(%arg0: memref<8x896xf32, #tpu.memory_space<vmem>>, %arg1: memref<896x896xbf16, #tpu.memory_space<vmem>>, %arg2: memref<1x896xf32, #tpu.memory_space<vmem>>, %arg3: memref<100x8x896xf32, #tpu.memory_space<vmem>>, %arg4: memref<8x896xf32, #tpu.memory_space<vmem>>) attributes {dimension_semantics = [], scalar_prefetch = 0 : i64, scratch_operands = 0 : i64, tpu.core_type = #tpu.core_type<tc>} {
    %c0 = arith.constant 0 : index
    %c0_0 = arith.constant 0 : index
    %0 = vector.load %arg0[%c0, %c0_0] : memref<8x896xf32, #tpu.memory_space<vmem>>, vector<8x896xf32>
    %c0_1 = arith.constant 0 : index
    %c0_2 = arith.constant 0 : index
    %1 = vector.load %arg4[%c0_1, %c0_2] : memref<8x896xf32, #tpu.memory_space<vmem>>, vector<8x896xf32>
    tpu.vector_store %arg4[%c0_1, %c0_2], %0 {strides = array<i32>} : memref<8x896xf32, #tpu.memory_space<vmem>>, vector<8x896xf32>,
    %c0_i32 = arith.constant 0 : i32
    %c100_i32 = arith.constant 100 : i32
    %2 = arith.addi %c0_i32, %c100_i32 : i32
    %c1_i32 = arith.constant 1 : i32
    scf.for %arg5 = %c0_i32 to %2 step %c1_i32  : i32 {
      %3 = arith.sitofp %arg5 : i32 to f32
      %cst = arith.constant 0.00999999977 : f32
      %4 = arith.mulf %3, %cst : f32
      %cst_4 = arith.constant -1.000000e+00 : f32
      %5 = arith.addf %cst_4, %4 : f32
      %c99_i32 = arith.constant 99 : i32
      %6 = arith.cmpi eq, %arg5, %c99_i32 : i32
      %cst_5 = arith.constant 1.000000e+00 : f32
      %7 = arith.addf %3, %cst_5 : f32
      %cst_6 = arith.constant 0.00999999977 : f32
      %8 = arith.mulf %7, %cst_6 : f32
      %cst_7 = arith.constant -1.000000e+00 : f32
      %9 = arith.addf %cst_7, %8 : f32
      %cst_8 = arith.constant -9.99999974E-6 : f32
      %10 = arith.select %6, %cst_8, %9 : f32
      %11 = arith.subf %10, %5 : f32
      %c0_9 = arith.constant 0 : index
      %c0_10 = arith.constant 0 : index
      %12 = vector.load %arg4[%c0_9, %c0_10] : memref<8x896xf32, #tpu.memory_space<vmem>>, vector<8x896xf32>
      %13 = arith.index_cast %arg5 : i32 to index
      %c0_11 = arith.constant 0 : index
      %c0_12 = arith.constant 0 : index
      %14 = vector.load %arg3[%13, %c0_11, %c0_12] : memref<100x8x896xf32, #tpu.memory_space<vmem>>, vector<1x8x896xf32>
      %15 = vector.shape_cast %14 : vector<1x8x896xf32> to vector<8x896xf32>
      %16 = math.sqrt %11 : f32
      %17 = vector.broadcast %16 : f32 to vector<8x896xf32>
      %18 = arith.mulf %15, %17 : vector<8x896xf32>
      %cst_13 = arith.constant 0.000000e+00 : f32
      %19 = arith.subf %cst_13, %5 : f32
      %cst_14 = arith.constant 1.990000e-02 : f32
      %20 = arith.mulf %19, %cst_14 : f32
      %cst_15 = arith.constant 9.99999974E-5 : f32
      %21 = arith.addf %cst_15, %20 : f32
      %22 = arith.truncf %12 : vector<8x896xf32> to vector<8x896xbf16>
      %c0_16 = arith.constant 0 : index
      %c0_17 = arith.constant 0 : index
      %23 = vector.load %arg1[%c0_16, %c0_17] : memref<896x896xbf16, #tpu.memory_space<vmem>>, vector<896x896xbf16>
      %cst_18 = arith.constant dense<0.000000e+00> : vector<8x896xf32>
      %24 = tpu.matmul %22, %23, %cst_18 {dimension_numbers = #tpu.dot_dimension_numbers<[1], [0], [0], [1], [0, 0, 1, 1], [], []>} : vector<8x896xbf16>, vector<896x896xbf16>, vector<8x896xf32> -> vector<8x896xf32>
      %c0_19 = arith.constant 0 : index
      %c0_20 = arith.constant 0 : index
      %25 = vector.load %arg2[%c0_19, %c0_20] : memref<1x896xf32, #tpu.memory_space<vmem>>, vector<1x896xf32>
      %26 = vector.broadcast %19 : f32 to vector<1x896xf32>
      %27 = arith.mulf %26, %25 : vector<1x896xf32>
      %28 = vector.broadcast %27 : vector<1x896xf32> to vector<8x896xf32>
      %29 = arith.addf %24, %28 : vector<8x896xf32>
      %30 = vector.broadcast %21 : f32 to vector<8x896xf32>
      %31 = arith.mulf %30, %29 : vector<8x896xf32>
      %32 = math.sqrt %21 : f32
      %cst_21 = arith.constant 0.000000e+00 : f32
      %33 = arith.subf %cst_21, %32 : f32
      %cst_22 = arith.constant 5.000000e-01 : f32
      %34 = arith.mulf %cst_22, %11 : f32
      %35 = vector.broadcast %34 : f32 to vector<8x896xf32>
      %36 = arith.mulf %35, %31 : vector<8x896xf32>
      %37 = arith.addf %12, %36 : vector<8x896xf32>
      %cst_23 = arith.constant 5.000000e-01 : f32
      %38 = arith.mulf %cst_23, %33 : f32
      %39 = vector.broadcast %38 : f32 to vector<8x896xf32>
      %40 = arith.mulf %39, %18 : vector<8x896xf32>
      %41 = arith.addf %37, %40 : vector<8x896xf32>
      %cst_24 = arith.constant 5.000000e-01 : f32
      %42 = arith.mulf %cst_24, %11 : f32
      %43 = arith.addf %5, %42 : f32
      %cst_25 = arith.constant 0.000000e+00 : f32
      %44 = arith.subf %cst_25, %43 : f32
      %cst_26 = arith.constant 1.990000e-02 : f32
      %45 = arith.mulf %44, %cst_26 : f32
      %cst_27 = arith.constant 9.99999974E-5 : f32
      %46 = arith.addf %cst_27, %45 : f32
      %47 = arith.truncf %41 : vector<8x896xf32> to vector<8x896xbf16>
      %c0_28 = arith.constant 0 : index
      %c0_29 = arith.constant 0 : index
      %48 = vector.load %arg1[%c0_28, %c0_29] : memref<896x896xbf16, #tpu.memory_space<vmem>>, vector<896x896xbf16>
      %cst_30 = arith.constant dense<0.000000e+00> : vector<8x896xf32>
      %49 = tpu.matmul %47, %48, %cst_30 {dimension_numbers = #tpu.dot_dimension_numbers<[1], [0], [0], [1], [0, 0, 1, 1], [], []>} : vector<8x896xbf16>, vector<896x896xbf16>, vector<8x896xf32> -> vector<8x896xf32>
      %c0_31 = arith.constant 0 : index
      %c0_32 = arith.constant 0 : index
      %50 = vector.load %arg2[%c0_31, %c0_32] : memref<1x896xf32, #tpu.memory_space<vmem>>, vector<1x896xf32>
      %51 = vector.broadcast %44 : f32 to vector<1x896xf32>
      %52 = arith.mulf %51, %50 : vector<1x896xf32>
      %53 = vector.broadcast %52 : vector<1x896xf32> to vector<8x896xf32>
      %54 = arith.addf %49, %53 : vector<8x896xf32>
      %55 = vector.broadcast %46 : f32 to vector<8x896xf32>
      %56 = arith.mulf %55, %54 : vector<8x896xf32>
      %57 = math.sqrt %46 : f32
      %cst_33 = arith.constant 0.000000e+00 : f32
      %58 = arith.subf %cst_33, %57 : f32
      %59 = vector.broadcast %11 : f32 to vector<8x896xf32>
      %60 = arith.mulf %59, %56 : vector<8x896xf32>
      %61 = arith.addf %12, %60 : vector<8x896xf32>
      %62 = vector.broadcast %58 : f32 to vector<8x896xf32>
      %63 = arith.mulf %62, %18 : vector<8x896xf32>
      %64 = arith.addf %61, %63 : vector<8x896xf32>
      %c0_34 = arith.constant 0 : index
      %c0_35 = arith.constant 0 : index
      %65 = vector.load %arg4[%c0_34, %c0_35] : memref<8x896xf32, #tpu.memory_space<vmem>>, vector<8x896xf32>
      tpu.vector_store %arg4[%c0_34, %c0_35], %64 {strides = array<i32>} : memref<8x896xf32, #tpu.memory_space<vmem>>, vector<8x896xf32>,
    }
    %c100_i32_3 = arith.constant 100 : i32
    return
  }
}

</mosaic_0001>

<llo_original>
// kernel: ddpm_reverse_forward.1
$region0: #{ddpm_reverse_forward.1}
  #allocation0 [shape = 'u32[]', space=smem, size = 0x4, offset = 0x4, fixed_abs, tag = 'smem constant byte address 0x4 - core index']
  #allocation1 [shape = 'u32[72,128]{1,0:T(1,128)}', space=vmem, size = 0x9000, scoped, tag = 'internal scratch']
  %s0 = inlined_call_operand.vmem [shape: f32[8,896], index: 0, kind: input, shape index: {}]
  %s1 = inlined_call_operand.vmem [shape: bf16[896,896], index: 1, kind: input, shape index: {}]
  %s2 = inlined_call_operand.vmem [shape: f32[1,896], index: 2, kind: input, shape index: {}]
  %s3 = inlined_call_operand.vmem [shape: f32[100,8,896], index: 3, kind: input, shape index: {}]
  %s4 = inlined_call_operand.vmem [shape: f32[8,896], index: 4, kind: output, shape index: {}]
  %s5 = sld [smem:[#allocation0]]
  $region33: #{ddpm_reverse_forward.1} parent=0
    _
  %s7 = ssub.s32 1, %s5
  %s8 = scalar_select 0, %s7, %s5
  // Predicated region
  $region2: #{ddpm_reverse_forward.1} parent=0 // pred_check
    _
  $region3: #{ddpm_reverse_forward.1} parent=0 // pred_check_branch
    %10 = sbr.rel (0) target = $region5
  $region4: #{ddpm_reverse_forward.1} parent=0 // pred_region
    _
  $region5: #{ddpm_reverse_forward.1} parent=0 // pred_fallthru
    _
  // Predicated region
  $region6: #{ddpm_reverse_forward.1} parent=0 // pred_check
    _
  $region7: #{ddpm_reverse_forward.1} parent=0 // pred_check_branch
    %12 = sbr.rel (0) target = $region9
  $region8: #{ddpm_reverse_forward.1} parent=0 // pred_region
    _
  $region9: #{ddpm_reverse_forward.1} parent=0 // pred_fallthru
    _
  // Predicated region
  $region10: #{ddpm_reverse_forward.1} parent=0 // pred_check
    _
  $region11: #{ddpm_reverse_forward.1} parent=0 // pred_check_branch
    %14 = sbr.rel (0) target = $region13
  $region12: #{ddpm_reverse_forward.1} parent=0 // pred_region
    _
  $region13: #{ddpm_reverse_forward.1} parent=0 // pred_fallthru
    _
  // Predicated region
  $region14: #{ddpm_reverse_forward.1} parent=0 // pred_check
    _
  $region15: #{ddpm_reverse_forward.1} parent=0 // pred_check_branch
    %16 = sbr.rel (0) target = $region17
  $region16: #{ddpm_reverse_forward.1} parent=0 // pred_region
    _
  $region17: #{ddpm_reverse_forward.1} parent=0 // pred_fallthru
    _
  %v17 = vld [vmem:[%s0] sm:$0xff]
  %v18 = vld [vmem:[%s0 + $0x8] sm:$0xff]
  %v19 = vld [vmem:[%s0 + $0x10] sm:$0xff]
  %v20 = vld [vmem:[%s0 + $0x18] sm:$0xff]
  %v21 = vld [vmem:[%s0 + $0x20] sm:$0xff]
  %v22 = vld [vmem:[%s0 + $0x28] sm:$0xff]
  %v23 = vld [vmem:[%s0 + $0x30] sm:$0xff]
  %24 = vst [vmem:[%s4] sm:$0xff] %v17
  %25 = vst [vmem:[%s4 + $0x8] sm:$0xff] %v18
  %26 = vst [vmem:[%s4 + $0x10] sm:$0xff] %v19
  %27 = vst [vmem:[%s4 + $0x18] sm:$0xff] %v20
  %28 = vst [vmem:[%s4 + $0x20] sm:$0xff] %v21
  %29 = vst [vmem:[%s4 + $0x28] sm:$0xff] %v22
  %30 = vst [vmem:[%s4 + $0x30] sm:$0xff] %v23
  loop: start=0, step=1, limit=100
  $region18: #{ddpm_reverse_forward.1} parent=0 // loop_pre_header
    _
  $region19: #{ddpm_reverse_forward.1} parent=0 // loop_header
    %s32 = sphi 0, %s36
    %p33 = scmp.ge.s32.totalorder %s32, 100
  $region20: #{ddpm_reverse_forward.1} parent=0 // loop_header_branch
    %35 = sbr.rel (%p33) target = $region24
  $region21: #{ddpm_reverse_forward.1} parent=0 // loop_body
    %s37 = scvt.s32.f32 %s32
    %s38 = smul.f32 %s37, 0.01
    %s39 = sadd.f32 %s38, -1.0
    %p40 = scmp.eq.s32.totalorder %s32, 99
    %s41 = sadd.f32 %s37, 1.0
    %s42 = smul.f32 %s41, 0.01
    %s43 = sadd.f32 %s42, -1.0
    %s44 = scalar_select %p40, -1e-05, %s43
    %s45 = ssub.f32 %s44, %s39
    %v46 = vld [vmem:[%s4] sm:$0xff]
    %v47 = vld [vmem:[%s4 + $0x8] sm:$0xff]
    %v48 = vld [vmem:[%s4 + $0x10] sm:$0xff]
    %v49 = vld [vmem:[%s4 + $0x18] sm:$0xff]
    %v50 = vld [vmem:[%s4 + $0x20] sm:$0xff]
    %v51 = vld [vmem:[%s4 + $0x28] sm:$0xff]
    %v52 = vld [vmem:[%s4 + $0x30] sm:$0xff]
    %s53 = smul.u32 %s32, 7
    %s54 = smul.addr %s53, 8
    %s55 = scalar_lea.vmem %s3, %s54
    %v56 = vld [vmem:[%s55] sm:$0xff]
    %v57 = vld [vmem:[%s55 + $0x8] sm:$0xff]
    %v58 = vld [vmem:[%s55 + $0x10] sm:$0xff]
    %v59 = vld [vmem:[%s55 + $0x18] sm:$0xff]
    %v60 = vld [vmem:[%s55 + $0x20] sm:$0xff]
    %v61 = vld [vmem:[%s55 + $0x28] sm:$0xff]
    %v62 = vld [vmem:[%s55 + $0x30] sm:$0xff]
    %v63 = vstv %s45
    %v64 = vrsqrt.pop %v63
    %v65 = vmul.f32 %v64, %v63
    %v66 = vmul.f32 %v65, %v64
    %v67 = vmul.f32 0.5, %v66
    %v68 = vsub.f32 1.5, %v67
    %v69 = vmul.f32 %v64, %v68
    %v70 = vmul.f32 %v63, %v69
    %vm71 = vcmp.eq.f32.partialorder %v63, inf
    %v72 = vsel %vm71, %v63, %v70
    %vm73 = vcmp.eq.f32.partialorder %v63, 0.0
    %v74 = vand.u32 %v63, 2147483648
    %v75 = vsel %vm73, %v74, %v72
    %s76 = vtos %v75
    %v77 = vstv %s76
    %v78 = vmul.f32 %v56, %v77
    %v79 = vmul.f32 %v57, %v77
    %v80 = vmul.f32 %v58, %v77
    %v81 = vmul.f32 %v59, %v77
    %v82 = vmul.f32 %v60, %v77
    %v83 = vmul.f32 %v61, %v77
    %v84 = vmul.f32 %v62, %v77
    %s85 = ssub.f32 0.0, %s39
    %s86 = smul.f32 %s85, 0.0199
    %s87 = sadd.f32 %s86, 0.0001
    %v88 = vpack.c.bf16 %v46, %v46
    %v89 = vpack.c.bf16 %v47, %v47
    %v90 = vpack.c.bf16 %v48, %v48
    %v91 = vpack.c.bf16 %v49, %v49
    %v92 = vpack.c.bf16 %v50, %v50
    %v93 = vpack.c.bf16 %v51, %v51
    %v94 = vpack.c.bf16 %v52, %v52
    %v95 = vld [vmem:[%s1] sm:$0xff]
    %v96 = vld [vmem:[%s1 + $0x8] sm:$0xff]
    %v97 = vld [vmem:[%s1 + $0x10] sm:$0xff]
    %v98 = vld [vmem:[%s1 + $0x18] sm:$0xf]
    %v99 = vld [vmem:[%s1 + $0x1c] sm:$0xff]
    %v100 = vld [vmem:[%s1 + $0x24] sm:$0xff]
    %v101 = vld [vmem:[%s1 + $0x2c] sm:$0xff]
    %v102 = vld [vmem:[%s1 + $0x34] sm:$0xf]
    %v103 = vld [vmem:[%s1 + $0x38] sm:$0xff]
    %v104 = vld [vmem:[%s1 + $0x40] sm:$0xff]
    %v105 = vld [vmem:[%s1 + $0x48] sm:$0xff]
    %v106 = vld [vmem:[%s1 + $0x50] sm:$0xf]
    %v107 = vld [vmem:[%s1 + $0x54] sm:$0xff]
    %v108 = vld [vmem:[%s1 + $0x5c] sm:$0xff]
    %v109 = vld [vmem:[%s1 + $0x64] sm:$0xff]
    %v110 = vld [vmem:[%s1 + $0x6c] sm:$0xf]
    %v111 = vld [vmem:[%s1 + $0x70] sm:$0xff]
    %v112 = vld [vmem:[%s1 + $0x78] sm:$0xff]
    %v113 = vld [vmem:[%s1 + $0x80] sm:$0xff]
    %v114 = vld [vmem:[%s1 + $0x88] sm:$0xf]
    %v115 = vld [vmem:[%s1 + $0x8c] sm:$0xff]
    %v116 = vld [vmem:[%s1 + $0x94] sm:$0xff]
    %v117 = vld [vmem:[%s1 + $0x9c] sm:$0xff]
    %v118 = vld [vmem:[%s1 + $0xa4] sm:$0xf]
    %v119 = vld [vmem:[%s1 + $0xa8] sm:$0xff]
    %v120 = vld [vmem:[%s1 + $0xb0] sm:$0xff]
    %v121 = vld [vmem:[%s1 + $0xb8] sm:$0xff]
    %v122 = vld [vmem:[%s1 + $0xc0] sm:$0xf]
    %v123 = vld [vmem:[%s1 + $0xc4] sm:$0xff]
    %v124 = vld [vmem:[%s1 + $0xcc] sm:$0xff]
    %v125 = vld [vmem:[%s1 + $0xd4] sm:$0xff]
    %v126 = vld [vmem:[%s1 + $0xdc] sm:$0xf]
    %v127 = vld [vmem:[%s1 + $0xe0] sm:$0xff]
    %v128 = vld [vmem:[%s1 + $0xe8] sm:$0xff]
    %v129 = vld [vmem:[%s1 + $0xf0] sm:$0xff]
    %v130 = vld [vmem:[%s1 + $0xf8] sm:$0xf]
    %v131 = vld [vmem:[%s1 + $0xfc] sm:$0xff]
    %v132 = vld [vmem:[%s1 + $0x104] sm:$0xff]
    %v133 = vld [vmem:[%s1 + $0x10c] sm:$0xff]
    %v134 = vld [vmem:[%s1 + $0x114] sm:$0xf]
    %v135 = vld [vmem:[%s1 + $0x118] sm:$0xff]
    %v136 = vld [vmem:[%s1 + $0x120] sm:$0xff]
    %v137 = vld [vmem:[%s1 + $0x128] sm:$0xff]
    %v138 = vld [vmem:[%s1 + $0x130] sm:$0xf]
    %v139 = vld [vmem:[%s1 + $0x134] sm:$0xff]
    %v140 = vld [vmem:[%s1 + $0x13c] sm:$0xff]
    %v141 = vld [vmem:[%s1 + $0x144] sm:$0xff]
    %v142 = vld [vmem:[%s1 + $0x14c] sm:$0xf]
    %v143 = vld [vmem:[%s1 + $0x150] sm:$0xff]
    %v144 = vld [vmem:[%s1 + $0x158] sm:$0xff]
    %v145 = vld [vmem:[%s1 + $0x160] sm:$0xff]
    %v146 = vld [vmem:[%s1 + $0x168] sm:$0xf]
    %v147 = vld [vmem:[%s1 + $0x16c] sm:$0xff]
    %v148 = vld [vmem:[%s1 + $0x174] sm:$0xff]
    %v149 = vld [vmem:[%s1 + $0x17c] sm:$0xff]
    %v150 = vld [vmem:[%s1 + $0x184] sm:$0xf]
    %v151 = vld [vmem:[%s1 + $0x188] sm:$0xff]
    %v152 = vld [vmem:[%s1 + $0x190] sm:$0xff]
    %v153 = vld [vmem:[%s1 + $0x198] sm:$0xff]
    %v154 = vld [vmem:[%s1 + $0x1a0] sm:$0xf]
    %v155 = vld [vmem:[%s1 + $0x1a4] sm:$0xff]
    %v156 = vld [vmem:[%s1 + $0x1ac] sm:$0xff]
    %v157 = vld [vmem:[%s1 + $0x1b4] sm:$0xff]
    %v158 = vld [vmem:[%s1 + $0x1bc] sm:$0xf]
    %v159 = vld [vmem:[%s1 + $0x1c0] sm:$0xff]
    %v160 = vld [vmem:[%s1 + $0x1c8] sm:$0xff]
    %v161 = vld [vmem:[%s1 + $0x1d0] sm:$0xff]
    %v162 = vld [vmem:[%s1 + $0x1d8] sm:$0xf]
    %v163 = vld [vmem:[%s1 + $0x1dc] sm:$0xff]
    %v164 = vld [vmem:[%s1 + $0x1e4] sm:$0xff]
    %v165 = vld [vmem:[%s1 + $0x1ec] sm:$0xff]
    %v166 = vld [vmem:[%s1 + $0x1f4] sm:$0xf]
    %v167 = vld [vmem:[%s1 + $0x1f8] sm:$0xff]
    %v168 = vld [vmem:[%s1 + $0x200] sm:$0xff]
    %v169 = vld [vmem:[%s1 + $0x208] sm:$0xff]
    %v170 = vld [vmem:[%s1 + $0x210] sm:$0xf]
    %v171 = vld [vmem:[%s1 + $0x214] sm:$0xff]
    %v172 = vld [vmem:[%s1 + $0x21c] sm:$0xff]
    %v173 = vld [vmem:[%s1 + $0x224] sm:$0xff]
    %v174 = vld [vmem:[%s1 + $0x22c] sm:$0xf]
    %v175 = vld [vmem:[%s1 + $0x230] sm:$0xff]
    %v176 = vld [vmem:[%s1 + $0x238] sm:$0xff]
    %v177 = vld [vmem:[%s1 + $0x240] sm:$0xff]
    %v178 = vld [vmem:[%s1 + $0x248] sm:$0xf]
    %v179 = vld [vmem:[%s1 + $0x24c] sm:$0xff]
    %v180 = vld [vmem:[%s1 + $0x254] sm:$0xff]
    %v181 = vld [vmem:[%s1 + $0x25c] sm:$0xff]
    %v182 = vld [vmem:[%s1 + $0x264] sm:$0xf]
    %v183 = vld [vmem:[%s1 + $0x268] sm:$0xff]
    %v184 = vld [vmem:[%s1 + $0x270] sm:$0xff]
    %v185 = vld [vmem:[%s1 + $0x278] sm:$0xff]
    %v186 = vld [vmem:[%s1 + $0x280] sm:$0xf]
    %v187 = vld [vmem:[%s1 + $0x284] sm:$0xff]
    %v188 = vld [vmem:[%s1 + $0x28c] sm:$0xff]
    %v189 = vld [vmem:[%s1 + $0x294] sm:$0xff]
    %v190 = vld [vmem:[%s1 + $0x29c] sm:$0xf]
    %v191 = vld [vmem:[%s1 + $0x2a0] sm:$0xff]
    %v192 = vld [vmem:[%s1 + $0x2a8] sm:$0xff]
    %v193 = vld [vmem:[%s1 + $0x2b0] sm:$0xff]
    %v194 = vld [vmem:[%s1 + $0x2b8] sm:$0xf]
    %v195 = vld [vmem:[%s1 + $0x2bc] sm:$0xff]
    %v196 = vld [vmem:[%s1 + $0x2c4] sm:$0xff]
    %v197 = vld [vmem:[%s1 + $0x2cc] sm:$0xff]
    %v198 = vld [vmem:[%s1 + $0x2d4] sm:$0xf]
    %v199 = vld [vmem:[%s1 + $0x2d8] sm:$0xff]
    %v200 = vld [vmem:[%s1 + $0x2e0] sm:$0xff]
    %v201 = vld [vmem:[%s1 + $0x2e8] sm:$0xff]
    %v202 = vld [vmem:[%s1 + $0x2f0] sm:$0xf]
    %v203 = vld [vmem:[%s1 + $0x2f4] sm:$0xff]
    %v204 = vld [vmem:[%s1 + $0x2fc] sm:$0xff]
    %v205 = vld [vmem:[%s1 + $0x304] sm:$0xff]
    %v206 = vld [vmem:[%s1 + $0x30c] sm:$0xf]
    %v207 = vld [vmem:[%s1 + $0x310] sm:$0xff]
    %v208 = vld [vmem:[%s1 + $0x318] sm:$0xff]
    %v209 = vld [vmem:[%s1 + $0x320] sm:$0xff]
    %v210 = vld [vmem:[%s1 + $0x328] sm:$0xf]
    %v211 = vld [vmem:[%s1 + $0x32c] sm:$0xff]
    %v212 = vld [vmem:[%s1 + $0x334] sm:$0xff]
    %v213 = vld [vmem:[%s1 + $0x33c] sm:$0xff]
    %v214 = vld [vmem:[%s1 + $0x344] sm:$0xf]
    %v215 = vld [vmem:[%s1 + $0x348] sm:$0xff]
    %v216 = vld [vmem:[%s1 + $0x350] sm:$0xff]
    %v217 = vld [vmem:[%s1 + $0x358] sm:$0xff]
    %v218 = vld [vmem:[%s1 + $0x360] sm:$0xf]
    %v219 = vld [vmem:[%s1 + $0x364] sm:$0xff]
    %v220 = vld [vmem:[%s1 + $0x36c] sm:$0xff]
    %v221 = vld [vmem:[%s1 + $0x374] sm:$0xff]
    %v222 = vld [vmem:[%s1 + $0x37c] sm:$0xf]
    %v223 = vld [vmem:[%s1 + $0x380] sm:$0xff]
    %v224 = vld [vmem:[%s1 + $0x388] sm:$0xff]
    %v225 = vld [vmem:[%s1 + $0x390] sm:$0xff]
    %v226 = vld [vmem:[%s1 + $0x398] sm:$0xf]
    %v227 = vld [vmem:[%s1 + $0x39c] sm:$0xff]
    %v228 = vld [vmem:[%s1 + $0x3a4] sm:$0xff]
    %v229 = vld [vmem:[%s1 + $0x3ac] sm:$0xff]
    %v230 = vld [vmem:[%s1 + $0x3b4] sm:$0xf]
    %v231 = vld [vmem:[%s1 + $0x3b8] sm:$0xff]
    %v232 = vld [vmem:[%s1 + $0x3c0] sm:$0xff]
    %v233 = vld [vmem:[%s1 + $0x3c8] sm:$0xff]
    %v234 = vld [vmem:[%s1 + $0x3d0] sm:$0xf]
    %v235 = vld [vmem:[%s1 + $0x3d4] sm:$0xff]
    %v236 = vld [vmem:[%s1 + $0x3dc] sm:$0xff]
    %v237 = vld [vmem:[%s1 + $0x3e4] sm:$0xff]
    %v238 = vld [vmem:[%s1 + $0x3ec] sm:$0xf]
    %v239 = vld [vmem:[%s1 + $0x3f0] sm:$0xff]
    %v240 = vld [vmem:[%s1 + $0x3f8] sm:$0xff]
    %v241 = vld [vmem:[%s1 + $0x400] sm:$0xff]
    %v242 = vld [vmem:[%s1 + $0x408] sm:$0xf]
    %v243 = vld [vmem:[%s1 + $0x40c] sm:$0xff]
    %v244 = vld [vmem:[%s1 + $0x414] sm:$0xff]
    %v245 = vld [vmem:[%s1 + $0x41c] sm:$0xff]
    %v246 = vld [vmem:[%s1 + $0x424] sm:$0xf]
    %v247 = vld [vmem:[%s1 + $0x428] sm:$0xff]
    %v248 = vld [vmem:[%s1 + $0x430] sm:$0xff]
    %v249 = vld [vmem:[%s1 + $0x438] sm:$0xff]
    %v250 = vld [vmem:[%s1 + $0x440] sm:$0xf]
    %v251 = vld [vmem:[%s1 + $0x444] sm:$0xff]
    %v252 = vld [vmem:[%s1 + $0x44c] sm:$0xff]
    %v253 = vld [vmem:[%s1 + $0x454] sm:$0xff]
    %v254 = vld [vmem:[%s1 + $0x45c] sm:$0xf]
    %v255 = vld [vmem:[%s1 + $0x460] sm:$0xff]
    %v256 = vld [vmem:[%s1 + $0x468] sm:$0xff]
    %v257 = vld [vmem:[%s1 + $0x470] sm:$0xff]
    %v258 = vld [vmem:[%s1 + $0x478] sm:$0xf]
    %v259 = vld [vmem:[%s1 + $0x47c] sm:$0xff]
    %v260 = vld [vmem:[%s1 + $0x484] sm:$0xff]
    %v261 = vld [vmem:[%s1 + $0x48c] sm:$0xff]
    %v262 = vld [vmem:[%s1 + $0x494] sm:$0xf]
    %v263 = vld [vmem:[%s1 + $0x498] sm:$0xff]
    %v264 = vld [vmem:[%s1 + $0x4a0] sm:$0xff]
    %v265 = vld [vmem:[%s1 + $0x4a8] sm:$0xff]
    %v266 = vld [vmem:[%s1 + $0x4b0] sm:$0xf]
    %v267 = vld [vmem:[%s1 + $0x4b4] sm:$0xff]
    %v268 = vld [vmem:[%s1 + $0x4bc] sm:$0xff]
    %v269 = vld [vmem:[%s1 + $0x4c4] sm:$0xff]
    %v270 = vld [vmem:[%s1 + $0x4cc] sm:$0xf]
    %v271 = vld [vmem:[%s1 + $0x4d0] sm:$0xff]
    %v272 = vld [vmem:[%s1 + $0x4d8] sm:$0xff]
    %v273 = vld [vmem:[%s1 + $0x4e0] sm:$0xff]
    %v274 = vld [vmem:[%s1 + $0x4e8] sm:$0xf]
    %v275 = vld [vmem:[%s1 + $0x4ec] sm:$0xff]
    %v276 = vld [vmem:[%s1 + $0x4f4] sm:$0xff]
    %v277 = vld [vmem:[%s1 + $0x4fc] sm:$0xff]
    %v278 = vld [vmem:[%s1 + $0x504] sm:$0xf]
    %v279 = vld [vmem:[%s1 + $0x508] sm:$0xff]
    %v280 = vld [vmem:[%s1 + $0x510] sm:$0xff]
    %v281 = vld [vmem:[%s1 + $0x518] sm:$0xff]
    %v282 = vld [vmem:[%s1 + $0x520] sm:$0xf]
    %v283 = vld [vmem:[%s1 + $0x524] sm:$0xff]
    %v284 = vld [vmem:[%s1 + $0x52c] sm:$0xff]
    %v285 = vld [vmem:[%s1 + $0x534] sm:$0xff]
    %v286 = vld [vmem:[%s1 + $0x53c] sm:$0xf]
    %v287 = vld [vmem:[%s1 + $0x540] sm:$0xff]
    %v288 = vld [vmem:[%s1 + $0x548] sm:$0xff]
    %v289 = vld [vmem:[%s1 + $0x550] sm:$0xff]
    %v290 = vld [vmem:[%s1 + $0x558] sm:$0xf]
    %v291 = vld [vmem:[%s1 + $0x55c] sm:$0xff]
    %v292 = vld [vmem:[%s1 + $0x564] sm:$0xff]
    %v293 = vld [vmem:[%s1 + $0x56c] sm:$0xff]
    %v294 = vld [vmem:[%s1 + $0x574] sm:$0xf]
    %v295 = vld [vmem:[%s1 + $0x578] sm:$0xff]
    %v296 = vld [vmem:[%s1 + $0x580] sm:$0xff]
    %v297 = vld [vmem:[%s1 + $0x588] sm:$0xff]
    %v298 = vld [vmem:[%s1 + $0x590] sm:$0xf]
    %v299 = vld [vmem:[%s1 + $0x594] sm:$0xff]
    %v300 = vld [vmem:[%s1 + $0x59c] sm:$0xff]
    %v301 = vld [vmem:[%s1 + $0x5a4] sm:$0xff]
    %v302 = vld [vmem:[%s1 + $0x5ac] sm:$0xf]
    %v303 = vld [vmem:[%s1 + $0x5b0] sm:$0xff]
    %v304 = vld [vmem:[%s1 + $0x5b8] sm:$0xff]
    %v305 = vld [vmem:[%s1 + $0x5c0] sm:$0xff]
    %v306 = vld [vmem:[%s1 + $0x5c8] sm:$0xf]
    %v307 = vld [vmem:[%s1 + $0x5cc] sm:$0xff]
    %v308 = vld [vmem:[%s1 + $0x5d4] sm:$0xff]
    %v309 = vld [vmem:[%s1 + $0x5dc] sm:$0xff]
    %v310 = vld [vmem:[%s1 + $0x5e4] sm:$0xf]
    %v311 = vld [vmem:[%s1 + $0x5e8] sm:$0xff]
    %v312 = vld [vmem:[%s1 + $0x5f0] sm:$0xff]
    %v313 = vld [vmem:[%s1 + $0x5f8] sm:$0xff]
    %v314 = vld [vmem:[%s1 + $0x600] sm:$0xf]
    %v315 = vld [vmem:[%s1 + $0x604] sm:$0xff]
    %v316 = vld [vmem:[%s1 + $0x60c] sm:$0xff]
    %v317 = vld [vmem:[%s1 + $0x614] sm:$0xff]
    %v318 = vld [vmem:[%s1 + $0x61c] sm:$0xf]
    %v319 = vld [vmem:[%s1 + $0x620] sm:$0xff]
    %v320 = vld [vmem:[%s1 + $0x628] sm:$0xff]
    %v321 = vld [vmem:[%s1 + $0x630] sm:$0xff]
    %v322 = vld [vmem:[%s1 + $0x638] sm:$0xf]
    %v323 = vld [vmem:[%s1 + $0x63c] sm:$0xff]
    %v324 = vld [vmem:[%s1 + $0x644] sm:$0xff]
    %v325 = vld [vmem:[%s1 + $0x64c] sm:$0xff]
    %v326 = vld [vmem:[%s1 + $0x654] sm:$0xf]
    %v327 = vld [vmem:[%s1 + $0x658] sm:$0xff]
    %v328 = vld [vmem:[%s1 + $0x660] sm:$0xff]
    %v329 = vld [vmem:[%s1 + $0x668] sm:$0xff]
    %v330 = vld [vmem:[%s1 + $0x670] sm:$0xf]
    %v331 = vld [vmem:[%s1 + $0x674] sm:$0xff]
    %v332 = vld [vmem:[%s1 + $0x67c] sm:$0xff]
    %v333 = vld [vmem:[%s1 + $0x684] sm:$0xff]
    %v334 = vld [vmem:[%s1 + $0x68c] sm:$0xf]
    %v335 = vld [vmem:[%s1 + $0x690] sm:$0xff]
    %v336 = vld [vmem:[%s1 + $0x698] sm:$0xff]
    %v337 = vld [vmem:[%s1 + $0x6a0] sm:$0xff]
    %v338 = vld [vmem:[%s1 + $0x6a8] sm:$0xf]
    %v339 = vld [vmem:[%s1 + $0x6ac] sm:$0xff]
    %v340 = vld [vmem:[%s1 + $0x6b4] sm:$0xff]
    %v341 = vld [vmem:[%s1 + $0x6bc] sm:$0xff]
    %v342 = vld [vmem:[%s1 + $0x6c4] sm:$0xf]
    %v343 = vld [vmem:[%s1 + $0x6c8] sm:$0xff]
    %v344 = vld [vmem:[%s1 + $0x6d0] sm:$0xff]
    %v345 = vld [vmem:[%s1 + $0x6d8] sm:$0xff]
    %v346 = vld [vmem:[%s1 + $0x6e0] sm:$0xf]
    %v347 = vld [vmem:[%s1 + $0x6e4] sm:$0xff]
    %v348 = vld [vmem:[%s1 + $0x6ec] sm:$0xff]
    %v349 = vld [vmem:[%s1 + $0x6f4] sm:$0xff]
    %v350 = vld [vmem:[%s1 + $0x6fc] sm:$0xf]
    %v351 = vld [vmem:[%s1 + $0x700] sm:$0xff]
    %v352 = vld [vmem:[%s1 + $0x708] sm:$0xff]
    %v353 = vld [vmem:[%s1 + $0x710] sm:$0xff]
    %v354 = vld [vmem:[%s1 + $0x718] sm:$0xf]
    %v355 = vld [vmem:[%s1 + $0x71c] sm:$0xff]
    %v356 = vld [vmem:[%s1 + $0x724] sm:$0xff]
    %v357 = vld [vmem:[%s1 + $0x72c] sm:$0xff]
    %v358 = vld [vmem:[%s1 + $0x734] sm:$0xf]
    %v359 = vld [vmem:[%s1 + $0x738] sm:$0xff]
    %v360 = vld [vmem:[%s1 + $0x740] sm:$0xff]
    %v361 = vld [vmem:[%s1 + $0x748] sm:$0xff]
    %v362 = vld [vmem:[%s1 + $0x750] sm:$0xf]
    %v363 = vld [vmem:[%s1 + $0x754] sm:$0xff]
    %v364 = vld [vmem:[%s1 + $0x75c] sm:$0xff]
    %v365 = vld [vmem:[%s1 + $0x764] sm:$0xff]
    %v366 = vld [vmem:[%s1 + $0x76c] sm:$0xf]
    %v367 = vld [vmem:[%s1 + $0x770] sm:$0xff]
    %v368 = vld [vmem:[%s1 + $0x778] sm:$0xff]
    %v369 = vld [vmem:[%s1 + $0x780] sm:$0xff]
    %v370 = vld [vmem:[%s1 + $0x788] sm:$0xf]
    %v371 = vld [vmem:[%s1 + $0x78c] sm:$0xff]
    %v372 = vld [vmem:[%s1 + $0x794] sm:$0xff]
    %v373 = vld [vmem:[%s1 + $0x79c] sm:$0xff]
    %v374 = vld [vmem:[%s1 + $0x7a4] sm:$0xf]
    %v375 = vld [vmem:[%s1 + $0x7a8] sm:$0xff]
    %v376 = vld [vmem:[%s1 + $0x7b0] sm:$0xff]
    %v377 = vld [vmem:[%s1 + $0x7b8] sm:$0xff]
    %v378 = vld [vmem:[%s1 + $0x7c0] sm:$0xf]
    %v379 = vld [vmem:[%s1 + $0x7c4] sm:$0xff]
    %v380 = vld [vmem:[%s1 + $0x7cc] sm:$0xff]
    %v381 = vld [vmem:[%s1 + $0x7d4] sm:$0xff]
    %v382 = vld [vmem:[%s1 + $0x7dc] sm:$0xf]
    %v383 = vld [vmem:[%s1 + $0x7e0] sm:$0xff]
    %v384 = vld [vmem:[%s1 + $0x7e8] sm:$0xff]
    %v385 = vld [vmem:[%s1 + $0x7f0] sm:$0xff]
    %v386 = vld [vmem:[%s1 + $0x7f8] sm:$0xf]
    %v387 = vld [vmem:[%s1 + $0x7fc] sm:$0xff]
    %v388 = vld [vmem:[%s1 + $0x804] sm:$0xff]
    %v389 = vld [vmem:[%s1 + $0x80c] sm:$0xff]
    %v390 = vld [vmem:[%s1 + $0x814] sm:$0xf]
    %v391 = vld [vmem:[%s1 + $0x818] sm:$0xff]
    %v392 = vld [vmem:[%s1 + $0x820] sm:$0xff]
    %v393 = vld [vmem:[%s1 + $0x828] sm:$0xff]
    %v394 = vld [vmem:[%s1 + $0x830] sm:$0xf]
    %v395 = vld [vmem:[%s1 + $0x834] sm:$0xff]
    %v396 = vld [vmem:[%s1 + $0x83c] sm:$0xff]
    %v397 = vld [vmem:[%s1 + $0x844] sm:$0xff]
    %v398 = vld [vmem:[%s1 + $0x84c] sm:$0xf]
    %v399 = vld [vmem:[%s1 + $0x850] sm:$0xff]
    %v400 = vld [vmem:[%s1 + $0x858] sm:$0xff]
    %v401 = vld [vmem:[%s1 + $0x860] sm:$0xff]
    %v402 = vld [vmem:[%s1 + $0x868] sm:$0xf]
    %v403 = vld [vmem:[%s1 + $0x86c] sm:$0xff]
    %v404 = vld [vmem:[%s1 + $0x874] sm:$0xff]
    %v405 = vld [vmem:[%s1 + $0x87c] sm:$0xff]
    %v406 = vld [vmem:[%s1 + $0x884] sm:$0xf]
    %v407 = vld [vmem:[%s1 + $0x888] sm:$0xff]
    %v408 = vld [vmem:[%s1 + $0x890] sm:$0xff]
    %v409 = vld [vmem:[%s1 + $0x898] sm:$0xff]
    %v410 = vld [vmem:[%s1 + $0x8a0] sm:$0xf]
    %v411 = vld [vmem:[%s1 + $0x8a4] sm:$0xff]
    %v412 = vld [vmem:[%s1 + $0x8ac] sm:$0xff]
    %v413 = vld [vmem:[%s1 + $0x8b4] sm:$0xff]
    %v414 = vld [vmem:[%s1 + $0x8bc] sm:$0xf]
    %v415 = vld [vmem:[%s1 + $0x8c0] sm:$0xff]
    %v416 = vld [vmem:[%s1 + $0x8c8] sm:$0xff]
    %v417 = vld [vmem:[%s1 + $0x8d0] sm:$0xff]
    %v418 = vld [vmem:[%s1 + $0x8d8] sm:$0xf]
    %v419 = vld [vmem:[%s1 + $0x8dc] sm:$0xff]
    %v420 = vld [vmem:[%s1 + $0x8e4] sm:$0xff]
    %v421 = vld [vmem:[%s1 + $0x8ec] sm:$0xff]
    %v422 = vld [vmem:[%s1 + $0x8f4] sm:$0xf]
    %v423 = vld [vmem:[%s1 + $0x8f8] sm:$0xff]
    %v424 = vld [vmem:[%s1 + $0x900] sm:$0xff]
    %v425 = vld [vmem:[%s1 + $0x908] sm:$0xff]
    %v426 = vld [vmem:[%s1 + $0x910] sm:$0xf]
    %v427 = vld [vmem:[%s1 + $0x914] sm:$0xff]
    %v428 = vld [vmem:[%s1 + $0x91c] sm:$0xff]
    %v429 = vld [vmem:[%s1 + $0x924] sm:$0xff]
    %v430 = vld [vmem:[%s1 + $0x92c] sm:$0xf]
    %v431 = vld [vmem:[%s1 + $0x930] sm:$0xff]
    %v432 = vld [vmem:[%s1 + $0x938] sm:$0xff]
    %v433 = vld [vmem:[%s1 + $0x940] sm:$0xff]
    %v434 = vld [vmem:[%s1 + $0x948] sm:$0xf]
    %v435 = vld [vmem:[%s1 + $0x94c] sm:$0xff]
    %v436 = vld [vmem:[%s1 + $0x954] sm:$0xff]
    %v437 = vld [vmem:[%s1 + $0x95c] sm:$0xff]
    %v438 = vld [vmem:[%s1 + $0x964] sm:$0xf]
    %v439 = vld [vmem:[%s1 + $0x968] sm:$0xff]
    %v440 = vld [vmem:[%s1 + $0x970] sm:$0xff]
    %v441 = vld [vmem:[%s1 + $0x978] sm:$0xff]
    %v442 = vld [vmem:[%s1 + $0x980] sm:$0xf]
    %v443 = vld [vmem:[%s1 + $0x984] sm:$0xff]
    %v444 = vld [vmem:[%s1 + $0x98c] sm:$0xff]
    %v445 = vld [vmem:[%s1 + $0x994] sm:$0xff]
    %v446 = vld [vmem:[%s1 + $0x99c] sm:$0xf]
    %v447 = vld [vmem:[%s1 + $0x9a0] sm:$0xff]
    %v448 = vld [vmem:[%s1 + $0x9a8] sm:$0xff]
    %v449 = vld [vmem:[%s1 + $0x9b0] sm:$0xff]
    %v450 = vld [vmem:[%s1 + $0x9b8] sm:$0xf]
    %v451 = vld [vmem:[%s1 + $0x9bc] sm:$0xff]
    %v452 = vld [vmem:[%s1 + $0x9c4] sm:$0xff]
    %v453 = vld [vmem:[%s1 + $0x9cc] sm:$0xff]
    %v454 = vld [vmem:[%s1 + $0x9d4] sm:$0xf]
    %v455 = vld [vmem:[%s1 + $0x9d8] sm:$0xff]
    %v456 = vld [vmem:[%s1 + $0x9e0] sm:$0xff]
    %v457 = vld [vmem:[%s1 + $0x9e8] sm:$0xff]
    %v458 = vld [vmem:[%s1 + $0x9f0] sm:$0xf]
    %v459 = vld [vmem:[%s1 + $0x9f4] sm:$0xff]
    %v460 = vld [vmem:[%s1 + $0x9fc] sm:$0xff]
    %v461 = vld [vmem:[%s1 + $0xa04] sm:$0xff]
    %v462 = vld [vmem:[%s1 + $0xa0c] sm:$0xf]
    %v463 = vld [vmem:[%s1 + $0xa10] sm:$0xff]
    %v464 = vld [vmem:[%s1 + $0xa18] sm:$0xff]
    %v465 = vld [vmem:[%s1 + $0xa20] sm:$0xff]
    %v466 = vld [vmem:[%s1 + $0xa28] sm:$0xf]
    %v467 = vld [vmem:[%s1 + $0xa2c] sm:$0xff]
    %v468 = vld [vmem:[%s1 + $0xa34] sm:$0xff]
    %v469 = vld [vmem:[%s1 + $0xa3c] sm:$0xff]
    %v470 = vld [vmem:[%s1 + $0xa44] sm:$0xf]
    %v471 = vld [vmem:[%s1 + $0xa48] sm:$0xff]
    %v472 = vld [vmem:[%s1 + $0xa50] sm:$0xff]
    %v473 = vld [vmem:[%s1 + $0xa58] sm:$0xff]
    %v474 = vld [vmem:[%s1 + $0xa60] sm:$0xf]
    %v475 = vld [vmem:[%s1 + $0xa64] sm:$0xff]
    %v476 = vld [vmem:[%s1 + $0xa6c] sm:$0xff]
    %v477 = vld [vmem:[%s1 + $0xa74] sm:$0xff]
    %v478 = vld [vmem:[%s1 + $0xa7c] sm:$0xf]
    %v479 = vld [vmem:[%s1 + $0xa80] sm:$0xff]
    %v480 = vld [vmem:[%s1 + $0xa88] sm:$0xff]
    %v481 = vld [vmem:[%s1 + $0xa90] sm:$0xff]
    %v482 = vld [vmem:[%s1 + $0xa98] sm:$0xf]
    %v483 = vld [vmem:[%s1 + $0xa9c] sm:$0xff]
    %v484 = vld [vmem:[%s1 + $0xaa4] sm:$0xff]
    %v485 = vld [vmem:[%s1 + $0xaac] sm:$0xff]
    %v486 = vld [vmem:[%s1 + $0xab4] sm:$0xf]
    %v487 = vld [vmem:[%s1 + $0xab8] sm:$0xff]
    %v488 = vld [vmem:[%s1 + $0xac0] sm:$0xff]
    %v489 = vld [vmem:[%s1 + $0xac8] sm:$0xff]
    %v490 = vld [vmem:[%s1 + $0xad0] sm:$0xf]
    %v491 = vld [vmem:[%s1 + $0xad4] sm:$0xff]
    %v492 = vld [vmem:[%s1 + $0xadc] sm:$0xff]
    %v493 = vld [vmem:[%s1 + $0xae4] sm:$0xff]
    %v494 = vld [vmem:[%s1 + $0xaec] sm:$0xf]
    %v495 = vld [vmem:[%s1 + $0xaf0] sm:$0xff]
    %v496 = vld [vmem:[%s1 + $0xaf8] sm:$0xff]
    %v497 = vld [vmem:[%s1 + $0xb00] sm:$0xff]
    %v498 = vld [vmem:[%s1 + $0xb08] sm:$0xf]
    %v499 = vld [vmem:[%s1 + $0xb0c] sm:$0xff]
    %v500 = vld [vmem:[%s1 + $0xb14] sm:$0xff]
    %v501 = vld [vmem:[%s1 + $0xb1c] sm:$0xff]
    %v502 = vld [vmem:[%s1 + $0xb24] sm:$0xf]
    %v503 = vld [vmem:[%s1 + $0xb28] sm:$0xff]
    %v504 = vld [vmem:[%s1 + $0xb30] sm:$0xff]
    %v505 = vld [vmem:[%s1 + $0xb38] sm:$0xff]
    %v506 = vld [vmem:[%s1 + $0xb40] sm:$0xf]
    %v507 = vld [vmem:[%s1 + $0xb44] sm:$0xff]
    %v508 = vld [vmem:[%s1 + $0xb4c] sm:$0xff]
    %v509 = vld [vmem:[%s1 + $0xb54] sm:$0xff]
    %v510 = vld [vmem:[%s1 + $0xb5c] sm:$0xf]
    %v511 = vld [vmem:[%s1 + $0xb60] sm:$0xff]
    %v512 = vld [vmem:[%s1 + $0xb68] sm:$0xff]
    %v513 = vld [vmem:[%s1 + $0xb70] sm:$0xff]
    %v514 = vld [vmem:[%s1 + $0xb78] sm:$0xf]
    %v515 = vld [vmem:[%s1 + $0xb7c] sm:$0xff]
    %v516 = vld [vmem:[%s1 + $0xb84] sm:$0xff]
    %v517 = vld [vmem:[%s1 + $0xb8c] sm:$0xff]
    %v518 = vld [vmem:[%s1 + $0xb94] sm:$0xf]
    %v519 = vld [vmem:[%s1 + $0xb98] sm:$0xff]
    %v520 = vld [vmem:[%s1 + $0xba0] sm:$0xff]
    %v521 = vld [vmem:[%s1 + $0xba8] sm:$0xff]
    %v522 = vld [vmem:[%s1 + $0xbb0] sm:$0xf]
    %v523 = vld [vmem:[%s1 + $0xbb4] sm:$0xff]
    %v524 = vld [vmem:[%s1 + $0xbbc] sm:$0xff]
    %v525 = vld [vmem:[%s1 + $0xbc4] sm:$0xff]
    %v526 = vld [vmem:[%s1 + $0xbcc] sm:$0xf]
    %v527 = vld [vmem:[%s1 + $0xbd0] sm:$0xff]
    %v528 = vld [vmem:[%s1 + $0xbd8] sm:$0xff]
    %v529 = vld [vmem:[%s1 + $0xbe0] sm:$0xff]
    %v530 = vld [vmem:[%s1 + $0xbe8] sm:$0xf]
    %v531 = vld [vmem:[%s1 + $0xbec] sm:$0xff]
    %v532 = vld [vmem:[%s1 + $0xbf4] sm:$0xff]
    %v533 = vld [vmem:[%s1 + $0xbfc] sm:$0xff]
    %v534 = vld [vmem:[%s1 + $0xc04] sm:$0xf]
    %v535 = vld [vmem:[%s1 + $0xc08] sm:$0xff]
    %v536 = vld [vmem:[%s1 + $0xc10] sm:$0xff]
    %v537 = vld [vmem:[%s1 + $0xc18] sm:$0xff]
    %v538 = vld [vmem:[%s1 + $0xc20] sm:$0xf]
    %v539 = vld [vmem:[%s1 + $0xc24] sm:$0xff]
    %v540 = vld [vmem:[%s1 + $0xc2c] sm:$0xff]
    %v541 = vld [vmem:[%s1 + $0xc34] sm:$0xff]
    %v542 = vld [vmem:[%s1 + $0xc3c] sm:$0xf]
    %v543 = vld [vmem:[%s2] sm:$0xff]
    %v544 = vstv %s85
    %v545 = vmul.f32 %v544, %v543
    %v547 = vperm.slane %v545, 0
    %v548 = vperm.slane %v545, 1
    %v549 = vperm.slane %v545, 2
    %v550 = vperm.slane %v545, 3
    %v551 = vperm.slane %v545, 4
    %v552 = vperm.slane %v545, 5
    %v553 = vperm.slane %v545, 6
    %v1009 = vunpack.c.l.b16 %v95
    %v1010 = vunpack.c.h.b16 %v95
    %v1011 = vunpack.c.l.b16 %v96
    %v1012 = vunpack.c.h.b16 %v96
    %v1013 = vunpack.c.l.b16 %v97
    %v1014 = vunpack.c.h.b16 %v97
    %v1015 = vunpack.c.l.b16 %v98
    %v1016 = vunpack.c.l.b16 %v99
    %v1017 = vunpack.c.h.b16 %v99
    %v1018 = vunpack.c.l.b16 %v100
    %v1019 = vunpack.c.h.b16 %v100
    %v1020 = vunpack.c.l.b16 %v101
    %v1021 = vunpack.c.h.b16 %v101
    %v1022 = vunpack.c.l.b16 %v102
    %v1023 = vunpack.c.l.b16 %v103
    %v1024 = vunpack.c.h.b16 %v103
    %v1025 = vunpack.c.l.b16 %v104
    %v1026 = vunpack.c.h.b16 %v104
    %v1027 = vunpack.c.l.b16 %v105
    %v1028 = vunpack.c.h.b16 %v105
    %v1029 = vunpack.c.l.b16 %v106
    %v1030 = vunpack.c.l.b16 %v107
    %v1031 = vunpack.c.h.b16 %v107
    %v1032 = vunpack.c.l.b16 %v108
    %v1033 = vunpack.c.h.b16 %v108
    %v1034 = vunpack.c.l.b16 %v109
    %v1035 = vunpack.c.h.b16 %v109
    %v1036 = vunpack.c.l.b16 %v110
    %v1037 = vunpack.c.l.b16 %v111
    %v1038 = vunpack.c.h.b16 %v111
    %v1039 = vunpack.c.l.b16 %v112
    %v1040 = vunpack.c.h.b16 %v112
    %v1041 = vunpack.c.l.b16 %v113
    %v1042 = vunpack.c.h.b16 %v113
    %v1043 = vunpack.c.l.b16 %v114
    %v1044 = vunpack.c.l.b16 %v115
    %v1045 = vunpack.c.h.b16 %v115
    %v1046 = vunpack.c.l.b16 %v116
    %v1047 = vunpack.c.h.b16 %v116
    %v1048 = vunpack.c.l.b16 %v117
    %v1049 = vunpack.c.h.b16 %v117
    %v1050 = vunpack.c.l.b16 %v118
    %v1051 = vunpack.c.l.b16 %v119
    %v1052 = vunpack.c.h.b16 %v119
    %v1053 = vunpack.c.l.b16 %v120
    %v1054 = vunpack.c.h.b16 %v120
    %v1055 = vunpack.c.l.b16 %v121
    %v1056 = vunpack.c.h.b16 %v121
    %v1057 = vunpack.c.l.b16 %v122
    %v1058 = vunpack.c.l.b16 %v123
    %v1059 = vunpack.c.h.b16 %v123
    %v1060 = vunpack.c.l.b16 %v124
    %v1061 = vunpack.c.h.b16 %v124
    %v1062 = vunpack.c.l.b16 %v125
    %v1063 = vunpack.c.h.b16 %v125
    %v1064 = vunpack.c.l.b16 %v126
    %v1065 = vunpack.c.l.b16 %v127
    %v1066 = vunpack.c.h.b16 %v127
    %v1067 = vunpack.c.l.b16 %v128
    %v1068 = vunpack.c.h.b16 %v128
    %v1069 = vunpack.c.l.b16 %v129
    %v1070 = vunpack.c.h.b16 %v129
    %v1071 = vunpack.c.l.b16 %v130
    %v1072 = vunpack.c.l.b16 %v131
    %v1073 = vunpack.c.h.b16 %v131
    %v1074 = vunpack.c.l.b16 %v132
    %v1075 = vunpack.c.h.b16 %v132
    %v1076 = vunpack.c.l.b16 %v133
    %v1077 = vunpack.c.h.b16 %v133
    %v1078 = vunpack.c.l.b16 %v134
    %v1079 = vunpack.c.l.b16 %v135
    %v1080 = vunpack.c.h.b16 %v135
    %v1081 = vunpack.c.l.b16 %v136
    %v1082 = vunpack.c.h.b16 %v136
    %v1083 = vunpack.c.l.b16 %v137
    %v1084 = vunpack.c.h.b16 %v137
    %v1085 = vunpack.c.l.b16 %v138
    %v1086 = vunpack.c.l.b16 %v139
    %v1087 = vunpack.c.h.b16 %v139
    %v1088 = vunpack.c.l.b16 %v140
    %v1089 = vunpack.c.h.b16 %v140
    %v1090 = vunpack.c.l.b16 %v141
    %v1091 = vunpack.c.h.b16 %v141
    %v1092 = vunpack.c.l.b16 %v142
    %v1093 = vunpack.c.l.b16 %v143
    %v1094 = vunpack.c.h.b16 %v143
    %v1095 = vunpack.c.l.b16 %v144
    %v1096 = vunpack.c.h.b16 %v144
    %v1097 = vunpack.c.l.b16 %v145
    %v1098 = vunpack.c.h.b16 %v145
    %v1099 = vunpack.c.l.b16 %v146
    %v1100 = vunpack.c.l.b16 %v147
    %v1101 = vunpack.c.h.b16 %v147
    %v1102 = vunpack.c.l.b16 %v148
    %v1103 = vunpack.c.h.b16 %v148
    %v1104 = vunpack.c.l.b16 %v149
    %v1105 = vunpack.c.h.b16 %v149
    %v1106 = vunpack.c.l.b16 %v150
    %v1107 = vunpack.c.l.b16 %v151
    %v1108 = vunpack.c.h.b16 %v151
    %v1109 = vunpack.c.l.b16 %v152
    %v1110 = vunpack.c.h.b16 %v152
    %v1111 = vunpack.c.l.b16 %v153
    %v1112 = vunpack.c.h.b16 %v153
    %v1113 = vunpack.c.l.b16 %v154
    %v1114 = vunpack.c.l.b16 %v155
    %v1115 = vunpack.c.h.b16 %v155
    %v1116 = vunpack.c.l.b16 %v156
    %v1117 = vunpack.c.h.b16 %v156
    %v1118 = vunpack.c.l.b16 %v157
    %v1119 = vunpack.c.h.b16 %v157
    %v1120 = vunpack.c.l.b16 %v158
    %v1121 = vunpack.c.l.b16 %v159
    %v1122 = vunpack.c.h.b16 %v159
    %v1123 = vunpack.c.l.b16 %v160
    %v1124 = vunpack.c.h.b16 %v160
    %v1125 = vunpack.c.l.b16 %v161
    %v1126 = vunpack.c.h.b16 %v161
    %v1127 = vunpack.c.l.b16 %v162
    %v1128 = vunpack.c.l.b16 %v163
    %v1129 = vunpack.c.h.b16 %v163
    %v1130 = vunpack.c.l.b16 %v164
    %v1131 = vunpack.c.h.b16 %v164
    %v1132 = vunpack.c.l.b16 %v165
    %v1133 = vunpack.c.h.b16 %v165
    %v1134 = vunpack.c.l.b16 %v166
    %v1135 = vunpack.c.l.b16 %v167
    %v1136 = vunpack.c.h.b16 %v167
    %v1137 = vunpack.c.l.b16 %v168
    %v1138 = vunpack.c.h.b16 %v168
    %v1139 = vunpack.c.l.b16 %v169
    %v1140 = vunpack.c.h.b16 %v169
    %v1141 = vunpack.c.l.b16 %v170
    %v1142 = vunpack.c.l.b16 %v171
    %v1143 = vunpack.c.h.b16 %v171
    %v1144 = vunpack.c.l.b16 %v172
    %v1145 = vunpack.c.h.b16 %v172
    %v1146 = vunpack.c.l.b16 %v173
    %v1147 = vunpack.c.h.b16 %v173
    %v1148 = vunpack.c.l.b16 %v174
    %v1149 = vunpack.c.l.b16 %v175
    %v1150 = vunpack.c.h.b16 %v175
    %v1151 = vunpack.c.l.b16 %v176
    %v1152 = vunpack.c.h.b16 %v176
    %v1153 = vunpack.c.l.b16 %v177
    %v1154 = vunpack.c.h.b16 %v177
    %v1155 = vunpack.c.l.b16 %v178
    %v1156 = vunpack.c.l.b16 %v179
    %v1157 = vunpack.c.h.b16 %v179
    %v1158 = vunpack.c.l.b16 %v180
    %v1159 = vunpack.c.h.b16 %v180
    %v1160 = vunpack.c.l.b16 %v181
    %v1161 = vunpack.c.h.b16 %v181
    %v1162 = vunpack.c.l.b16 %v182
    %v1163 = vunpack.c.l.b16 %v183
    %v1164 = vunpack.c.h.b16 %v183
    %v1165 = vunpack.c.l.b16 %v184
    %v1166 = vunpack.c.h.b16 %v184
    %v1167 = vunpack.c.l.b16 %v185
    %v1168 = vunpack.c.h.b16 %v185
    %v1169 = vunpack.c.l.b16 %v186
    %v1170 = vunpack.c.l.b16 %v187
    %v1171 = vunpack.c.h.b16 %v187
    %v1172 = vunpack.c.l.b16 %v188
    %v1173 = vunpack.c.h.b16 %v188
    %v1174 = vunpack.c.l.b16 %v189
    %v1175 = vunpack.c.h.b16 %v189
    %v1176 = vunpack.c.l.b16 %v190
    %v1177 = vunpack.c.l.b16 %v191
    %v1178 = vunpack.c.h.b16 %v191
    %v1179 = vunpack.c.l.b16 %v192
    %v1180 = vunpack.c.h.b16 %v192
    %v1181 = vunpack.c.l.b16 %v193
    %v1182 = vunpack.c.h.b16 %v193
    %v1183 = vunpack.c.l.b16 %v194
    %v1184 = vunpack.c.l.b16 %v195
    %v1185 = vunpack.c.h.b16 %v195
    %v1186 = vunpack.c.l.b16 %v196
    %v1187 = vunpack.c.h.b16 %v196
    %v1188 = vunpack.c.l.b16 %v197
    %v1189 = vunpack.c.h.b16 %v197
    %v1190 = vunpack.c.l.b16 %v198
    %v1191 = vunpack.c.l.b16 %v199
    %v1192 = vunpack.c.h.b16 %v199
    %v1193 = vunpack.c.l.b16 %v200
    %v1194 = vunpack.c.h.b16 %v200
    %v1195 = vunpack.c.l.b16 %v201
    %v1196 = vunpack.c.h.b16 %v201
    %v1197 = vunpack.c.l.b16 %v202
    %v1198 = vunpack.c.l.b16 %v203
    %v1199 = vunpack.c.h.b16 %v203
    %v1200 = vunpack.c.l.b16 %v204
    %v1201 = vunpack.c.h.b16 %v204
    %v1202 = vunpack.c.l.b16 %v205
    %v1203 = vunpack.c.h.b16 %v205
    %v1204 = vunpack.c.l.b16 %v206
    %v1205 = vunpack.c.l.b16 %v207
    %v1206 = vunpack.c.h.b16 %v207
    %v1207 = vunpack.c.l.b16 %v208
    %v1208 = vunpack.c.h.b16 %v208
    %v1209 = vunpack.c.l.b16 %v209
    %v1210 = vunpack.c.h.b16 %v209
    %v1211 = vunpack.c.l.b16 %v210
    %v1212 = vunpack.c.l.b16 %v211
    %v1213 = vunpack.c.h.b16 %v211
    %v1214 = vunpack.c.l.b16 %v212
    %v1215 = vunpack.c.h.b16 %v212
    %v1216 = vunpack.c.l.b16 %v213
    %v1217 = vunpack.c.h.b16 %v213
    %v1218 = vunpack.c.l.b16 %v214
    %v1219 = vunpack.c.l.b16 %v215
    %v1220 = vunpack.c.h.b16 %v215
    %v1221 = vunpack.c.l.b16 %v216
    %v1222 = vunpack.c.h.b16 %v216
    %v1223 = vunpack.c.l.b16 %v217
    %v1224 = vunpack.c.h.b16 %v217
    %v1225 = vunpack.c.l.b16 %v218
    %v1226 = vunpack.c.l.b16 %v219
    %v1227 = vunpack.c.h.b16 %v219
    %v1228 = vunpack.c.l.b16 %v220
    %v1229 = vunpack.c.h.b16 %v220
    %v1230 = vunpack.c.l.b16 %v221
    %v1231 = vunpack.c.h.b16 %v221
    %v1232 = vunpack.c.l.b16 %v222
    %v1233 = vunpack.c.l.b16 %v223
    %v1234 = vunpack.c.h.b16 %v223
    %v1235 = vunpack.c.l.b16 %v224
    %v1236 = vunpack.c.h.b16 %v224
    %v1237 = vunpack.c.l.b16 %v225
    %v1238 = vunpack.c.h.b16 %v225
    %v1239 = vunpack.c.l.b16 %v226
    %v1240 = vunpack.c.l.b16 %v227
    %v1241 = vunpack.c.h.b16 %v227
    %v1242 = vunpack.c.l.b16 %v228
    %v1243 = vunpack.c.h.b16 %v228
    %v1244 = vunpack.c.l.b16 %v229
    %v1245 = vunpack.c.h.b16 %v229
    %v1246 = vunpack.c.l.b16 %v230
    %v1247 = vunpack.c.l.b16 %v231
    %v1248 = vunpack.c.h.b16 %v231
    %v1249 = vunpack.c.l.b16 %v232
    %v1250 = vunpack.c.h.b16 %v232
    %v1251 = vunpack.c.l.b16 %v233
    %v1252 = vunpack.c.h.b16 %v233
    %v1253 = vunpack.c.l.b16 %v234
    %v1254 = vunpack.c.l.b16 %v235
    %v1255 = vunpack.c.h.b16 %v235
    %v1256 = vunpack.c.l.b16 %v236
    %v1257 = vunpack.c.h.b16 %v236
    %v1258 = vunpack.c.l.b16 %v237
    %v1259 = vunpack.c.h.b16 %v237
    %v1260 = vunpack.c.l.b16 %v238
    %v1261 = vunpack.c.l.b16 %v239
    %v1262 = vunpack.c.h.b16 %v239
    %v1263 = vunpack.c.l.b16 %v240
    %v1264 = vunpack.c.h.b16 %v240
    %v1265 = vunpack.c.l.b16 %v241
    %v1266 = vunpack.c.h.b16 %v241
    %v1267 = vunpack.c.l.b16 %v242
    %v1268 = vunpack.c.l.b16 %v243
    %v1269 = vunpack.c.h.b16 %v243
    %v1270 = vunpack.c.l.b16 %v244
    %v1271 = vunpack.c.h.b16 %v244
    %v1272 = vunpack.c.l.b16 %v245
    %v1273 = vunpack.c.h.b16 %v245
    %v1274 = vunpack.c.l.b16 %v246
    %v1275 = vunpack.c.l.b16 %v247
    %v1276 = vunpack.c.h.b16 %v247
    %v1277 = vunpack.c.l.b16 %v248
    %v1278 = vunpack.c.h.b16 %v248
    %v1279 = vunpack.c.l.b16 %v249
    %v1280 = vunpack.c.h.b16 %v249
    %v1281 = vunpack.c.l.b16 %v250
    %v1282 = vunpack.c.l.b16 %v251
    %v1283 = vunpack.c.h.b16 %v251
    %v1284 = vunpack.c.l.b16 %v252
    %v1285 = vunpack.c.h.b16 %v252
    %v1286 = vunpack.c.l.b16 %v253
    %v1287 = vunpack.c.h.b16 %v253
    %v1288 = vunpack.c.l.b16 %v254
    %v1289 = vunpack.c.l.b16 %v255
    %v1290 = vunpack.c.h.b16 %v255
    %v1291 = vunpack.c.l.b16 %v256
    %v1292 = vunpack.c.h.b16 %v256
    %v1293 = vunpack.c.l.b16 %v257
    %v1294 = vunpack.c.h.b16 %v257
    %v1295 = vunpack.c.l.b16 %v258
    %v1296 = vunpack.c.l.b16 %v259
    %v1297 = vunpack.c.h.b16 %v259
    %v1298 = vunpack.c.l.b16 %v260
    %v1299 = vunpack.c.h.b16 %v260
    %v1300 = vunpack.c.l.b16 %v261
    %v1301 = vunpack.c.h.b16 %v261
    %v1302 = vunpack.c.l.b16 %v262
    %v1303 = vunpack.c.l.b16 %v263
    %v1304 = vunpack.c.h.b16 %v263
    %v1305 = vunpack.c.l.b16 %v264
    %v1306 = vunpack.c.h.b16 %v264
    %v1307 = vunpack.c.l.b16 %v265
    %v1308 = vunpack.c.h.b16 %v265
    %v1309 = vunpack.c.l.b16 %v266
    %v1310 = vunpack.c.l.b16 %v267
    %v1311 = vunpack.c.h.b16 %v267
    %v1312 = vunpack.c.l.b16 %v268
    %v1313 = vunpack.c.h.b16 %v268
    %v1314 = vunpack.c.l.b16 %v269
    %v1315 = vunpack.c.h.b16 %v269
    %v1316 = vunpack.c.l.b16 %v270
    %v1317 = vunpack.c.l.b16 %v271
    %v1318 = vunpack.c.h.b16 %v271
    %v1319 = vunpack.c.l.b16 %v272
    %v1320 = vunpack.c.h.b16 %v272
    %v1321 = vunpack.c.l.b16 %v273
    %v1322 = vunpack.c.h.b16 %v273
    %v1323 = vunpack.c.l.b16 %v274
    %v1324 = vunpack.c.l.b16 %v275
    %v1325 = vunpack.c.h.b16 %v275
    %v1326 = vunpack.c.l.b16 %v276
    %v1327 = vunpack.c.h.b16 %v276
    %v1328 = vunpack.c.l.b16 %v277
    %v1329 = vunpack.c.h.b16 %v277
    %v1330 = vunpack.c.l.b16 %v278
    %v1331 = vunpack.c.l.b16 %v279
    %v1332 = vunpack.c.h.b16 %v279
    %v1333 = vunpack.c.l.b16 %v280
    %v1334 = vunpack.c.h.b16 %v280
    %v1335 = vunpack.c.l.b16 %v281
    %v1336 = vunpack.c.h.b16 %v281
    %v1337 = vunpack.c.l.b16 %v282
    %v1338 = vunpack.c.l.b16 %v283
    %v1339 = vunpack.c.h.b16 %v283
    %v1340 = vunpack.c.l.b16 %v284
    %v1341 = vunpack.c.h.b16 %v284
    %v1342 = vunpack.c.l.b16 %v285
    %v1343 = vunpack.c.h.b16 %v285
    %v1344 = vunpack.c.l.b16 %v286
    %v1345 = vunpack.c.l.b16 %v287
    %v1346 = vunpack.c.h.b16 %v287
    %v1347 = vunpack.c.l.b16 %v288
    %v1348 = vunpack.c.h.b16 %v288
    %v1349 = vunpack.c.l.b16 %v289
    %v1350 = vunpack.c.h.b16 %v289
    %v1351 = vunpack.c.l.b16 %v290
    %v1352 = vunpack.c.l.b16 %v291
    %v1353 = vunpack.c.h.b16 %v291
    %v1354 = vunpack.c.l.b16 %v292
    %v1355 = vunpack.c.h.b16 %v292
    %v1356 = vunpack.c.l.b16 %v293
    %v1357 = vunpack.c.h.b16 %v293
    %v1358 = vunpack.c.l.b16 %v294
    %v1359 = vunpack.c.l.b16 %v295
    %v1360 = vunpack.c.h.b16 %v295
    %v1361 = vunpack.c.l.b16 %v296
    %v1362 = vunpack.c.h.b16 %v296
    %v1363 = vunpack.c.l.b16 %v297
    %v1364 = vunpack.c.h.b16 %v297
    %v1365 = vunpack.c.l.b16 %v298
    %v1366 = vunpack.c.l.b16 %v299
    %v1367 = vunpack.c.h.b16 %v299
    %v1368 = vunpack.c.l.b16 %v300
    %v1369 = vunpack.c.h.b16 %v300
    %v1370 = vunpack.c.l.b16 %v301
    %v1371 = vunpack.c.h.b16 %v301
    %v1372 = vunpack.c.l.b16 %v302
    %v1373 = vunpack.c.l.b16 %v303
    %v1374 = vunpack.c.h.b16 %v303
    %v1375 = vunpack.c.l.b16 %v304
    %v1376 = vunpack.c.h.b16 %v304
    %v1377 = vunpack.c.l.b16 %v305
    %v1378 = vunpack.c.h.b16 %v305
    %v1379 = vunpack.c.l.b16 %v306
    %v1380 = vunpack.c.l.b16 %v307
    %v1381 = vunpack.c.h.b16 %v307
    %v1382 = vunpack.c.l.b16 %v308
    %v1383 = vunpack.c.h.b16 %v308
    %v1384 = vunpack.c.l.b16 %v309
    %v1385 = vunpack.c.h.b16 %v309
    %v1386 = vunpack.c.l.b16 %v310
    %v1387 = vunpack.c.l.b16 %v311
    %v1388 = vunpack.c.h.b16 %v311
    %v1389 = vunpack.c.l.b16 %v312
    %v1390 = vunpack.c.h.b16 %v312
    %v1391 = vunpack.c.l.b16 %v313
    %v1392 = vunpack.c.h.b16 %v313
    %v1393 = vunpack.c.l.b16 %v314
    %v1394 = vunpack.c.l.b16 %v315
    %v1395 = vunpack.c.h.b16 %v315
    %v1396 = vunpack.c.l.b16 %v316
    %v1397 = vunpack.c.h.b16 %v316
    %v1398 = vunpack.c.l.b16 %v317
    %v1399 = vunpack.c.h.b16 %v317
    %v1400 = vunpack.c.l.b16 %v318
    %v1401 = vunpack.c.l.b16 %v319
    %v1402 = vunpack.c.h.b16 %v319
    %v1403 = vunpack.c.l.b16 %v320
    %v1404 = vunpack.c.h.b16 %v320
    %v1405 = vunpack.c.l.b16 %v321
    %v1406 = vunpack.c.h.b16 %v321
    %v1407 = vunpack.c.l.b16 %v322
    %v1408 = vunpack.c.l.b16 %v323
    %v1409 = vunpack.c.h.b16 %v323
    %v1410 = vunpack.c.l.b16 %v324
    %v1411 = vunpack.c.h.b16 %v324
    %v1412 = vunpack.c.l.b16 %v325
    %v1413 = vunpack.c.h.b16 %v325
    %v1414 = vunpack.c.l.b16 %v326
    %v1415 = vunpack.c.l.b16 %v327
    %v1416 = vunpack.c.h.b16 %v327
    %v1417 = vunpack.c.l.b16 %v328
    %v1418 = vunpack.c.h.b16 %v328
    %v1419 = vunpack.c.l.b16 %v329
    %v1420 = vunpack.c.h.b16 %v329
    %v1421 = vunpack.c.l.b16 %v330
    %v1422 = vunpack.c.l.b16 %v331
    %v1423 = vunpack.c.h.b16 %v331
    %v1424 = vunpack.c.l.b16 %v332
    %v1425 = vunpack.c.h.b16 %v332
    %v1426 = vunpack.c.l.b16 %v333
    %v1427 = vunpack.c.h.b16 %v333
    %v1428 = vunpack.c.l.b16 %v334
    %v1429 = vunpack.c.l.b16 %v335
    %v1430 = vunpack.c.h.b16 %v335
    %v1431 = vunpack.c.l.b16 %v336
    %v1432 = vunpack.c.h.b16 %v336
    %v1433 = vunpack.c.l.b16 %v337
    %v1434 = vunpack.c.h.b16 %v337
    %v1435 = vunpack.c.l.b16 %v338
    %v1436 = vunpack.c.l.b16 %v339
    %v1437 = vunpack.c.h.b16 %v339
    %v1438 = vunpack.c.l.b16 %v340
    %v1439 = vunpack.c.h.b16 %v340
    %v1440 = vunpack.c.l.b16 %v341
    %v1441 = vunpack.c.h.b16 %v341
    %v1442 = vunpack.c.l.b16 %v342
    %v1443 = vunpack.c.l.b16 %v343
    %v1444 = vunpack.c.h.b16 %v343
    %v1445 = vunpack.c.l.b16 %v344
    %v1446 = vunpack.c.h.b16 %v344
    %v1447 = vunpack.c.l.b16 %v345
    %v1448 = vunpack.c.h.b16 %v345
    %v1449 = vunpack.c.l.b16 %v346
    %v1450 = vunpack.c.l.b16 %v347
    %v1451 = vunpack.c.h.b16 %v347
    %v1452 = vunpack.c.l.b16 %v348
    %v1453 = vunpack.c.h.b16 %v348
    %v1454 = vunpack.c.l.b16 %v349
    %v1455 = vunpack.c.h.b16 %v349
    %v1456 = vunpack.c.l.b16 %v350
    %v1457 = vunpack.c.l.b16 %v351
    %v1458 = vunpack.c.h.b16 %v351
    %v1459 = vunpack.c.l.b16 %v352
    %v1460 = vunpack.c.h.b16 %v352
    %v1461 = vunpack.c.l.b16 %v353
    %v1462 = vunpack.c.h.b16 %v353
    %v1463 = vunpack.c.l.b16 %v354
    %v1464 = vunpack.c.l.b16 %v355
    %v1465 = vunpack.c.h.b16 %v355
    %v1466 = vunpack.c.l.b16 %v356
    %v1467 = vunpack.c.h.b16 %v356
    %v1468 = vunpack.c.l.b16 %v357
    %v1469 = vunpack.c.h.b16 %v357
    %v1470 = vunpack.c.l.b16 %v358
    %v1471 = vunpack.c.l.b16 %v359
    %v1472 = vunpack.c.h.b16 %v359
    %v1473 = vunpack.c.l.b16 %v360
    %v1474 = vunpack.c.h.b16 %v360
    %v1475 = vunpack.c.l.b16 %v361
    %v1476 = vunpack.c.h.b16 %v361
    %v1477 = vunpack.c.l.b16 %v362
    %v1478 = vunpack.c.l.b16 %v363
    %v1479 = vunpack.c.h.b16 %v363
    %v1480 = vunpack.c.l.b16 %v364
    %v1481 = vunpack.c.h.b16 %v364
    %v1482 = vunpack.c.l.b16 %v365
    %v1483 = vunpack.c.h.b16 %v365
    %v1484 = vunpack.c.l.b16 %v366
    %v1485 = vunpack.c.l.b16 %v367
    %v1486 = vunpack.c.h.b16 %v367
    %v1487 = vunpack.c.l.b16 %v368
    %v1488 = vunpack.c.h.b16 %v368
    %v1489 = vunpack.c.l.b16 %v369
    %v1490 = vunpack.c.h.b16 %v369
    %v1491 = vunpack.c.l.b16 %v370
    %v1492 = vunpack.c.l.b16 %v371
    %v1493 = vunpack.c.h.b16 %v371
    %v1494 = vunpack.c.l.b16 %v372
    %v1495 = vunpack.c.h.b16 %v372
    %v1496 = vunpack.c.l.b16 %v373
    %v1497 = vunpack.c.h.b16 %v373
    %v1498 = vunpack.c.l.b16 %v374
    %v1499 = vunpack.c.l.b16 %v375
    %v1500 = vunpack.c.h.b16 %v375
    %v1501 = vunpack.c.l.b16 %v376
    %v1502 = vunpack.c.h.b16 %v376
    %v1503 = vunpack.c.l.b16 %v377
    %v1504 = vunpack.c.h.b16 %v377
    %v1505 = vunpack.c.l.b16 %v378
    %v1506 = vunpack.c.l.b16 %v379
    %v1507 = vunpack.c.h.b16 %v379
    %v1508 = vunpack.c.l.b16 %v380
    %v1509 = vunpack.c.h.b16 %v380
    %v1510 = vunpack.c.l.b16 %v381
    %v1511 = vunpack.c.h.b16 %v381
    %v1512 = vunpack.c.l.b16 %v382
    %v1513 = vunpack.c.l.b16 %v383
    %v1514 = vunpack.c.h.b16 %v383
    %v1515 = vunpack.c.l.b16 %v384
    %v1516 = vunpack.c.h.b16 %v384
    %v1517 = vunpack.c.l.b16 %v385
    %v1518 = vunpack.c.h.b16 %v385
    %v1519 = vunpack.c.l.b16 %v386
    %v1520 = vunpack.c.l.b16 %v387
    %v1521 = vunpack.c.h.b16 %v387
    %v1522 = vunpack.c.l.b16 %v388
    %v1523 = vunpack.c.h.b16 %v388
    %v1524 = vunpack.c.l.b16 %v389
    %v1525 = vunpack.c.h.b16 %v389
    %v1526 = vunpack.c.l.b16 %v390
    %v1527 = vunpack.c.l.b16 %v391
    %v1528 = vunpack.c.h.b16 %v391
    %v1529 = vunpack.c.l.b16 %v392
    %v1530 = vunpack.c.h.b16 %v392
    %v1531 = vunpack.c.l.b16 %v393
    %v1532 = vunpack.c.h.b16 %v393
    %v1533 = vunpack.c.l.b16 %v394
    %v1534 = vunpack.c.l.b16 %v395
    %v1535 = vunpack.c.h.b16 %v395
    %v1536 = vunpack.c.l.b16 %v396
    %v1537 = vunpack.c.h.b16 %v396
    %v1538 = vunpack.c.l.b16 %v397
    %v1539 = vunpack.c.h.b16 %v397
    %v1540 = vunpack.c.l.b16 %v398
    %v1541 = vunpack.c.l.b16 %v399
    %v1542 = vunpack.c.h.b16 %v399
    %v1543 = vunpack.c.l.b16 %v400
    %v1544 = vunpack.c.h.b16 %v400
    %v1545 = vunpack.c.l.b16 %v401
    %v1546 = vunpack.c.h.b16 %v401
    %v1547 = vunpack.c.l.b16 %v402
    %v1548 = vunpack.c.l.b16 %v403
    %v1549 = vunpack.c.h.b16 %v403
    %v1550 = vunpack.c.l.b16 %v404
    %v1551 = vunpack.c.h.b16 %v404
    %v1552 = vunpack.c.l.b16 %v405
    %v1553 = vunpack.c.h.b16 %v405
    %v1554 = vunpack.c.l.b16 %v406
    %v1555 = vunpack.c.l.b16 %v407
    %v1556 = vunpack.c.h.b16 %v407
    %v1557 = vunpack.c.l.b16 %v408
    %v1558 = vunpack.c.h.b16 %v408
    %v1559 = vunpack.c.l.b16 %v409
    %v1560 = vunpack.c.h.b16 %v409
    %v1561 = vunpack.c.l.b16 %v410
    %v1562 = vunpack.c.l.b16 %v411
    %v1563 = vunpack.c.h.b16 %v411
    %v1564 = vunpack.c.l.b16 %v412
    %v1565 = vunpack.c.h.b16 %v412
    %v1566 = vunpack.c.l.b16 %v413
    %v1567 = vunpack.c.h.b16 %v413
    %v1568 = vunpack.c.l.b16 %v414
    %v1569 = vunpack.c.l.b16 %v415
    %v1570 = vunpack.c.h.b16 %v415
    %v1571 = vunpack.c.l.b16 %v416
    %v1572 = vunpack.c.h.b16 %v416
    %v1573 = vunpack.c.l.b16 %v417
    %v1574 = vunpack.c.h.b16 %v417
    %v1575 = vunpack.c.l.b16 %v418
    %v1576 = vunpack.c.l.b16 %v419
    %v1577 = vunpack.c.h.b16 %v419
    %v1578 = vunpack.c.l.b16 %v420
    %v1579 = vunpack.c.h.b16 %v420
    %v1580 = vunpack.c.l.b16 %v421
    %v1581 = vunpack.c.h.b16 %v421
    %v1582 = vunpack.c.l.b16 %v422
    %v1583 = vunpack.c.l.b16 %v423
    %v1584 = vunpack.c.h.b16 %v423
    %v1585 = vunpack.c.l.b16 %v424
    %v1586 = vunpack.c.h.b16 %v424
    %v1587 = vunpack.c.l.b16 %v425
    %v1588 = vunpack.c.h.b16 %v425
    %v1589 = vunpack.c.l.b16 %v426
    %v1590 = vunpack.c.l.b16 %v427
    %v1591 = vunpack.c.h.b16 %v427
    %v1592 = vunpack.c.l.b16 %v428
    %v1593 = vunpack.c.h.b16 %v428
    %v1594 = vunpack.c.l.b16 %v429
    %v1595 = vunpack.c.h.b16 %v429
    %v1596 = vunpack.c.l.b16 %v430
    %v1597 = vunpack.c.l.b16 %v431
    %v1598 = vunpack.c.h.b16 %v431
    %v1599 = vunpack.c.l.b16 %v432
    %v1600 = vunpack.c.h.b16 %v432
    %v1601 = vunpack.c.l.b16 %v433
    %v1602 = vunpack.c.h.b16 %v433
    %v1603 = vunpack.c.l.b16 %v434
    %v1604 = vunpack.c.l.b16 %v435
    %v1605 = vunpack.c.h.b16 %v435
    %v1606 = vunpack.c.l.b16 %v436
    %v1607 = vunpack.c.h.b16 %v436
    %v1608 = vunpack.c.l.b16 %v437
    %v1609 = vunpack.c.h.b16 %v437
    %v1610 = vunpack.c.l.b16 %v438
    %v1611 = vunpack.c.l.b16 %v439
    %v1612 = vunpack.c.h.b16 %v439
    %v1613 = vunpack.c.l.b16 %v440
    %v1614 = vunpack.c.h.b16 %v440
    %v1615 = vunpack.c.l.b16 %v441
    %v1616 = vunpack.c.h.b16 %v441
    %v1617 = vunpack.c.l.b16 %v442
    %v1618 = vunpack.c.l.b16 %v443
    %v1619 = vunpack.c.h.b16 %v443
    %v1620 = vunpack.c.l.b16 %v444
    %v1621 = vunpack.c.h.b16 %v444
    %v1622 = vunpack.c.l.b16 %v445
    %v1623 = vunpack.c.h.b16 %v445
    %v1624 = vunpack.c.l.b16 %v446
    %v1625 = vunpack.c.l.b16 %v447
    %v1626 = vunpack.c.h.b16 %v447
    %v1627 = vunpack.c.l.b16 %v448
    %v1628 = vunpack.c.h.b16 %v448
    %v1629 = vunpack.c.l.b16 %v449
    %v1630 = vunpack.c.h.b16 %v449
    %v1631 = vunpack.c.l.b16 %v450
    %v1632 = vunpack.c.l.b16 %v451
    %v1633 = vunpack.c.h.b16 %v451
    %v1634 = vunpack.c.l.b16 %v452
    %v1635 = vunpack.c.h.b16 %v452
    %v1636 = vunpack.c.l.b16 %v453
    %v1637 = vunpack.c.h.b16 %v453
    %v1638 = vunpack.c.l.b16 %v454
    %v1639 = vunpack.c.l.b16 %v455
    %v1640 = vunpack.c.h.b16 %v455
    %v1641 = vunpack.c.l.b16 %v456
    %v1642 = vunpack.c.h.b16 %v456
    %v1643 = vunpack.c.l.b16 %v457
    %v1644 = vunpack.c.h.b16 %v457
    %v1645 = vunpack.c.l.b16 %v458
    %v1646 = vunpack.c.l.b16 %v459
    %v1647 = vunpack.c.h.b16 %v459
    %v1648 = vunpack.c.l.b16 %v460
    %v1649 = vunpack.c.h.b16 %v460
    %v1650 = vunpack.c.l.b16 %v461
    %v1651 = vunpack.c.h.b16 %v461
    %v1652 = vunpack.c.l.b16 %v462
    %v1653 = vunpack.c.l.b16 %v463
    %v1654 = vunpack.c.h.b16 %v463
    %v1655 = vunpack.c.l.b16 %v464
    %v1656 = vunpack.c.h.b16 %v464
    %v1657 = vunpack.c.l.b16 %v465
    %v1658 = vunpack.c.h.b16 %v465
    %v1659 = vunpack.c.l.b16 %v466
    %v1660 = vunpack.c.l.b16 %v467
    %v1661 = vunpack.c.h.b16 %v467
    %v1662 = vunpack.c.l.b16 %v468
    %v1663 = vunpack.c.h.b16 %v468
    %v1664 = vunpack.c.l.b16 %v469
    %v1665 = vunpack.c.h.b16 %v469
    %v1666 = vunpack.c.l.b16 %v470
    %v1667 = vunpack.c.l.b16 %v471
    %v1668 = vunpack.c.h.b16 %v471
    %v1669 = vunpack.c.l.b16 %v472
    %v1670 = vunpack.c.h.b16 %v472
    %v1671 = vunpack.c.l.b16 %v473
    %v1672 = vunpack.c.h.b16 %v473
    %v1673 = vunpack.c.l.b16 %v474
    %v1674 = vunpack.c.l.b16 %v475
    %v1675 = vunpack.c.h.b16 %v475
    %v1676 = vunpack.c.l.b16 %v476
    %v1677 = vunpack.c.h.b16 %v476
    %v1678 = vunpack.c.l.b16 %v477
    %v1679 = vunpack.c.h.b16 %v477
    %v1680 = vunpack.c.l.b16 %v478
    %v1681 = vunpack.c.l.b16 %v479
    %v1682 = vunpack.c.h.b16 %v479
    %v1683 = vunpack.c.l.b16 %v480
    %v1684 = vunpack.c.h.b16 %v480
    %v1685 = vunpack.c.l.b16 %v481
    %v1686 = vunpack.c.h.b16 %v481
    %v1687 = vunpack.c.l.b16 %v482
    %v1688 = vunpack.c.l.b16 %v483
    %v1689 = vunpack.c.h.b16 %v483
    %v1690 = vunpack.c.l.b16 %v484
    %v1691 = vunpack.c.h.b16 %v484
    %v1692 = vunpack.c.l.b16 %v485
    %v1693 = vunpack.c.h.b16 %v485
    %v1694 = vunpack.c.l.b16 %v486
    %v1695 = vunpack.c.l.b16 %v487
    %v1696 = vunpack.c.h.b16 %v487
    %v1697 = vunpack.c.l.b16 %v488
    %v1698 = vunpack.c.h.b16 %v488
    %v1699 = vunpack.c.l.b16 %v489
    %v1700 = vunpack.c.h.b16 %v489
    %v1701 = vunpack.c.l.b16 %v490
    %v1702 = vunpack.c.l.b16 %v491
    %v1703 = vunpack.c.h.b16 %v491
    %v1704 = vunpack.c.l.b16 %v492
    %v1705 = vunpack.c.h.b16 %v492
    %v1706 = vunpack.c.l.b16 %v493
    %v1707 = vunpack.c.h.b16 %v493
    %v1708 = vunpack.c.l.b16 %v494
    %v1709 = vunpack.c.l.b16 %v495
    %v1710 = vunpack.c.h.b16 %v495
    %v1711 = vunpack.c.l.b16 %v496
    %v1712 = vunpack.c.h.b16 %v496
    %v1713 = vunpack.c.l.b16 %v497
    %v1714 = vunpack.c.h.b16 %v497
    %v1715 = vunpack.c.l.b16 %v498
    %v1716 = vunpack.c.l.b16 %v499
    %v1717 = vunpack.c.h.b16 %v499
    %v1718 = vunpack.c.l.b16 %v500
    %v1719 = vunpack.c.h.b16 %v500
    %v1720 = vunpack.c.l.b16 %v501
    %v1721 = vunpack.c.h.b16 %v501
    %v1722 = vunpack.c.l.b16 %v502
    %v1723 = vunpack.c.l.b16 %v503
    %v1724 = vunpack.c.h.b16 %v503
    %v1725 = vunpack.c.l.b16 %v504
    %v1726 = vunpack.c.h.b16 %v504
    %v1727 = vunpack.c.l.b16 %v505
    %v1728 = vunpack.c.h.b16 %v505
    %v1729 = vunpack.c.l.b16 %v506
    %v1730 = vunpack.c.l.b16 %v507
    %v1731 = vunpack.c.h.b16 %v507
    %v1732 = vunpack.c.l.b16 %v508
    %v1733 = vunpack.c.h.b16 %v508
    %v1734 = vunpack.c.l.b16 %v509
    %v1735 = vunpack.c.h.b16 %v509
    %v1736 = vunpack.c.l.b16 %v510
    %v1737 = vunpack.c.l.b16 %v511
    %v1738 = vunpack.c.h.b16 %v511
    %v1739 = vunpack.c.l.b16 %v512
    %v1740 = vunpack.c.h.b16 %v512
    %v1741 = vunpack.c.l.b16 %v513
    %v1742 = vunpack.c.h.b16 %v513
    %v1743 = vunpack.c.l.b16 %v514
    %v1744 = vunpack.c.l.b16 %v515
    %v1745 = vunpack.c.h.b16 %v515
    %v1746 = vunpack.c.l.b16 %v516
    %v1747 = vunpack.c.h.b16 %v516
    %v1748 = vunpack.c.l.b16 %v517
    %v1749 = vunpack.c.h.b16 %v517
    %v1750 = vunpack.c.l.b16 %v518
    %v1751 = vunpack.c.l.b16 %v519
    %v1752 = vunpack.c.h.b16 %v519
    %v1753 = vunpack.c.l.b16 %v520
    %v1754 = vunpack.c.h.b16 %v520
    %v1755 = vunpack.c.l.b16 %v521
    %v1756 = vunpack.c.h.b16 %v521
    %v1757 = vunpack.c.l.b16 %v522
    %v1758 = vunpack.c.l.b16 %v523
    %v1759 = vunpack.c.h.b16 %v523
    %v1760 = vunpack.c.l.b16 %v524
    %v1761 = vunpack.c.h.b16 %v524
    %v1762 = vunpack.c.l.b16 %v525
    %v1763 = vunpack.c.h.b16 %v525
    %v1764 = vunpack.c.l.b16 %v526
    %v1765 = vunpack.c.l.b16 %v527
    %v1766 = vunpack.c.h.b16 %v527
    %v1767 = vunpack.c.l.b16 %v528
    %v1768 = vunpack.c.h.b16 %v528
    %v1769 = vunpack.c.l.b16 %v529
    %v1770 = vunpack.c.h.b16 %v529
    %v1771 = vunpack.c.l.b16 %v530
    %v1772 = vunpack.c.l.b16 %v531
    %v1773 = vunpack.c.h.b16 %v531
    %v1774 = vunpack.c.l.b16 %v532
    %v1775 = vunpack.c.h.b16 %v532
    %v1776 = vunpack.c.l.b16 %v533
    %v1777 = vunpack.c.h.b16 %v533
    %v1778 = vunpack.c.l.b16 %v534
    %v1779 = vunpack.c.l.b16 %v535
    %v1780 = vunpack.c.h.b16 %v535
    %v1781 = vunpack.c.l.b16 %v536
    %v1782 = vunpack.c.h.b16 %v536
    %v1783 = vunpack.c.l.b16 %v537
    %v1784 = vunpack.c.h.b16 %v537
    %v1785 = vunpack.c.l.b16 %v538
    %v1786 = vunpack.c.l.b16 %v539
    %v1787 = vunpack.c.h.b16 %v539
    %v1788 = vunpack.c.l.b16 %v540
    %v1789 = vunpack.c.h.b16 %v540
    %v1790 = vunpack.c.l.b16 %v541
    %v1791 = vunpack.c.h.b16 %v541
    %v1792 = vunpack.c.l.b16 %v542
    %v1793 = vpack.c.b16 %v1016, %v1009
    %v1794 = vpack.c.b16 %v1017, %v1010
    %v1795 = vpack.c.b16 %v1018, %v1011
    %v1796 = vpack.c.b16 %v1019, %v1012
    %v1797 = vpack.c.b16 %v1020, %v1013
    %v1798 = vpack.c.b16 %v1021, %v1014
    %v1799 = vpack.c.b16 %v1022, %v1015
    %v1800 = vpack.c.b16 %v1030, %v1023
    %v1801 = vpack.c.b16 %v1031, %v1024
    %v1802 = vpack.c.b16 %v1032, %v1025
    %v1803 = vpack.c.b16 %v1033, %v1026
    %v1804 = vpack.c.b16 %v1034, %v1027
    %v1805 = vpack.c.b16 %v1035, %v1028
    %v1806 = vpack.c.b16 %v1036, %v1029
    %v1807 = vpack.c.b16 %v1044, %v1037
    %v1808 = vpack.c.b16 %v1045, %v1038
    %v1809 = vpack.c.b16 %v1046, %v1039
    %v1810 = vpack.c.b16 %v1047, %v1040
    %v1811 = vpack.c.b16 %v1048, %v1041
    %v1812 = vpack.c.b16 %v1049, %v1042
    %v1813 = vpack.c.b16 %v1050, %v1043
    %v1814 = vpack.c.b16 %v1058, %v1051
    %v1815 = vpack.c.b16 %v1059, %v1052
    %v1816 = vpack.c.b16 %v1060, %v1053
    %v1817 = vpack.c.b16 %v1061, %v1054
    %v1818 = vpack.c.b16 %v1062, %v1055
    %v1819 = vpack.c.b16 %v1063, %v1056
    %v1820 = vpack.c.b16 %v1064, %v1057
    %v1821 = vpack.c.b16 %v1072, %v1065
    %v1822 = vpack.c.b16 %v1073, %v1066
    %v1823 = vpack.c.b16 %v1074, %v1067
    %v1824 = vpack.c.b16 %v1075, %v1068
    %v1825 = vpack.c.b16 %v1076, %v1069
    %v1826 = vpack.c.b16 %v1077, %v1070
    %v1827 = vpack.c.b16 %v1078, %v1071
    %v1828 = vpack.c.b16 %v1086, %v1079
    %v1829 = vpack.c.b16 %v1087, %v1080
    %v1830 = vpack.c.b16 %v1088, %v1081
    %v1831 = vpack.c.b16 %v1089, %v1082
    %v1832 = vpack.c.b16 %v1090, %v1083
    %v1833 = vpack.c.b16 %v1091, %v1084
    %v1834 = vpack.c.b16 %v1092, %v1085
    %v1835 = vpack.c.b16 %v1100, %v1093
    %v1836 = vpack.c.b16 %v1101, %v1094
    %v1837 = vpack.c.b16 %v1102, %v1095
    %v1838 = vpack.c.b16 %v1103, %v1096
    %v1839 = vpack.c.b16 %v1104, %v1097
    %v1840 = vpack.c.b16 %v1105, %v1098
    %v1841 = vpack.c.b16 %v1106, %v1099
    %v1842 = vpack.c.b16 %v1114, %v1107
    %v1843 = vpack.c.b16 %v1115, %v1108
    %v1844 = vpack.c.b16 %v1116, %v1109
    %v1845 = vpack.c.b16 %v1117, %v1110
    %v1846 = vpack.c.b16 %v1118, %v1111
    %v1847 = vpack.c.b16 %v1119, %v1112
    %v1848 = vpack.c.b16 %v1120, %v1113
    %v1849 = vpack.c.b16 %v1128, %v1121
    %v1850 = vpack.c.b16 %v1129, %v1122
    %v1851 = vpack.c.b16 %v1130, %v1123
    %v1852 = vpack.c.b16 %v1131, %v1124
    %v1853 = vpack.c.b16 %v1132, %v1125
    %v1854 = vpack.c.b16 %v1133, %v1126
    %v1855 = vpack.c.b16 %v1134, %v1127
    %v1856 = vpack.c.b16 %v1142, %v1135
    %v1857 = vpack.c.b16 %v1143, %v1136
    %v1858 = vpack.c.b16 %v1144, %v1137
    %v1859 = vpack.c.b16 %v1145, %v1138
    %v1860 = vpack.c.b16 %v1146, %v1139
    %v1861 = vpack.c.b16 %v1147, %v1140
    %v1862 = vpack.c.b16 %v1148, %v1141
    %v1863 = vpack.c.b16 %v1156, %v1149
    %v1864 = vpack.c.b16 %v1157, %v1150
    %v1865 = vpack.c.b16 %v1158, %v1151
    %v1866 = vpack.c.b16 %v1159, %v1152
    %v1867 = vpack.c.b16 %v1160, %v1153
    %v1868 = vpack.c.b16 %v1161, %v1154
    %v1869 = vpack.c.b16 %v1162, %v1155
    %v1870 = vpack.c.b16 %v1170, %v1163
    %v1871 = vpack.c.b16 %v1171, %v1164
    %v1872 = vpack.c.b16 %v1172, %v1165
    %v1873 = vpack.c.b16 %v1173, %v1166
    %v1874 = vpack.c.b16 %v1174, %v1167
    %v1875 = vpack.c.b16 %v1175, %v1168
    %v1876 = vpack.c.b16 %v1176, %v1169
    %v1877 = vpack.c.b16 %v1184, %v1177
    %v1878 = vpack.c.b16 %v1185, %v1178
    %v1879 = vpack.c.b16 %v1186, %v1179
    %v1880 = vpack.c.b16 %v1187, %v1180
    %v1881 = vpack.c.b16 %v1188, %v1181
    %v1882 = vpack.c.b16 %v1189, %v1182
    %v1883 = vpack.c.b16 %v1190, %v1183
    %v1884 = vpack.c.b16 %v1198, %v1191
    %v1885 = vpack.c.b16 %v1199, %v1192
    %v1886 = vpack.c.b16 %v1200, %v1193
    %v1887 = vpack.c.b16 %v1201, %v1194
    %v1888 = vpack.c.b16 %v1202, %v1195
    %v1889 = vpack.c.b16 %v1203, %v1196
    %v1890 = vpack.c.b16 %v1204, %v1197
    %v1891 = vpack.c.b16 %v1212, %v1205
    %v1892 = vpack.c.b16 %v1213, %v1206
    %v1893 = vpack.c.b16 %v1214, %v1207
    %v1894 = vpack.c.b16 %v1215, %v1208
    %v1895 = vpack.c.b16 %v1216, %v1209
    %v1896 = vpack.c.b16 %v1217, %v1210
    %v1897 = vpack.c.b16 %v1218, %v1211
    %v1898 = vpack.c.b16 %v1226, %v1219
    %v1899 = vpack.c.b16 %v1227, %v1220
    %v1900 = vpack.c.b16 %v1228, %v1221
    %v1901 = vpack.c.b16 %v1229, %v1222
    %v1902 = vpack.c.b16 %v1230, %v1223
    %v1903 = vpack.c.b16 %v1231, %v1224
    %v1904 = vpack.c.b16 %v1232, %v1225
    %v1905 = vpack.c.b16 %v1240, %v1233
    %v1906 = vpack.c.b16 %v1241, %v1234
    %v1907 = vpack.c.b16 %v1242, %v1235
    %v1908 = vpack.c.b16 %v1243, %v1236
    %v1909 = vpack.c.b16 %v1244, %v1237
    %v1910 = vpack.c.b16 %v1245, %v1238
    %v1911 = vpack.c.b16 %v1246, %v1239
    %v1912 = vpack.c.b16 %v1254, %v1247
    %v1913 = vpack.c.b16 %v1255, %v1248
    %v1914 = vpack.c.b16 %v1256, %v1249
    %v1915 = vpack.c.b16 %v1257, %v1250
    %v1916 = vpack.c.b16 %v1258, %v1251
    %v1917 = vpack.c.b16 %v1259, %v1252
    %v1918 = vpack.c.b16 %v1260, %v1253
    %v1919 = vpack.c.b16 %v1268, %v1261
    %v1920 = vpack.c.b16 %v1269, %v1262
    %v1921 = vpack.c.b16 %v1270, %v1263
    %v1922 = vpack.c.b16 %v1271, %v1264
    %v1923 = vpack.c.b16 %v1272, %v1265
    %v1924 = vpack.c.b16 %v1273, %v1266
    %v1925 = vpack.c.b16 %v1274, %v1267
    %v1926 = vpack.c.b16 %v1282, %v1275
    %v1927 = vpack.c.b16 %v1283, %v1276
    %v1928 = vpack.c.b16 %v1284, %v1277
    %v1929 = vpack.c.b16 %v1285, %v1278
    %v1930 = vpack.c.b16 %v1286, %v1279
    %v1931 = vpack.c.b16 %v1287, %v1280
    %v1932 = vpack.c.b16 %v1288, %v1281
    %v1933 = vpack.c.b16 %v1296, %v1289
    %v1934 = vpack.c.b16 %v1297, %v1290
    %v1935 = vpack.c.b16 %v1298, %v1291
    %v1936 = vpack.c.b16 %v1299, %v1292
    %v1937 = vpack.c.b16 %v1300, %v1293
    %v1938 = vpack.c.b16 %v1301, %v1294
    %v1939 = vpack.c.b16 %v1302, %v1295
    %v1940 = vpack.c.b16 %v1310, %v1303
    %v1941 = vpack.c.b16 %v1311, %v1304
    %v1942 = vpack.c.b16 %v1312, %v1305
    %v1943 = vpack.c.b16 %v1313, %v1306
    %v1944 = vpack.c.b16 %v1314, %v1307
    %v1945 = vpack.c.b16 %v1315, %v1308
    %v1946 = vpack.c.b16 %v1316, %v1309
    %v1947 = vpack.c.b16 %v1324, %v1317
    %v1948 = vpack.c.b16 %v1325, %v1318
    %v1949 = vpack.c.b16 %v1326, %v1319
    %v1950 = vpack.c.b16 %v1327, %v1320
    %v1951 = vpack.c.b16 %v1328, %v1321
    %v1952 = vpack.c.b16 %v1329, %v1322
    %v1953 = vpack.c.b16 %v1330, %v1323
    %v1954 = vpack.c.b16 %v1338, %v1331
    %v1955 = vpack.c.b16 %v1339, %v1332
    %v1956 = vpack.c.b16 %v1340, %v1333
    %v1957 = vpack.c.b16 %v1341, %v1334
    %v1958 = vpack.c.b16 %v1342, %v1335
    %v1959 = vpack.c.b16 %v1343, %v1336
    %v1960 = vpack.c.b16 %v1344, %v1337
    %v1961 = vpack.c.b16 %v1352, %v1345
    %v1962 = vpack.c.b16 %v1353, %v1346
    %v1963 = vpack.c.b16 %v1354, %v1347
    %v1964 = vpack.c.b16 %v1355, %v1348
    %v1965 = vpack.c.b16 %v1356, %v1349
    %v1966 = vpack.c.b16 %v1357, %v1350
    %v1967 = vpack.c.b16 %v1358, %v1351
    %v1968 = vpack.c.b16 %v1366, %v1359
    %v1969 = vpack.c.b16 %v1367, %v1360
    %v1970 = vpack.c.b16 %v1368, %v1361
    %v1971 = vpack.c.b16 %v1369, %v1362
    %v1972 = vpack.c.b16 %v1370, %v1363
    %v1973 = vpack.c.b16 %v1371, %v1364
    %v1974 = vpack.c.b16 %v1372, %v1365
    %v1975 = vpack.c.b16 %v1380, %v1373
    %v1976 = vpack.c.b16 %v1381, %v1374
    %v1977 = vpack.c.b16 %v1382, %v1375
    %v1978 = vpack.c.b16 %v1383, %v1376
    %v1979 = vpack.c.b16 %v1384, %v1377
    %v1980 = vpack.c.b16 %v1385, %v1378
    %v1981 = vpack.c.b16 %v1386, %v1379
    %v1982 = vpack.c.b16 %v1394, %v1387
    %v1983 = vpack.c.b16 %v1395, %v1388
    %v1984 = vpack.c.b16 %v1396, %v1389
    %v1985 = vpack.c.b16 %v1397, %v1390
    %v1986 = vpack.c.b16 %v1398, %v1391
    %v1987 = vpack.c.b16 %v1399, %v1392
    %v1988 = vpack.c.b16 %v1400, %v1393
    %v1989 = vpack.c.b16 %v1408, %v1401
    %v1990 = vpack.c.b16 %v1409, %v1402
    %v1991 = vpack.c.b16 %v1410, %v1403
    %v1992 = vpack.c.b16 %v1411, %v1404
    %v1993 = vpack.c.b16 %v1412, %v1405
    %v1994 = vpack.c.b16 %v1413, %v1406
    %v1995 = vpack.c.b16 %v1414, %v1407
    %v1996 = vpack.c.b16 %v1422, %v1415
    %v1997 = vpack.c.b16 %v1423, %v1416
    %v1998 = vpack.c.b16 %v1424, %v1417
    %v1999 = vpack.c.b16 %v1425, %v1418
    %v2000 = vpack.c.b16 %v1426, %v1419
    %v2001 = vpack.c.b16 %v1427, %v1420
    %v2002 = vpack.c.b16 %v1428, %v1421
    %v2003 = vpack.c.b16 %v1436, %v1429
    %v2004 = vpack.c.b16 %v1437, %v1430
    %v2005 = vpack.c.b16 %v1438, %v1431
    %v2006 = vpack.c.b16 %v1439, %v1432
    %v2007 = vpack.c.b16 %v1440, %v1433
    %v2008 = vpack.c.b16 %v1441, %v1434
    %v2009 = vpack.c.b16 %v1442, %v1435
    %v2010 = vpack.c.b16 %v1450, %v1443
    %v2011 = vpack.c.b16 %v1451, %v1444
    %v2012 = vpack.c.b16 %v1452, %v1445
    %v2013 = vpack.c.b16 %v1453, %v1446
    %v2014 = vpack.c.b16 %v1454, %v1447
    %v2015 = vpack.c.b16 %v1455, %v1448
    %v2016 = vpack.c.b16 %v1456, %v1449
    %v2017 = vpack.c.b16 %v1464, %v1457
    %v2018 = vpack.c.b16 %v1465, %v1458
    %v2019 = vpack.c.b16 %v1466, %v1459
    %v2020 = vpack.c.b16 %v1467, %v1460
    %v2021 = vpack.c.b16 %v1468, %v1461
    %v2022 = vpack.c.b16 %v1469, %v1462
    %v2023 = vpack.c.b16 %v1470, %v1463
    %v2024 = vpack.c.b16 %v1478, %v1471
    %v2025 = vpack.c.b16 %v1479, %v1472
    %v2026 = vpack.c.b16 %v1480, %v1473
    %v2027 = vpack.c.b16 %v1481, %v1474
    %v2028 = vpack.c.b16 %v1482, %v1475
    %v2029 = vpack.c.b16 %v1483, %v1476
    %v2030 = vpack.c.b16 %v1484, %v1477
    %v2031 = vpack.c.b16 %v1492, %v1485
    %v2032 = vpack.c.b16 %v1493, %v1486
    %v2033 = vpack.c.b16 %v1494, %v1487
    %v2034 = vpack.c.b16 %v1495, %v1488
    %v2035 = vpack.c.b16 %v1496, %v1489
    %v2036 = vpack.c.b16 %v1497, %v1490
    %v2037 = vpack.c.b16 %v1498, %v1491
    %v2038 = vpack.c.b16 %v1506, %v1499
    %v2039 = vpack.c.b16 %v1507, %v1500
    %v2040 = vpack.c.b16 %v1508, %v1501
    %v2041 = vpack.c.b16 %v1509, %v1502
    %v2042 = vpack.c.b16 %v1510, %v1503
    %v2043 = vpack.c.b16 %v1511, %v1504
    %v2044 = vpack.c.b16 %v1512, %v1505
    %v2045 = vpack.c.b16 %v1520, %v1513
    %v2046 = vpack.c.b16 %v1521, %v1514
    %v2047 = vpack.c.b16 %v1522, %v1515
    %v2048 = vpack.c.b16 %v1523, %v1516
    %v2049 = vpack.c.b16 %v1524, %v1517
    %v2050 = vpack.c.b16 %v1525, %v1518
    %v2051 = vpack.c.b16 %v1526, %v1519
    %v2052 = vpack.c.b16 %v1534, %v1527
    %v2053 = vpack.c.b16 %v1535, %v1528
    %v2054 = vpack.c.b16 %v1536, %v1529
    %v2055 = vpack.c.b16 %v1537, %v1530
    %v2056 = vpack.c.b16 %v1538, %v1531
    %v2057 = vpack.c.b16 %v1539, %v1532
    %v2058 = vpack.c.b16 %v1540, %v1533
    %v2059 = vpack.c.b16 %v1548, %v1541
    %v2060 = vpack.c.b16 %v1549, %v1542
    %v2061 = vpack.c.b16 %v1550, %v1543
    %v2062 = vpack.c.b16 %v1551, %v1544
    %v2063 = vpack.c.b16 %v1552, %v1545
    %v2064 = vpack.c.b16 %v1553, %v1546
    %v2065 = vpack.c.b16 %v1554, %v1547
    %v2066 = vpack.c.b16 %v1562, %v1555
    %v2067 = vpack.c.b16 %v1563, %v1556
    %v2068 = vpack.c.b16 %v1564, %v1557
    %v2069 = vpack.c.b16 %v1565, %v1558
    %v2070 = vpack.c.b16 %v1566, %v1559
    %v2071 = vpack.c.b16 %v1567, %v1560
    %v2072 = vpack.c.b16 %v1568, %v1561
    %v2073 = vpack.c.b16 %v1576, %v1569
    %v2074 = vpack.c.b16 %v1577, %v1570
    %v2075 = vpack.c.b16 %v1578, %v1571
    %v2076 = vpack.c.b16 %v1579, %v1572
    %v2077 = vpack.c.b16 %v1580, %v1573
    %v2078 = vpack.c.b16 %v1581, %v1574
    %v2079 = vpack.c.b16 %v1582, %v1575
    %v2080 = vpack.c.b16 %v1590, %v1583
    %v2081 = vpack.c.b16 %v1591, %v1584
    %v2082 = vpack.c.b16 %v1592, %v1585
    %v2083 = vpack.c.b16 %v1593, %v1586
    %v2084 = vpack.c.b16 %v1594, %v1587
    %v2085 = vpack.c.b16 %v1595, %v1588
    %v2086 = vpack.c.b16 %v1596, %v1589
    %v2087 = vpack.c.b16 %v1604, %v1597
    %v2088 = vpack.c.b16 %v1605, %v1598
    %v2089 = vpack.c.b16 %v1606, %v1599
    %v2090 = vpack.c.b16 %v1607, %v1600
    %v2091 = vpack.c.b16 %v1608, %v1601
    %v2092 = vpack.c.b16 %v1609, %v1602
    %v2093 = vpack.c.b16 %v1610, %v1603
    %v2094 = vpack.c.b16 %v1618, %v1611
    %v2095 = vpack.c.b16 %v1619, %v1612
    %v2096 = vpack.c.b16 %v1620, %v1613
    %v2097 = vpack.c.b16 %v1621, %v1614
    %v2098 = vpack.c.b16 %v1622, %v1615
    %v2099 = vpack.c.b16 %v1623, %v1616
    %v2100 = vpack.c.b16 %v1624, %v1617
    %v2101 = vpack.c.b16 %v1632, %v1625
    %v2102 = vpack.c.b16 %v1633, %v1626
    %v2103 = vpack.c.b16 %v1634, %v1627
    %v2104 = vpack.c.b16 %v1635, %v1628
    %v2105 = vpack.c.b16 %v1636, %v1629
    %v2106 = vpack.c.b16 %v1637, %v1630
    %v2107 = vpack.c.b16 %v1638, %v1631
    %v2108 = vpack.c.b16 %v1646, %v1639
    %v2109 = vpack.c.b16 %v1647, %v1640
    %v2110 = vpack.c.b16 %v1648, %v1641
    %v2111 = vpack.c.b16 %v1649, %v1642
    %v2112 = vpack.c.b16 %v1650, %v1643
    %v2113 = vpack.c.b16 %v1651, %v1644
    %v2114 = vpack.c.b16 %v1652, %v1645
    %v2115 = vpack.c.b16 %v1660, %v1653
    %v2116 = vpack.c.b16 %v1661, %v1654
    %v2117 = vpack.c.b16 %v1662, %v1655
    %v2118 = vpack.c.b16 %v1663, %v1656
    %v2119 = vpack.c.b16 %v1664, %v1657
    %v2120 = vpack.c.b16 %v1665, %v1658
    %v2121 = vpack.c.b16 %v1666, %v1659
    %v2122 = vpack.c.b16 %v1674, %v1667
    %v2123 = vpack.c.b16 %v1675, %v1668
    %v2124 = vpack.c.b16 %v1676, %v1669
    %v2125 = vpack.c.b16 %v1677, %v1670
    %v2126 = vpack.c.b16 %v1678, %v1671
    %v2127 = vpack.c.b16 %v1679, %v1672
    %v2128 = vpack.c.b16 %v1680, %v1673
    %v2129 = vpack.c.b16 %v1688, %v1681
    %v2130 = vpack.c.b16 %v1689, %v1682
    %v2131 = vpack.c.b16 %v1690, %v1683
    %v2132 = vpack.c.b16 %v1691, %v1684
    %v2133 = vpack.c.b16 %v1692, %v1685
    %v2134 = vpack.c.b16 %v1693, %v1686
    %v2135 = vpack.c.b16 %v1694, %v1687
    %v2136 = vpack.c.b16 %v1702, %v1695
    %v2137 = vpack.c.b16 %v1703, %v1696
    %v2138 = vpack.c.b16 %v1704, %v1697
    %v2139 = vpack.c.b16 %v1705, %v1698
    %v2140 = vpack.c.b16 %v1706, %v1699
    %v2141 = vpack.c.b16 %v1707, %v1700
    %v2142 = vpack.c.b16 %v1708, %v1701
    %v2143 = vpack.c.b16 %v1716, %v1709
    %v2144 = vpack.c.b16 %v1717, %v1710
    %v2145 = vpack.c.b16 %v1718, %v1711
    %v2146 = vpack.c.b16 %v1719, %v1712
    %v2147 = vpack.c.b16 %v1720, %v1713
    %v2148 = vpack.c.b16 %v1721, %v1714
    %v2149 = vpack.c.b16 %v1722, %v1715
    %v2150 = vpack.c.b16 %v1730, %v1723
    %v2151 = vpack.c.b16 %v1731, %v1724
    %v2152 = vpack.c.b16 %v1732, %v1725
    %v2153 = vpack.c.b16 %v1733, %v1726
    %v2154 = vpack.c.b16 %v1734, %v1727
    %v2155 = vpack.c.b16 %v1735, %v1728
    %v2156 = vpack.c.b16 %v1736, %v1729
    %v2157 = vpack.c.b16 %v1744, %v1737
    %v2158 = vpack.c.b16 %v1745, %v1738
    %v2159 = vpack.c.b16 %v1746, %v1739
    %v2160 = vpack.c.b16 %v1747, %v1740
    %v2161 = vpack.c.b16 %v1748, %v1741
    %v2162 = vpack.c.b16 %v1749, %v1742
    %v2163 = vpack.c.b16 %v1750, %v1743
    %v2164 = vpack.c.b16 %v1758, %v1751
    %v2165 = vpack.c.b16 %v1759, %v1752
    %v2166 = vpack.c.b16 %v1760, %v1753
    %v2167 = vpack.c.b16 %v1761, %v1754
    %v2168 = vpack.c.b16 %v1762, %v1755
    %v2169 = vpack.c.b16 %v1763, %v1756
    %v2170 = vpack.c.b16 %v1764, %v1757
    %v2171 = vpack.c.b16 %v1772, %v1765
    %v2172 = vpack.c.b16 %v1773, %v1766
    %v2173 = vpack.c.b16 %v1774, %v1767
    %v2174 = vpack.c.b16 %v1775, %v1768
    %v2175 = vpack.c.b16 %v1776, %v1769
    %v2176 = vpack.c.b16 %v1777, %v1770
    %v2177 = vpack.c.b16 %v1778, %v1771
    %v2178 = vpack.c.b16 %v1786, %v1779
    %v2179 = vpack.c.b16 %v1787, %v1780
    %v2180 = vpack.c.b16 %v1788, %v1781
    %v2181 = vpack.c.b16 %v1789, %v1782
    %v2182 = vpack.c.b16 %v1790, %v1783
    %v2183 = vpack.c.b16 %v1791, %v1784
    %v2184 = vpack.c.b16 %v1792, %v1785
    %2577 = vmatpush.bf16.msra.mxu0 %v1842
    %2578 = vmatpush.bf16.msra.mxu0 %v1835
    %2579 = vmatpush.bf16.msra.mxu0 %v1828
    %2580 = vmatpush.bf16.msra.mxu0 %v1821
    %2581 = vmatpush.bf16.msra.mxu0 %v1814
    %2582 = vmatpush.bf16.msra.mxu0 %v1807
    %2583 = vmatpush.bf16.msra.mxu0 %v1800
    %2584 = vmatpush.bf16.msra.mxu0 %v1793
    %2585 = vmatmul.bf16.gmra.mxu0 %v88
    %v2586 = vpop.f32.mrf.mxu0
    %v2587 = vadd.f32 %v547, %v2586
    %v2588 = vpop.f32.mrf.mxu0
    %2589 = vdwg.mxu0
    %2590 = vmatpush.bf16.msra.mxu0 %v1898
    %2591 = vmatpush.bf16.msra.mxu0 %v1891
    %2592 = vmatpush.bf16.msra.mxu0 %v1884
    %2593 = vmatpush.bf16.msra.mxu0 %v1877
    %2594 = vmatpush.bf16.msra.mxu0 %v1870
    %2595 = vmatpush.bf16.msra.mxu0 %v1863
    %2596 = vmatpush.bf16.msra.mxu0 %v1856
    %2597 = vmatpush.bf16.msra.mxu0 %v1849
    %2598 = vmatmul.bf16.gmra.mxu0 %v89
    %v2599 = vpop.f32.mrf.mxu0
    %v2600 = vadd.f32 %v2587, %v2599
    %v2601 = vpop.f32.mrf.mxu0
    %2602 = vdwg.mxu0
    %2603 = vmatpush.bf16.msra.mxu0 %v1954
    %2604 = vmatpush.bf16.msra.mxu0 %v1947
    %2605 = vmatpush.bf16.msra.mxu0 %v1940
    %2606 = vmatpush.bf16.msra.mxu0 %v1933
    %2607 = vmatpush.bf16.msra.mxu0 %v1926
    %2608 = vmatpush.bf16.msra.mxu0 %v1919
    %2609 = vmatpush.bf16.msra.mxu0 %v1912
    %2610 = vmatpush.bf16.msra.mxu0 %v1905
    %2611 = vmatmul.bf16.gmra.mxu0 %v90
    %v2612 = vpop.f32.mrf.mxu0
    %v2613 = vadd.f32 %v2600, %v2612
    %v2614 = vpop.f32.mrf.mxu0
    %2615 = vdwg.mxu0
    %2616 = vmatpush.bf16.msra.mxu0 %v2010
    %2617 = vmatpush.bf16.msra.mxu0 %v2003
    %2618 = vmatpush.bf16.msra.mxu0 %v1996
    %2619 = vmatpush.bf16.msra.mxu0 %v1989
    %2620 = vmatpush.bf16.msra.mxu0 %v1982
    %2621 = vmatpush.bf16.msra.mxu0 %v1975
    %2622 = vmatpush.bf16.msra.mxu0 %v1968
    %2623 = vmatpush.bf16.msra.mxu0 %v1961
    %2624 = vmatmul.bf16.gmra.mxu0 %v91
    %v2625 = vpop.f32.mrf.mxu0
    %v2626 = vadd.f32 %v2613, %v2625
    %v2627 = vpop.f32.mrf.mxu0
    %2628 = vdwg.mxu0
    %2629 = vmatpush.bf16.msra.mxu0 %v2066
    %2630 = vmatpush.bf16.msra.mxu0 %v2059
    %2631 = vmatpush.bf16.msra.mxu0 %v2052
    %2632 = vmatpush.bf16.msra.mxu0 %v2045
    %2633 = vmatpush.bf16.msra.mxu0 %v2038
    %2634 = vmatpush.bf16.msra.mxu0 %v2031
    %2635 = vmatpush.bf16.msra.mxu0 %v2024
    %2636 = vmatpush.bf16.msra.mxu0 %v2017
    %2637 = vmatmul.bf16.gmra.mxu0 %v92
    %v2638 = vpop.f32.mrf.mxu0
    %v2639 = vadd.f32 %v2626, %v2638
    %v2640 = vpop.f32.mrf.mxu0
    %2641 = vdwg.mxu0
    %2642 = vmatpush.bf16.msra.mxu0 %v2122
    %2643 = vmatpush.bf16.msra.mxu0 %v2115
    %2644 = vmatpush.bf16.msra.mxu0 %v2108
    %2645 = vmatpush.bf16.msra.mxu0 %v2101
    %2646 = vmatpush.bf16.msra.mxu0 %v2094
    %2647 = vmatpush.bf16.msra.mxu0 %v2087
    %2648 = vmatpush.bf16.msra.mxu0 %v2080
    %2649 = vmatpush.bf16.msra.mxu0 %v2073
    %2650 = vmatmul.bf16.gmra.mxu0 %v93
    %v2651 = vpop.f32.mrf.mxu0
    %v2652 = vadd.f32 %v2639, %v2651
    %v2653 = vpop.f32.mrf.mxu0
    %2654 = vdwg.mxu0
    %2655 = vmatpush.bf16.msra.mxu0 %v2178
    %2656 = vmatpush.bf16.msra.mxu0 %v2171
    %2657 = vmatpush.bf16.msra.mxu0 %v2164
    %2658 = vmatpush.bf16.msra.mxu0 %v2157
    %2659 = vmatpush.bf16.msra.mxu0 %v2150
    %2660 = vmatpush.bf16.msra.mxu0 %v2143
    %2661 = vmatpush.bf16.msra.mxu0 %v2136
    %2662 = vmatpush.bf16.msra.mxu0 %v2129
    %2663 = vmatmul.bf16.gmra.mxu0 %v94
    %v2664 = vpop.f32.mrf.mxu0
    %v2665 = vadd.f32 %v2652, %v2664
    %v2666 = vpop.f32.mrf.mxu0
    %2667 = vdwg.mxu0
    %2668 = vmatpush.bf16.msra.mxu0 %v1843
    %2669 = vmatpush.bf16.msra.mxu0 %v1836
    %2670 = vmatpush.bf16.msra.mxu0 %v1829
    %2671 = vmatpush.bf16.msra.mxu0 %v1822
    %2672 = vmatpush.bf16.msra.mxu0 %v1815
    %2673 = vmatpush.bf16.msra.mxu0 %v1808
    %2674 = vmatpush.bf16.msra.mxu0 %v1801
    %2675 = vmatpush.bf16.msra.mxu0 %v1794
    %2676 = vmatmul.bf16.gmra.mxu0 %v88
    %v2677 = vpop.f32.mrf.mxu0
    %v2678 = vadd.f32 %v548, %v2677
    %v2679 = vpop.f32.mrf.mxu0
    %2680 = vdwg.mxu0
    %2681 = vmatpush.bf16.msra.mxu0 %v1899
    %2682 = vmatpush.bf16.msra.mxu0 %v1892
    %2683 = vmatpush.bf16.msra.mxu0 %v1885
    %2684 = vmatpush.bf16.msra.mxu0 %v1878
    %2685 = vmatpush.bf16.msra.mxu0 %v1871
    %2686 = vmatpush.bf16.msra.mxu0 %v1864
    %2687 = vmatpush.bf16.msra.mxu0 %v1857
    %2688 = vmatpush.bf16.msra.mxu0 %v1850
    %2689 = vmatmul.bf16.gmra.mxu0 %v89
    %v2690 = vpop.f32.mrf.mxu0
    %v2691 = vadd.f32 %v2678, %v2690
    %v2692 = vpop.f32.mrf.mxu0
    %2693 = vdwg.mxu0
    %2694 = vmatpush.bf16.msra.mxu0 %v1955
    %2695 = vmatpush.bf16.msra.mxu0 %v1948
    %2696 = vmatpush.bf16.msra.mxu0 %v1941
    %2697 = vmatpush.bf16.msra.mxu0 %v1934
    %2698 = vmatpush.bf16.msra.mxu0 %v1927
    %2699 = vmatpush.bf16.msra.mxu0 %v1920
    %2700 = vmatpush.bf16.msra.mxu0 %v1913
    %2701 = vmatpush.bf16.msra.mxu0 %v1906
    %2702 = vmatmul.bf16.gmra.mxu0 %v90
    %v2703 = vpop.f32.mrf.mxu0
    %v2704 = vadd.f32 %v2691, %v2703
    %v2705 = vpop.f32.mrf.mxu0
    %2706 = vdwg.mxu0
    %2707 = vmatpush.bf16.msra.mxu0 %v2011
    %2708 = vmatpush.bf16.msra.mxu0 %v2004
    %2709 = vmatpush.bf16.msra.mxu0 %v1997
    %2710 = vmatpush.bf16.msra.mxu0 %v1990
    %2711 = vmatpush.bf16.msra.mxu0 %v1983
    %2712 = vmatpush.bf16.msra.mxu0 %v1976
    %2713 = vmatpush.bf16.msra.mxu0 %v1969
    %2714 = vmatpush.bf16.msra.mxu0 %v1962
    %2715 = vmatmul.bf16.gmra.mxu0 %v91
    %v2716 = vpop.f32.mrf.mxu0
    %v2717 = vadd.f32 %v2704, %v2716
    %v2718 = vpop.f32.mrf.mxu0
    %2719 = vdwg.mxu0
    %2720 = vmatpush.bf16.msra.mxu0 %v2067
    %2721 = vmatpush.bf16.msra.mxu0 %v2060
    %2722 = vmatpush.bf16.msra.mxu0 %v2053
    %2723 = vmatpush.bf16.msra.mxu0 %v2046
    %2724 = vmatpush.bf16.msra.mxu0 %v2039
    %2725 = vmatpush.bf16.msra.mxu0 %v2032
    %2726 = vmatpush.bf16.msra.mxu0 %v2025
    %2727 = vmatpush.bf16.msra.mxu0 %v2018
    %2728 = vmatmul.bf16.gmra.mxu0 %v92
    %v2729 = vpop.f32.mrf.mxu0
    %v2730 = vadd.f32 %v2717, %v2729
    %v2731 = vpop.f32.mrf.mxu0
    %2732 = vdwg.mxu0
    %2733 = vmatpush.bf16.msra.mxu0 %v2123
    %2734 = vmatpush.bf16.msra.mxu0 %v2116
    %2735 = vmatpush.bf16.msra.mxu0 %v2109
    %2736 = vmatpush.bf16.msra.mxu0 %v2102
    %2737 = vmatpush.bf16.msra.mxu0 %v2095
    %2738 = vmatpush.bf16.msra.mxu0 %v2088
    %2739 = vmatpush.bf16.msra.mxu0 %v2081
    %2740 = vmatpush.bf16.msra.mxu0 %v2074
    %2741 = vmatmul.bf16.gmra.mxu0 %v93
    %v2742 = vpop.f32.mrf.mxu0
    %v2743 = vadd.f32 %v2730, %v2742
    %v2744 = vpop.f32.mrf.mxu0
    %2745 = vdwg.mxu0
    %2746 = vmatpush.bf16.msra.mxu0 %v2179
    %2747 = vmatpush.bf16.msra.mxu0 %v2172
    %2748 = vmatpush.bf16.msra.mxu0 %v2165
    %2749 = vmatpush.bf16.msra.mxu0 %v2158
    %2750 = vmatpush.bf16.msra.mxu0 %v2151
    %2751 = vmatpush.bf16.msra.mxu0 %v2144
    %2752 = vmatpush.bf16.msra.mxu0 %v2137
    %2753 = vmatpush.bf16.msra.mxu0 %v2130
    %2754 = vmatmul.bf16.gmra.mxu0 %v94
    %v2755 = vpop.f32.mrf.mxu0
    %v2756 = vadd.f32 %v2743, %v2755
    %v2757 = vpop.f32.mrf.mxu0
    %2758 = vdwg.mxu0
    %2759 = vmatpush.bf16.msra.mxu0 %v1844
    %2760 = vmatpush.bf16.msra.mxu0 %v1837
    %2761 = vmatpush.bf16.msra.mxu0 %v1830
    %2762 = vmatpush.bf16.msra.mxu0 %v1823
    %2763 = vmatpush.bf16.msra.mxu0 %v1816
    %2764 = vmatpush.bf16.msra.mxu0 %v1809
    %2765 = vmatpush.bf16.msra.mxu0 %v1802
    %2766 = vmatpush.bf16.msra.mxu0 %v1795
    %2767 = vmatmul.bf16.gmra.mxu0 %v88
    %v2768 = vpop.f32.mrf.mxu0
    %v2769 = vadd.f32 %v549, %v2768
    %v2770 = vpop.f32.mrf.mxu0
    %2771 = vdwg.mxu0
    %2772 = vmatpush.bf16.msra.mxu0 %v1900
    %2773 = vmatpush.bf16.msra.mxu0 %v1893
    %2774 = vmatpush.bf16.msra.mxu0 %v1886
    %2775 = vmatpush.bf16.msra.mxu0 %v1879
    %2776 = vmatpush.bf16.msra.mxu0 %v1872
    %2777 = vmatpush.bf16.msra.mxu0 %v1865
    %2778 = vmatpush.bf16.msra.mxu0 %v1858
    %2779 = vmatpush.bf16.msra.mxu0 %v1851
    %2780 = vmatmul.bf16.gmra.mxu0 %v89
    %v2781 = vpop.f32.mrf.mxu0
    %v2782 = vadd.f32 %v2769, %v2781
    %v2783 = vpop.f32.mrf.mxu0
    %2784 = vdwg.mxu0
    %2785 = vmatpush.bf16.msra.mxu0 %v1956
    %2786 = vmatpush.bf16.msra.mxu0 %v1949
    %2787 = vmatpush.bf16.msra.mxu0 %v1942
    %2788 = vmatpush.bf16.msra.mxu0 %v1935
    %2789 = vmatpush.bf16.msra.mxu0 %v1928
    %2790 = vmatpush.bf16.msra.mxu0 %v1921
    %2791 = vmatpush.bf16.msra.mxu0 %v1914
    %2792 = vmatpush.bf16.msra.mxu0 %v1907
    %2793 = vmatmul.bf16.gmra.mxu0 %v90
    %v2794 = vpop.f32.mrf.mxu0
    %v2795 = vadd.f32 %v2782, %v2794
    %v2796 = vpop.f32.mrf.mxu0
    %2797 = vdwg.mxu0
    %2798 = vmatpush.bf16.msra.mxu0 %v2012
    %2799 = vmatpush.bf16.msra.mxu0 %v2005
    %2800 = vmatpush.bf16.msra.mxu0 %v1998
    %2801 = vmatpush.bf16.msra.mxu0 %v1991
    %2802 = vmatpush.bf16.msra.mxu0 %v1984
    %2803 = vmatpush.bf16.msra.mxu0 %v1977
    %2804 = vmatpush.bf16.msra.mxu0 %v1970
    %2805 = vmatpush.bf16.msra.mxu0 %v1963
    %2806 = vmatmul.bf16.gmra.mxu0 %v91
    %v2807 = vpop.f32.mrf.mxu0
    %v2808 = vadd.f32 %v2795, %v2807
    %v2809 = vpop.f32.mrf.mxu0
    %2810 = vdwg.mxu0
    %2811 = vmatpush.bf16.msra.mxu0 %v2068
    %2812 = vmatpush.bf16.msra.mxu0 %v2061
    %2813 = vmatpush.bf16.msra.mxu0 %v2054
    %2814 = vmatpush.bf16.msra.mxu0 %v2047
    %2815 = vmatpush.bf16.msra.mxu0 %v2040
    %2816 = vmatpush.bf16.msra.mxu0 %v2033
    %2817 = vmatpush.bf16.msra.mxu0 %v2026
    %2818 = vmatpush.bf16.msra.mxu0 %v2019
    %2819 = vmatmul.bf16.gmra.mxu0 %v92
    %v2820 = vpop.f32.mrf.mxu0
    %v2821 = vadd.f32 %v2808, %v2820
    %v2822 = vpop.f32.mrf.mxu0
    %2823 = vdwg.mxu0
    %2824 = vmatpush.bf16.msra.mxu0 %v2124
    %2825 = vmatpush.bf16.msra.mxu0 %v2117
    %2826 = vmatpush.bf16.msra.mxu0 %v2110
    %2827 = vmatpush.bf16.msra.mxu0 %v2103
    %2828 = vmatpush.bf16.msra.mxu0 %v2096
    %2829 = vmatpush.bf16.msra.mxu0 %v2089
    %2830 = vmatpush.bf16.msra.mxu0 %v2082
    %2831 = vmatpush.bf16.msra.mxu0 %v2075
    %2832 = vmatmul.bf16.gmra.mxu0 %v93
    %v2833 = vpop.f32.mrf.mxu0
    %v2834 = vadd.f32 %v2821, %v2833
    %v2835 = vpop.f32.mrf.mxu0
    %2836 = vdwg.mxu0
    %2837 = vmatpush.bf16.msra.mxu0 %v2180
    %2838 = vmatpush.bf16.msra.mxu0 %v2173
    %2839 = vmatpush.bf16.msra.mxu0 %v2166
    %2840 = vmatpush.bf16.msra.mxu0 %v2159
    %2841 = vmatpush.bf16.msra.mxu0 %v2152
    %2842 = vmatpush.bf16.msra.mxu0 %v2145
    %2843 = vmatpush.bf16.msra.mxu0 %v2138
    %2844 = vmatpush.bf16.msra.mxu0 %v2131
    %2845 = vmatmul.bf16.gmra.mxu0 %v94
    %v2846 = vpop.f32.mrf.mxu0
    %v2847 = vadd.f32 %v2834, %v2846
    %v2848 = vpop.f32.mrf.mxu0
    %2849 = vdwg.mxu0
    %2850 = vmatpush.bf16.msra.mxu0 %v1845
    %2851 = vmatpush.bf16.msra.mxu0 %v1838
    %2852 = vmatpush.bf16.msra.mxu0 %v1831
    %2853 = vmatpush.bf16.msra.mxu0 %v1824
    %2854 = vmatpush.bf16.msra.mxu0 %v1817
    %2855 = vmatpush.bf16.msra.mxu0 %v1810
    %2856 = vmatpush.bf16.msra.mxu0 %v1803
    %2857 = vmatpush.bf16.msra.mxu0 %v1796
    %2858 = vmatmul.bf16.gmra.mxu0 %v88
    %v2859 = vpop.f32.mrf.mxu0
    %v2860 = vadd.f32 %v550, %v2859
    %v2861 = vpop.f32.mrf.mxu0
    %2862 = vdwg.mxu0
    %2863 = vmatpush.bf16.msra.mxu0 %v1901
    %2864 = vmatpush.bf16.msra.mxu0 %v1894
    %2865 = vmatpush.bf16.msra.mxu0 %v1887
    %2866 = vmatpush.bf16.msra.mxu0 %v1880
    %2867 = vmatpush.bf16.msra.mxu0 %v1873
    %2868 = vmatpush.bf16.msra.mxu0 %v1866
    %2869 = vmatpush.bf16.msra.mxu0 %v1859
    %2870 = vmatpush.bf16.msra.mxu0 %v1852
    %2871 = vmatmul.bf16.gmra.mxu0 %v89
    %v2872 = vpop.f32.mrf.mxu0
    %v2873 = vadd.f32 %v2860, %v2872
    %v2874 = vpop.f32.mrf.mxu0
    %2875 = vdwg.mxu0
    %2876 = vmatpush.bf16.msra.mxu0 %v1957
    %2877 = vmatpush.bf16.msra.mxu0 %v1950
    %2878 = vmatpush.bf16.msra.mxu0 %v1943
    %2879 = vmatpush.bf16.msra.mxu0 %v1936
    %2880 = vmatpush.bf16.msra.mxu0 %v1929
    %2881 = vmatpush.bf16.msra.mxu0 %v1922
    %2882 = vmatpush.bf16.msra.mxu0 %v1915
    %2883 = vmatpush.bf16.msra.mxu0 %v1908
    %2884 = vmatmul.bf16.gmra.mxu0 %v90
    %v2885 = vpop.f32.mrf.mxu0
    %v2886 = vadd.f32 %v2873, %v2885
    %v2887 = vpop.f32.mrf.mxu0
    %2888 = vdwg.mxu0
    %2889 = vmatpush.bf16.msra.mxu0 %v2013
    %2890 = vmatpush.bf16.msra.mxu0 %v2006
    %2891 = vmatpush.bf16.msra.mxu0 %v1999
    %2892 = vmatpush.bf16.msra.mxu0 %v1992
    %2893 = vmatpush.bf16.msra.mxu0 %v1985
    %2894 = vmatpush.bf16.msra.mxu0 %v1978
    %2895 = vmatpush.bf16.msra.mxu0 %v1971
    %2896 = vmatpush.bf16.msra.mxu0 %v1964
    %2897 = vmatmul.bf16.gmra.mxu0 %v91
    %v2898 = vpop.f32.mrf.mxu0
    %v2899 = vadd.f32 %v2886, %v2898
    %v2900 = vpop.f32.mrf.mxu0
    %2901 = vdwg.mxu0
    %2902 = vmatpush.bf16.msra.mxu0 %v2069
    %2903 = vmatpush.bf16.msra.mxu0 %v2062
    %2904 = vmatpush.bf16.msra.mxu0 %v2055
    %2905 = vmatpush.bf16.msra.mxu0 %v2048
    %2906 = vmatpush.bf16.msra.mxu0 %v2041
    %2907 = vmatpush.bf16.msra.mxu0 %v2034
    %2908 = vmatpush.bf16.msra.mxu0 %v2027
    %2909 = vmatpush.bf16.msra.mxu0 %v2020
    %2910 = vmatmul.bf16.gmra.mxu0 %v92
    %v2911 = vpop.f32.mrf.mxu0
    %v2912 = vadd.f32 %v2899, %v2911
    %v2913 = vpop.f32.mrf.mxu0
    %2914 = vdwg.mxu0
    %2915 = vmatpush.bf16.msra.mxu0 %v2125
    %2916 = vmatpush.bf16.msra.mxu0 %v2118
    %2917 = vmatpush.bf16.msra.mxu0 %v2111
    %2918 = vmatpush.bf16.msra.mxu0 %v2104
    %2919 = vmatpush.bf16.msra.mxu0 %v2097
    %2920 = vmatpush.bf16.msra.mxu0 %v2090
    %2921 = vmatpush.bf16.msra.mxu0 %v2083
    %2922 = vmatpush.bf16.msra.mxu0 %v2076
    %2923 = vmatmul.bf16.gmra.mxu0 %v93
    %v2924 = vpop.f32.mrf.mxu0
    %v2925 = vadd.f32 %v2912, %v2924
    %v2926 = vpop.f32.mrf.mxu0
    %2927 = vdwg.mxu0
    %2928 = vmatpush.bf16.msra.mxu0 %v2181
    %2929 = vmatpush.bf16.msra.mxu0 %v2174
    %2930 = vmatpush.bf16.msra.mxu0 %v2167
    %2931 = vmatpush.bf16.msra.mxu0 %v2160
    %2932 = vmatpush.bf16.msra.mxu0 %v2153
    %2933 = vmatpush.bf16.msra.mxu0 %v2146
    %2934 = vmatpush.bf16.msra.mxu0 %v2139
    %2935 = vmatpush.bf16.msra.mxu0 %v2132
    %2936 = vmatmul.bf16.gmra.mxu0 %v94
    %v2937 = vpop.f32.mrf.mxu0
    %v2938 = vadd.f32 %v2925, %v2937
    %v2939 = vpop.f32.mrf.mxu0
    %2940 = vdwg.mxu0
    %2941 = vmatpush.bf16.msra.mxu0 %v1846
    %2942 = vmatpush.bf16.msra.mxu0 %v1839
    %2943 = vmatpush.bf16.msra.mxu0 %v1832
    %2944 = vmatpush.bf16.msra.mxu0 %v1825
    %2945 = vmatpush.bf16.msra.mxu0 %v1818
    %2946 = vmatpush.bf16.msra.mxu0 %v1811
    %2947 = vmatpush.bf16.msra.mxu0 %v1804
    %2948 = vmatpush.bf16.msra.mxu0 %v1797
    %2949 = vmatmul.bf16.gmra.mxu0 %v88
    %v2950 = vpop.f32.mrf.mxu0
    %v2951 = vadd.f32 %v551, %v2950
    %v2952 = vpop.f32.mrf.mxu0
    %2953 = vdwg.mxu0
    %2954 = vmatpush.bf16.msra.mxu0 %v1902
    %2955 = vmatpush.bf16.msra.mxu0 %v1895
    %2956 = vmatpush.bf16.msra.mxu0 %v1888
    %2957 = vmatpush.bf16.msra.mxu0 %v1881
    %2958 = vmatpush.bf16.msra.mxu0 %v1874
    %2959 = vmatpush.bf16.msra.mxu0 %v1867
    %2960 = vmatpush.bf16.msra.mxu0 %v1860
    %2961 = vmatpush.bf16.msra.mxu0 %v1853
    %2962 = vmatmul.bf16.gmra.mxu0 %v89
    %v2963 = vpop.f32.mrf.mxu0
    %v2964 = vadd.f32 %v2951, %v2963
    %v2965 = vpop.f32.mrf.mxu0
    %2966 = vdwg.mxu0
    %2967 = vmatpush.bf16.msra.mxu0 %v1958
    %2968 = vmatpush.bf16.msra.mxu0 %v1951
    %2969 = vmatpush.bf16.msra.mxu0 %v1944
    %2970 = vmatpush.bf16.msra.mxu0 %v1937
    %2971 = vmatpush.bf16.msra.mxu0 %v1930
    %2972 = vmatpush.bf16.msra.mxu0 %v1923
    %2973 = vmatpush.bf16.msra.mxu0 %v1916
    %2974 = vmatpush.bf16.msra.mxu0 %v1909
    %2975 = vmatmul.bf16.gmra.mxu0 %v90
    %v2976 = vpop.f32.mrf.mxu0
    %v2977 = vadd.f32 %v2964, %v2976
    %v2978 = vpop.f32.mrf.mxu0
    %2979 = vdwg.mxu0
    %2980 = vmatpush.bf16.msra.mxu0 %v2014
    %2981 = vmatpush.bf16.msra.mxu0 %v2007
    %2982 = vmatpush.bf16.msra.mxu0 %v2000
    %2983 = vmatpush.bf16.msra.mxu0 %v1993
    %2984 = vmatpush.bf16.msra.mxu0 %v1986
    %2985 = vmatpush.bf16.msra.mxu0 %v1979
    %2986 = vmatpush.bf16.msra.mxu0 %v1972
    %2987 = vmatpush.bf16.msra.mxu0 %v1965
    %2988 = vmatmul.bf16.gmra.mxu0 %v91
    %v2989 = vpop.f32.mrf.mxu0
    %v2990 = vadd.f32 %v2977, %v2989
    %v2991 = vpop.f32.mrf.mxu0
    %2992 = vdwg.mxu0
    %2993 = vmatpush.bf16.msra.mxu0 %v2070
    %2994 = vmatpush.bf16.msra.mxu0 %v2063
    %2995 = vmatpush.bf16.msra.mxu0 %v2056
    %2996 = vmatpush.bf16.msra.mxu0 %v2049
    %2997 = vmatpush.bf16.msra.mxu0 %v2042
    %2998 = vmatpush.bf16.msra.mxu0 %v2035
    %2999 = vmatpush.bf16.msra.mxu0 %v2028
    %3000 = vmatpush.bf16.msra.mxu0 %v2021
    %3001 = vmatmul.bf16.gmra.mxu0 %v92
    %v3002 = vpop.f32.mrf.mxu0
    %v3003 = vadd.f32 %v2990, %v3002
    %v3004 = vpop.f32.mrf.mxu0
    %3005 = vdwg.mxu0
    %3006 = vmatpush.bf16.msra.mxu0 %v2126
    %3007 = vmatpush.bf16.msra.mxu0 %v2119
    %3008 = vmatpush.bf16.msra.mxu0 %v2112
    %3009 = vmatpush.bf16.msra.mxu0 %v2105
    %3010 = vmatpush.bf16.msra.mxu0 %v2098
    %3011 = vmatpush.bf16.msra.mxu0 %v2091
    %3012 = vmatpush.bf16.msra.mxu0 %v2084
    %3013 = vmatpush.bf16.msra.mxu0 %v2077
    %3014 = vmatmul.bf16.gmra.mxu0 %v93
    %v3015 = vpop.f32.mrf.mxu0
    %v3016 = vadd.f32 %v3003, %v3015
    %v3017 = vpop.f32.mrf.mxu0
    %3018 = vdwg.mxu0
    %3019 = vmatpush.bf16.msra.mxu0 %v2182
    %3020 = vmatpush.bf16.msra.mxu0 %v2175
    %3021 = vmatpush.bf16.msra.mxu0 %v2168
    %3022 = vmatpush.bf16.msra.mxu0 %v2161
    %3023 = vmatpush.bf16.msra.mxu0 %v2154
    %3024 = vmatpush.bf16.msra.mxu0 %v2147
    %3025 = vmatpush.bf16.msra.mxu0 %v2140
    %3026 = vmatpush.bf16.msra.mxu0 %v2133
    %3027 = vmatmul.bf16.gmra.mxu0 %v94
    %v3028 = vpop.f32.mrf.mxu0
    %v3029 = vadd.f32 %v3016, %v3028
    %v3030 = vpop.f32.mrf.mxu0
    %3031 = vdwg.mxu0
    %3032 = vmatpush.bf16.msra.mxu0 %v1847
    %3033 = vmatpush.bf16.msra.mxu0 %v1840
    %3034 = vmatpush.bf16.msra.mxu0 %v1833
    %3035 = vmatpush.bf16.msra.mxu0 %v1826
    %3036 = vmatpush.bf16.msra.mxu0 %v1819
    %3037 = vmatpush.bf16.msra.mxu0 %v1812
    %3038 = vmatpush.bf16.msra.mxu0 %v1805
    %3039 = vmatpush.bf16.msra.mxu0 %v1798
    %3040 = vmatmul.bf16.gmra.mxu0 %v88
    %v3041 = vpop.f32.mrf.mxu0
    %v3042 = vadd.f32 %v552, %v3041
    %v3043 = vpop.f32.mrf.mxu0
    %3044 = vdwg.mxu0
    %3045 = vmatpush.bf16.msra.mxu0 %v1903
    %3046 = vmatpush.bf16.msra.mxu0 %v1896
    %3047 = vmatpush.bf16.msra.mxu0 %v1889
    %3048 = vmatpush.bf16.msra.mxu0 %v1882
    %3049 = vmatpush.bf16.msra.mxu0 %v1875
    %3050 = vmatpush.bf16.msra.mxu0 %v1868
    %3051 = vmatpush.bf16.msra.mxu0 %v1861
    %3052 = vmatpush.bf16.msra.mxu0 %v1854
    %3053 = vmatmul.bf16.gmra.mxu0 %v89
    %v3054 = vpop.f32.mrf.mxu0
    %v3055 = vadd.f32 %v3042, %v3054
    %v3056 = vpop.f32.mrf.mxu0
    %3057 = vdwg.mxu0
    %3058 = vmatpush.bf16.msra.mxu0 %v1959
    %3059 = vmatpush.bf16.msra.mxu0 %v1952
    %3060 = vmatpush.bf16.msra.mxu0 %v1945
    %3061 = vmatpush.bf16.msra.mxu0 %v1938
    %3062 = vmatpush.bf16.msra.mxu0 %v1931
    %3063 = vmatpush.bf16.msra.mxu0 %v1924
    %3064 = vmatpush.bf16.msra.mxu0 %v1917
    %3065 = vmatpush.bf16.msra.mxu0 %v1910
    %3066 = vmatmul.bf16.gmra.mxu0 %v90
    %v3067 = vpop.f32.mrf.mxu0
    %v3068 = vadd.f32 %v3055, %v3067
    %v3069 = vpop.f32.mrf.mxu0
    %3070 = vdwg.mxu0
    %3071 = vmatpush.bf16.msra.mxu0 %v2015
    %3072 = vmatpush.bf16.msra.mxu0 %v2008
    %3073 = vmatpush.bf16.msra.mxu0 %v2001
    %3074 = vmatpush.bf16.msra.mxu0 %v1994
    %3075 = vmatpush.bf16.msra.mxu0 %v1987
    %3076 = vmatpush.bf16.msra.mxu0 %v1980
    %3077 = vmatpush.bf16.msra.mxu0 %v1973
    %3078 = vmatpush.bf16.msra.mxu0 %v1966
    %3079 = vmatmul.bf16.gmra.mxu0 %v91
    %v3080 = vpop.f32.mrf.mxu0
    %v3081 = vadd.f32 %v3068, %v3080
    %v3082 = vpop.f32.mrf.mxu0
    %3083 = vdwg.mxu0
    %3084 = vmatpush.bf16.msra.mxu0 %v2071
    %3085 = vmatpush.bf16.msra.mxu0 %v2064
    %3086 = vmatpush.bf16.msra.mxu0 %v2057
    %3087 = vmatpush.bf16.msra.mxu0 %v2050
    %3088 = vmatpush.bf16.msra.mxu0 %v2043
    %3089 = vmatpush.bf16.msra.mxu0 %v2036
    %3090 = vmatpush.bf16.msra.mxu0 %v2029
    %3091 = vmatpush.bf16.msra.mxu0 %v2022
    %3092 = vmatmul.bf16.gmra.mxu0 %v92
    %v3093 = vpop.f32.mrf.mxu0
    %v3094 = vadd.f32 %v3081, %v3093
    %v3095 = vpop.f32.mrf.mxu0
    %3096 = vdwg.mxu0
    %3097 = vmatpush.bf16.msra.mxu0 %v2127
    %3098 = vmatpush.bf16.msra.mxu0 %v2120
    %3099 = vmatpush.bf16.msra.mxu0 %v2113
    %3100 = vmatpush.bf16.msra.mxu0 %v2106
    %3101 = vmatpush.bf16.msra.mxu0 %v2099
    %3102 = vmatpush.bf16.msra.mxu0 %v2092
    %3103 = vmatpush.bf16.msra.mxu0 %v2085
    %3104 = vmatpush.bf16.msra.mxu0 %v2078
    %3105 = vmatmul.bf16.gmra.mxu0 %v93
    %v3106 = vpop.f32.mrf.mxu0
    %v3107 = vadd.f32 %v3094, %v3106
    %v3108 = vpop.f32.mrf.mxu0
    %3109 = vdwg.mxu0
    %3110 = vmatpush.bf16.msra.mxu0 %v2183
    %3111 = vmatpush.bf16.msra.mxu0 %v2176
    %3112 = vmatpush.bf16.msra.mxu0 %v2169
    %3113 = vmatpush.bf16.msra.mxu0 %v2162
    %3114 = vmatpush.bf16.msra.mxu0 %v2155
    %3115 = vmatpush.bf16.msra.mxu0 %v2148
    %3116 = vmatpush.bf16.msra.mxu0 %v2141
    %3117 = vmatpush.bf16.msra.mxu0 %v2134
    %3118 = vmatmul.bf16.gmra.mxu0 %v94
    %v3119 = vpop.f32.mrf.mxu0
    %v3120 = vadd.f32 %v3107, %v3119
    %v3121 = vpop.f32.mrf.mxu0
    %3122 = vdwg.mxu0
    %3123 = vmatpush.bf16.msra.mxu0 %v1848
    %3124 = vmatpush.bf16.msra.mxu0 %v1841
    %3125 = vmatpush.bf16.msra.mxu0 %v1834
    %3126 = vmatpush.bf16.msra.mxu0 %v1827
    %3127 = vmatpush.bf16.msra.mxu0 %v1820
    %3128 = vmatpush.bf16.msra.mxu0 %v1813
    %3129 = vmatpush.bf16.msra.mxu0 %v1806
    %3130 = vmatpush.bf16.msra.mxu0 %v1799
    %3131 = vmatmul.bf16.gmra.mxu0 %v88
    %v3132 = vpop.f32.mrf.mxu0
    %v3133 = vadd.f32 %v553, %v3132
    %v3134 = vpop.f32.mrf.mxu0
    %3135 = vdwg.mxu0
    %3136 = vmatpush.bf16.msra.mxu0 %v1904
    %3137 = vmatpush.bf16.msra.mxu0 %v1897
    %3138 = vmatpush.bf16.msra.mxu0 %v1890
    %3139 = vmatpush.bf16.msra.mxu0 %v1883
    %3140 = vmatpush.bf16.msra.mxu0 %v1876
    %3141 = vmatpush.bf16.msra.mxu0 %v1869
    %3142 = vmatpush.bf16.msra.mxu0 %v1862
    %3143 = vmatpush.bf16.msra.mxu0 %v1855
    %3144 = vmatmul.bf16.gmra.mxu0 %v89
    %v3145 = vpop.f32.mrf.mxu0
    %v3146 = vadd.f32 %v3133, %v3145
    %v3147 = vpop.f32.mrf.mxu0
    %3148 = vdwg.mxu0
    %3149 = vmatpush.bf16.msra.mxu0 %v1960
    %3150 = vmatpush.bf16.msra.mxu0 %v1953
    %3151 = vmatpush.bf16.msra.mxu0 %v1946
    %3152 = vmatpush.bf16.msra.mxu0 %v1939
    %3153 = vmatpush.bf16.msra.mxu0 %v1932
    %3154 = vmatpush.bf16.msra.mxu0 %v1925
    %3155 = vmatpush.bf16.msra.mxu0 %v1918
    %3156 = vmatpush.bf16.msra.mxu0 %v1911
    %3157 = vmatmul.bf16.gmra.mxu0 %v90
    %v3158 = vpop.f32.mrf.mxu0
    %v3159 = vadd.f32 %v3146, %v3158
    %v3160 = vpop.f32.mrf.mxu0
    %3161 = vdwg.mxu0
    %3162 = vmatpush.bf16.msra.mxu0 %v2016
    %3163 = vmatpush.bf16.msra.mxu0 %v2009
    %3164 = vmatpush.bf16.msra.mxu0 %v2002
    %3165 = vmatpush.bf16.msra.mxu0 %v1995
    %3166 = vmatpush.bf16.msra.mxu0 %v1988
    %3167 = vmatpush.bf16.msra.mxu0 %v1981
    %3168 = vmatpush.bf16.msra.mxu0 %v1974
    %3169 = vmatpush.bf16.msra.mxu0 %v1967
    %3170 = vmatmul.bf16.gmra.mxu0 %v91
    %v3171 = vpop.f32.mrf.mxu0
    %v3172 = vadd.f32 %v3159, %v3171
    %v3173 = vpop.f32.mrf.mxu0
    %3174 = vdwg.mxu0
    %3175 = vmatpush.bf16.msra.mxu0 %v2072
    %3176 = vmatpush.bf16.msra.mxu0 %v2065
    %3177 = vmatpush.bf16.msra.mxu0 %v2058
    %3178 = vmatpush.bf16.msra.mxu0 %v2051
    %3179 = vmatpush.bf16.msra.mxu0 %v2044
    %3180 = vmatpush.bf16.msra.mxu0 %v2037
    %3181 = vmatpush.bf16.msra.mxu0 %v2030
    %3182 = vmatpush.bf16.msra.mxu0 %v2023
    %3183 = vmatmul.bf16.gmra.mxu0 %v92
    %v3184 = vpop.f32.mrf.mxu0
    %v3185 = vadd.f32 %v3172, %v3184
    %v3186 = vpop.f32.mrf.mxu0
    %3187 = vdwg.mxu0
    %3188 = vmatpush.bf16.msra.mxu0 %v2128
    %3189 = vmatpush.bf16.msra.mxu0 %v2121
    %3190 = vmatpush.bf16.msra.mxu0 %v2114
    %3191 = vmatpush.bf16.msra.mxu0 %v2107
    %3192 = vmatpush.bf16.msra.mxu0 %v2100
    %3193 = vmatpush.bf16.msra.mxu0 %v2093
    %3194 = vmatpush.bf16.msra.mxu0 %v2086
    %3195 = vmatpush.bf16.msra.mxu0 %v2079
    %3196 = vmatmul.bf16.gmra.mxu0 %v93
    %v3197 = vpop.f32.mrf.mxu0
    %v3198 = vadd.f32 %v3185, %v3197
    %v3199 = vpop.f32.mrf.mxu0
    %3200 = vdwg.mxu0
    %3201 = vmatpush.bf16.msra.mxu0 %v2184
    %3202 = vmatpush.bf16.msra.mxu0 %v2177
    %3203 = vmatpush.bf16.msra.mxu0 %v2170
    %3204 = vmatpush.bf16.msra.mxu0 %v2163
    %3205 = vmatpush.bf16.msra.mxu0 %v2156
    %3206 = vmatpush.bf16.msra.mxu0 %v2149
    %3207 = vmatpush.bf16.msra.mxu0 %v2142
    %3208 = vmatpush.bf16.msra.mxu0 %v2135
    %3209 = vmatmul.bf16.gmra.mxu0 %v94
    %v3210 = vpop.f32.mrf.mxu0
    %v3211 = vadd.f32 %v3198, %v3210
    %v3212 = vpop.f32.mrf.mxu0
    %3213 = vdwg.mxu0
    %v3214 = vstv %s87
    %v3215 = vmul.f32 %v3214, %v2665
    %v3216 = vmul.f32 %v3214, %v2756
    %v3217 = vmul.f32 %v3214, %v2847
    %v3218 = vmul.f32 %v3214, %v2938
    %v3219 = vmul.f32 %v3214, %v3029
    %v3220 = vmul.f32 %v3214, %v3120
    %v3221 = vmul.f32 %v3214, %v3211
    %v3222 = vstv %s87
    %v3223 = vrsqrt.pop %v3222
    %v3224 = vmul.f32 %v3223, %v3222
    %v3225 = vmul.f32 %v3224, %v3223
    %v3226 = vmul.f32 0.5, %v3225
    %v3227 = vsub.f32 1.5, %v3226
    %v3228 = vmul.f32 %v3223, %v3227
    %v3229 = vmul.f32 %v3222, %v3228
    %vm3230 = vcmp.eq.f32.partialorder %v3222, inf
    %v3231 = vsel %vm3230, %v3222, %v3229
    %vm3232 = vcmp.eq.f32.partialorder %v3222, 0.0
    %v3233 = vand.u32 %v3222, 2147483648
    %v3234 = vsel %vm3232, %v3233, %v3231
    %s3235 = vtos %v3234
    %s3236 = ssub.f32 0.0, %s3235
    %s3237 = smul.f32 %s45, 0.5
    %v3238 = vstv %s3237
    %v3239 = vmul.f32 %v3238, %v3215
    %v3240 = vmul.f32 %v3238, %v3216
    %v3241 = vmul.f32 %v3238, %v3217
    %v3242 = vmul.f32 %v3238, %v3218
    %v3243 = vmul.f32 %v3238, %v3219
    %v3244 = vmul.f32 %v3238, %v3220
    %v3245 = vmul.f32 %v3238, %v3221
    %v3246 = vadd.f32 %v46, %v3239
    %v3247 = vadd.f32 %v47, %v3240
    %v3248 = vadd.f32 %v48, %v3241
    %v3249 = vadd.f32 %v49, %v3242
    %v3250 = vadd.f32 %v50, %v3243
    %v3251 = vadd.f32 %v51, %v3244
    %v3252 = vadd.f32 %v52, %v3245
    %s3253 = smul.f32 %s3236, 0.5
    %v3254 = vstv %s3253
    %v3255 = vmul.f32 %v3254, %v78
    %v3256 = vmul.f32 %v3254, %v79
    %v3257 = vmul.f32 %v3254, %v80
    %v3258 = vmul.f32 %v3254, %v81
    %v3259 = vmul.f32 %v3254, %v82
    %v3260 = vmul.f32 %v3254, %v83
    %v3261 = vmul.f32 %v3254, %v84
    %v3262 = vadd.f32 %v3246, %v3255
    %v3263 = vadd.f32 %v3247, %v3256
    %v3264 = vadd.f32 %v3248, %v3257
    %v3265 = vadd.f32 %v3249, %v3258
    %v3266 = vadd.f32 %v3250, %v3259
    %v3267 = vadd.f32 %v3251, %v3260
    %v3268 = vadd.f32 %v3252, %v3261
    %s3269 = sadd.f32 %s39, %s3237
    %s3270 = ssub.f32 0.0, %s3269
    %s3271 = smul.f32 %s3270, 0.0199
    %s3272 = sadd.f32 %s3271, 0.0001
    %v3273 = vpack.c.bf16 %v3262, %v3262
    %v3274 = vpack.c.bf16 %v3263, %v3263
    %v3275 = vpack.c.bf16 %v3264, %v3264
    %v3276 = vpack.c.bf16 %v3265, %v3265
    %v3277 = vpack.c.bf16 %v3266, %v3266
    %v3278 = vpack.c.bf16 %v3267, %v3267
    %v3279 = vpack.c.bf16 %v3268, %v3268
    %v3280 = vstv %s3270
    %v3281 = vmul.f32 %v3280, %v543
    %v3283 = vperm.slane %v3281, 0
    %v3284 = vperm.slane %v3281, 1
    %v3285 = vperm.slane %v3281, 2
    %v3286 = vperm.slane %v3281, 3
    %v3287 = vperm.slane %v3281, 4
    %v3288 = vperm.slane %v3281, 5
    %v3289 = vperm.slane %v3281, 6
    %3297 = vmatpush.bf16.msra.mxu0 %v1842
    %3298 = vmatpush.bf16.msra.mxu0 %v1835
    %3299 = vmatpush.bf16.msra.mxu0 %v1828
    %3300 = vmatpush.bf16.msra.mxu0 %v1821
    %3301 = vmatpush.bf16.msra.mxu0 %v1814
    %3302 = vmatpush.bf16.msra.mxu0 %v1807
    %3303 = vmatpush.bf16.msra.mxu0 %v1800
    %3304 = vmatpush.bf16.msra.mxu0 %v1793
    %3305 = vmatmul.bf16.gmra.mxu0 %v3273
    %v3306 = vpop.f32.mrf.mxu0
    %v3307 = vadd.f32 %v3283, %v3306
    %v3308 = vpop.f32.mrf.mxu0
    %3309 = vdwg.mxu0
    %3310 = vmatpush.bf16.msra.mxu0 %v1898
    %3311 = vmatpush.bf16.msra.mxu0 %v1891
    %3312 = vmatpush.bf16.msra.mxu0 %v1884
    %3313 = vmatpush.bf16.msra.mxu0 %v1877
    %3314 = vmatpush.bf16.msra.mxu0 %v1870
    %3315 = vmatpush.bf16.msra.mxu0 %v1863
    %3316 = vmatpush.bf16.msra.mxu0 %v1856
    %3317 = vmatpush.bf16.msra.mxu0 %v1849
    %3318 = vmatmul.bf16.gmra.mxu0 %v3274
    %v3319 = vpop.f32.mrf.mxu0
    %v3320 = vadd.f32 %v3307, %v3319
    %v3321 = vpop.f32.mrf.mxu0
    %3322 = vdwg.mxu0
    %3323 = vmatpush.bf16.msra.mxu0 %v1954
    %3324 = vmatpush.bf16.msra.mxu0 %v1947
    %3325 = vmatpush.bf16.msra.mxu0 %v1940
    %3326 = vmatpush.bf16.msra.mxu0 %v1933
    %3327 = vmatpush.bf16.msra.mxu0 %v1926
    %3328 = vmatpush.bf16.msra.mxu0 %v1919
    %3329 = vmatpush.bf16.msra.mxu0 %v1912
    %3330 = vmatpush.bf16.msra.mxu0 %v1905
    %3331 = vmatmul.bf16.gmra.mxu0 %v3275
    %v3332 = vpop.f32.mrf.mxu0
    %v3333 = vadd.f32 %v3320, %v3332
    %v3334 = vpop.f32.mrf.mxu0
    %3335 = vdwg.mxu0
    %3336 = vmatpush.bf16.msra.mxu0 %v2010
    %3337 = vmatpush.bf16.msra.mxu0 %v2003
    %3338 = vmatpush.bf16.msra.mxu0 %v1996
    %3339 = vmatpush.bf16.msra.mxu0 %v1989
    %3340 = vmatpush.bf16.msra.mxu0 %v1982
    %3341 = vmatpush.bf16.msra.mxu0 %v1975
    %3342 = vmatpush.bf16.msra.mxu0 %v1968
    %3343 = vmatpush.bf16.msra.mxu0 %v1961
    %3344 = vmatmul.bf16.gmra.mxu0 %v3276
    %v3345 = vpop.f32.mrf.mxu0
    %v3346 = vadd.f32 %v3333, %v3345
    %v3347 = vpop.f32.mrf.mxu0
    %3348 = vdwg.mxu0
    %3349 = vmatpush.bf16.msra.mxu0 %v2066
    %3350 = vmatpush.bf16.msra.mxu0 %v2059
    %3351 = vmatpush.bf16.msra.mxu0 %v2052
    %3352 = vmatpush.bf16.msra.mxu0 %v2045
    %3353 = vmatpush.bf16.msra.mxu0 %v2038
    %3354 = vmatpush.bf16.msra.mxu0 %v2031
    %3355 = vmatpush.bf16.msra.mxu0 %v2024
    %3356 = vmatpush.bf16.msra.mxu0 %v2017
    %3357 = vmatmul.bf16.gmra.mxu0 %v3277
    %v3358 = vpop.f32.mrf.mxu0
    %v3359 = vadd.f32 %v3346, %v3358
    %v3360 = vpop.f32.mrf.mxu0
    %3361 = vdwg.mxu0
    %3362 = vmatpush.bf16.msra.mxu0 %v2122
    %3363 = vmatpush.bf16.msra.mxu0 %v2115
    %3364 = vmatpush.bf16.msra.mxu0 %v2108
    %3365 = vmatpush.bf16.msra.mxu0 %v2101
    %3366 = vmatpush.bf16.msra.mxu0 %v2094
    %3367 = vmatpush.bf16.msra.mxu0 %v2087
    %3368 = vmatpush.bf16.msra.mxu0 %v2080
    %3369 = vmatpush.bf16.msra.mxu0 %v2073
    %3370 = vmatmul.bf16.gmra.mxu0 %v3278
    %v3371 = vpop.f32.mrf.mxu0
    %v3372 = vadd.f32 %v3359, %v3371
    %v3373 = vpop.f32.mrf.mxu0
    %3374 = vdwg.mxu0
    %3375 = vmatpush.bf16.msra.mxu0 %v2178
    %3376 = vmatpush.bf16.msra.mxu0 %v2171
    %3377 = vmatpush.bf16.msra.mxu0 %v2164
    %3378 = vmatpush.bf16.msra.mxu0 %v2157
    %3379 = vmatpush.bf16.msra.mxu0 %v2150
    %3380 = vmatpush.bf16.msra.mxu0 %v2143
    %3381 = vmatpush.bf16.msra.mxu0 %v2136
    %3382 = vmatpush.bf16.msra.mxu0 %v2129
    %3383 = vmatmul.bf16.gmra.mxu0 %v3279
    %v3384 = vpop.f32.mrf.mxu0
    %v3385 = vadd.f32 %v3372, %v3384
    %v3386 = vpop.f32.mrf.mxu0
    %3387 = vdwg.mxu0
    %3388 = vmatpush.bf16.msra.mxu0 %v1843
    %3389 = vmatpush.bf16.msra.mxu0 %v1836
    %3390 = vmatpush.bf16.msra.mxu0 %v1829
    %3391 = vmatpush.bf16.msra.mxu0 %v1822
    %3392 = vmatpush.bf16.msra.mxu0 %v1815
    %3393 = vmatpush.bf16.msra.mxu0 %v1808
    %3394 = vmatpush.bf16.msra.mxu0 %v1801
    %3395 = vmatpush.bf16.msra.mxu0 %v1794
    %3396 = vmatmul.bf16.gmra.mxu0 %v3273
    %v3397 = vpop.f32.mrf.mxu0
    %v3398 = vadd.f32 %v3284, %v3397
    %v3399 = vpop.f32.mrf.mxu0
    %3400 = vdwg.mxu0
    %3401 = vmatpush.bf16.msra.mxu0 %v1899
    %3402 = vmatpush.bf16.msra.mxu0 %v1892
    %3403 = vmatpush.bf16.msra.mxu0 %v1885
    %3404 = vmatpush.bf16.msra.mxu0 %v1878
    %3405 = vmatpush.bf16.msra.mxu0 %v1871
    %3406 = vmatpush.bf16.msra.mxu0 %v1864
    %3407 = vmatpush.bf16.msra.mxu0 %v1857
    %3408 = vmatpush.bf16.msra.mxu0 %v1850
    %3409 = vmatmul.bf16.gmra.mxu0 %v3274
    %v3410 = vpop.f32.mrf.mxu0
    %v3411 = vadd.f32 %v3398, %v3410
    %v3412 = vpop.f32.mrf.mxu0
    %3413 = vdwg.mxu0
    %3414 = vmatpush.bf16.msra.mxu0 %v1955
    %3415 = vmatpush.bf16.msra.mxu0 %v1948
    %3416 = vmatpush.bf16.msra.mxu0 %v1941
    %3417 = vmatpush.bf16.msra.mxu0 %v1934
    %3418 = vmatpush.bf16.msra.mxu0 %v1927
    %3419 = vmatpush.bf16.msra.mxu0 %v1920
    %3420 = vmatpush.bf16.msra.mxu0 %v1913
    %3421 = vmatpush.bf16.msra.mxu0 %v1906
    %3422 = vmatmul.bf16.gmra.mxu0 %v3275
    %v3423 = vpop.f32.mrf.mxu0
    %v3424 = vadd.f32 %v3411, %v3423
    %v3425 = vpop.f32.mrf.mxu0
    %3426 = vdwg.mxu0
    %3427 = vmatpush.bf16.msra.mxu0 %v2011
    %3428 = vmatpush.bf16.msra.mxu0 %v2004
    %3429 = vmatpush.bf16.msra.mxu0 %v1997
    %3430 = vmatpush.bf16.msra.mxu0 %v1990
    %3431 = vmatpush.bf16.msra.mxu0 %v1983
    %3432 = vmatpush.bf16.msra.mxu0 %v1976
    %3433 = vmatpush.bf16.msra.mxu0 %v1969
    %3434 = vmatpush.bf16.msra.mxu0 %v1962
    %3435 = vmatmul.bf16.gmra.mxu0 %v3276
    %v3436 = vpop.f32.mrf.mxu0
    %v3437 = vadd.f32 %v3424, %v3436
    %v3438 = vpop.f32.mrf.mxu0
    %3439 = vdwg.mxu0
    %3440 = vmatpush.bf16.msra.mxu0 %v2067
    %3441 = vmatpush.bf16.msra.mxu0 %v2060
    %3442 = vmatpush.bf16.msra.mxu0 %v2053
    %3443 = vmatpush.bf16.msra.mxu0 %v2046
    %3444 = vmatpush.bf16.msra.mxu0 %v2039
    %3445 = vmatpush.bf16.msra.mxu0 %v2032
    %3446 = vmatpush.bf16.msra.mxu0 %v2025
    %3447 = vmatpush.bf16.msra.mxu0 %v2018
    %3448 = vmatmul.bf16.gmra.mxu0 %v3277
    %v3449 = vpop.f32.mrf.mxu0
    %v3450 = vadd.f32 %v3437, %v3449
    %v3451 = vpop.f32.mrf.mxu0
    %3452 = vdwg.mxu0
    %3453 = vmatpush.bf16.msra.mxu0 %v2123
    %3454 = vmatpush.bf16.msra.mxu0 %v2116
    %3455 = vmatpush.bf16.msra.mxu0 %v2109
    %3456 = vmatpush.bf16.msra.mxu0 %v2102
    %3457 = vmatpush.bf16.msra.mxu0 %v2095
    %3458 = vmatpush.bf16.msra.mxu0 %v2088
    %3459 = vmatpush.bf16.msra.mxu0 %v2081
    %3460 = vmatpush.bf16.msra.mxu0 %v2074
    %3461 = vmatmul.bf16.gmra.mxu0 %v3278
    %v3462 = vpop.f32.mrf.mxu0
    %v3463 = vadd.f32 %v3450, %v3462
    %v3464 = vpop.f32.mrf.mxu0
    %3465 = vdwg.mxu0
    %3466 = vmatpush.bf16.msra.mxu0 %v2179
    %3467 = vmatpush.bf16.msra.mxu0 %v2172
    %3468 = vmatpush.bf16.msra.mxu0 %v2165
    %3469 = vmatpush.bf16.msra.mxu0 %v2158
    %3470 = vmatpush.bf16.msra.mxu0 %v2151
    %3471 = vmatpush.bf16.msra.mxu0 %v2144
    %3472 = vmatpush.bf16.msra.mxu0 %v2137
    %3473 = vmatpush.bf16.msra.mxu0 %v2130
    %3474 = vmatmul.bf16.gmra.mxu0 %v3279
    %v3475 = vpop.f32.mrf.mxu0
    %v3476 = vadd.f32 %v3463, %v3475
    %v3477 = vpop.f32.mrf.mxu0
    %3478 = vdwg.mxu0
    %3479 = vmatpush.bf16.msra.mxu0 %v1844
    %3480 = vmatpush.bf16.msra.mxu0 %v1837
    %3481 = vmatpush.bf16.msra.mxu0 %v1830
    %3482 = vmatpush.bf16.msra.mxu0 %v1823
    %3483 = vmatpush.bf16.msra.mxu0 %v1816
    %3484 = vmatpush.bf16.msra.mxu0 %v1809
    %3485 = vmatpush.bf16.msra.mxu0 %v1802
    %3486 = vmatpush.bf16.msra.mxu0 %v1795
    %3487 = vmatmul.bf16.gmra.mxu0 %v3273
    %v3488 = vpop.f32.mrf.mxu0
    %v3489 = vadd.f32 %v3285, %v3488
    %v3490 = vpop.f32.mrf.mxu0
    %3491 = vdwg.mxu0
    %3492 = vmatpush.bf16.msra.mxu0 %v1900
    %3493 = vmatpush.bf16.msra.mxu0 %v1893
    %3494 = vmatpush.bf16.msra.mxu0 %v1886
    %3495 = vmatpush.bf16.msra.mxu0 %v1879
    %3496 = vmatpush.bf16.msra.mxu0 %v1872
    %3497 = vmatpush.bf16.msra.mxu0 %v1865
    %3498 = vmatpush.bf16.msra.mxu0 %v1858
    %3499 = vmatpush.bf16.msra.mxu0 %v1851
    %3500 = vmatmul.bf16.gmra.mxu0 %v3274
    %v3501 = vpop.f32.mrf.mxu0
    %v3502 = vadd.f32 %v3489, %v3501
    %v3503 = vpop.f32.mrf.mxu0
    %3504 = vdwg.mxu0
    %3505 = vmatpush.bf16.msra.mxu0 %v1956
    %3506 = vmatpush.bf16.msra.mxu0 %v1949
    %3507 = vmatpush.bf16.msra.mxu0 %v1942
    %3508 = vmatpush.bf16.msra.mxu0 %v1935
    %3509 = vmatpush.bf16.msra.mxu0 %v1928
    %3510 = vmatpush.bf16.msra.mxu0 %v1921
    %3511 = vmatpush.bf16.msra.mxu0 %v1914
    %3512 = vmatpush.bf16.msra.mxu0 %v1907
    %3513 = vmatmul.bf16.gmra.mxu0 %v3275
    %v3514 = vpop.f32.mrf.mxu0
    %v3515 = vadd.f32 %v3502, %v3514
    %v3516 = vpop.f32.mrf.mxu0
    %3517 = vdwg.mxu0
    %3518 = vmatpush.bf16.msra.mxu0 %v2012
    %3519 = vmatpush.bf16.msra.mxu0 %v2005
    %3520 = vmatpush.bf16.msra.mxu0 %v1998
    %3521 = vmatpush.bf16.msra.mxu0 %v1991
    %3522 = vmatpush.bf16.msra.mxu0 %v1984
    %3523 = vmatpush.bf16.msra.mxu0 %v1977
    %3524 = vmatpush.bf16.msra.mxu0 %v1970
    %3525 = vmatpush.bf16.msra.mxu0 %v1963
    %3526 = vmatmul.bf16.gmra.mxu0 %v3276
    %v3527 = vpop.f32.mrf.mxu0
    %v3528 = vadd.f32 %v3515, %v3527
    %v3529 = vpop.f32.mrf.mxu0
    %3530 = vdwg.mxu0
    %3531 = vmatpush.bf16.msra.mxu0 %v2068
    %3532 = vmatpush.bf16.msra.mxu0 %v2061
    %3533 = vmatpush.bf16.msra.mxu0 %v2054
    %3534 = vmatpush.bf16.msra.mxu0 %v2047
    %3535 = vmatpush.bf16.msra.mxu0 %v2040
    %3536 = vmatpush.bf16.msra.mxu0 %v2033
    %3537 = vmatpush.bf16.msra.mxu0 %v2026
    %3538 = vmatpush.bf16.msra.mxu0 %v2019
    %3539 = vmatmul.bf16.gmra.mxu0 %v3277
    %v3540 = vpop.f32.mrf.mxu0
    %v3541 = vadd.f32 %v3528, %v3540
    %v3542 = vpop.f32.mrf.mxu0
    %3543 = vdwg.mxu0
    %3544 = vmatpush.bf16.msra.mxu0 %v2124
    %3545 = vmatpush.bf16.msra.mxu0 %v2117
    %3546 = vmatpush.bf16.msra.mxu0 %v2110
    %3547 = vmatpush.bf16.msra.mxu0 %v2103
    %3548 = vmatpush.bf16.msra.mxu0 %v2096
    %3549 = vmatpush.bf16.msra.mxu0 %v2089
    %3550 = vmatpush.bf16.msra.mxu0 %v2082
    %3551 = vmatpush.bf16.msra.mxu0 %v2075
    %3552 = vmatmul.bf16.gmra.mxu0 %v3278
    %v3553 = vpop.f32.mrf.mxu0
    %v3554 = vadd.f32 %v3541, %v3553
    %v3555 = vpop.f32.mrf.mxu0
    %3556 = vdwg.mxu0
    %3557 = vmatpush.bf16.msra.mxu0 %v2180
    %3558 = vmatpush.bf16.msra.mxu0 %v2173
    %3559 = vmatpush.bf16.msra.mxu0 %v2166
    %3560 = vmatpush.bf16.msra.mxu0 %v2159
    %3561 = vmatpush.bf16.msra.mxu0 %v2152
    %3562 = vmatpush.bf16.msra.mxu0 %v2145
    %3563 = vmatpush.bf16.msra.mxu0 %v2138
    %3564 = vmatpush.bf16.msra.mxu0 %v2131
    %3565 = vmatmul.bf16.gmra.mxu0 %v3279
    %v3566 = vpop.f32.mrf.mxu0
    %v3567 = vadd.f32 %v3554, %v3566
    %v3568 = vpop.f32.mrf.mxu0
    %3569 = vdwg.mxu0
    %3570 = vmatpush.bf16.msra.mxu0 %v1845
    %3571 = vmatpush.bf16.msra.mxu0 %v1838
    %3572 = vmatpush.bf16.msra.mxu0 %v1831
    %3573 = vmatpush.bf16.msra.mxu0 %v1824
    %3574 = vmatpush.bf16.msra.mxu0 %v1817
    %3575 = vmatpush.bf16.msra.mxu0 %v1810
    %3576 = vmatpush.bf16.msra.mxu0 %v1803
    %3577 = vmatpush.bf16.msra.mxu0 %v1796
    %3578 = vmatmul.bf16.gmra.mxu0 %v3273
    %v3579 = vpop.f32.mrf.mxu0
    %v3580 = vadd.f32 %v3286, %v3579
    %v3581 = vpop.f32.mrf.mxu0
    %3582 = vdwg.mxu0
    %3583 = vmatpush.bf16.msra.mxu0 %v1901
    %3584 = vmatpush.bf16.msra.mxu0 %v1894
    %3585 = vmatpush.bf16.msra.mxu0 %v1887
    %3586 = vmatpush.bf16.msra.mxu0 %v1880
    %3587 = vmatpush.bf16.msra.mxu0 %v1873
    %3588 = vmatpush.bf16.msra.mxu0 %v1866
    %3589 = vmatpush.bf16.msra.mxu0 %v1859
    %3590 = vmatpush.bf16.msra.mxu0 %v1852
    %3591 = vmatmul.bf16.gmra.mxu0 %v3274
    %v3592 = vpop.f32.mrf.mxu0
    %v3593 = vadd.f32 %v3580, %v3592
    %v3594 = vpop.f32.mrf.mxu0
    %3595 = vdwg.mxu0
    %3596 = vmatpush.bf16.msra.mxu0 %v1957
    %3597 = vmatpush.bf16.msra.mxu0 %v1950
    %3598 = vmatpush.bf16.msra.mxu0 %v1943
    %3599 = vmatpush.bf16.msra.mxu0 %v1936
    %3600 = vmatpush.bf16.msra.mxu0 %v1929
    %3601 = vmatpush.bf16.msra.mxu0 %v1922
    %3602 = vmatpush.bf16.msra.mxu0 %v1915
    %3603 = vmatpush.bf16.msra.mxu0 %v1908
    %3604 = vmatmul.bf16.gmra.mxu0 %v3275
    %v3605 = vpop.f32.mrf.mxu0
    %v3606 = vadd.f32 %v3593, %v3605
    %v3607 = vpop.f32.mrf.mxu0
    %3608 = vdwg.mxu0
    %3609 = vmatpush.bf16.msra.mxu0 %v2013
    %3610 = vmatpush.bf16.msra.mxu0 %v2006
    %3611 = vmatpush.bf16.msra.mxu0 %v1999
    %3612 = vmatpush.bf16.msra.mxu0 %v1992
    %3613 = vmatpush.bf16.msra.mxu0 %v1985
    %3614 = vmatpush.bf16.msra.mxu0 %v1978
    %3615 = vmatpush.bf16.msra.mxu0 %v1971
    %3616 = vmatpush.bf16.msra.mxu0 %v1964
    %3617 = vmatmul.bf16.gmra.mxu0 %v3276
    %v3618 = vpop.f32.mrf.mxu0
    %v3619 = vadd.f32 %v3606, %v3618
    %v3620 = vpop.f32.mrf.mxu0
    %3621 = vdwg.mxu0
    %3622 = vmatpush.bf16.msra.mxu0 %v2069
    %3623 = vmatpush.bf16.msra.mxu0 %v2062
    %3624 = vmatpush.bf16.msra.mxu0 %v2055
    %3625 = vmatpush.bf16.msra.mxu0 %v2048
    %3626 = vmatpush.bf16.msra.mxu0 %v2041
    %3627 = vmatpush.bf16.msra.mxu0 %v2034
    %3628 = vmatpush.bf16.msra.mxu0 %v2027
    %3629 = vmatpush.bf16.msra.mxu0 %v2020
    %3630 = vmatmul.bf16.gmra.mxu0 %v3277
    %v3631 = vpop.f32.mrf.mxu0
    %v3632 = vadd.f32 %v3619, %v3631
    %v3633 = vpop.f32.mrf.mxu0
    %3634 = vdwg.mxu0
    %3635 = vmatpush.bf16.msra.mxu0 %v2125
    %3636 = vmatpush.bf16.msra.mxu0 %v2118
    %3637 = vmatpush.bf16.msra.mxu0 %v2111
    %3638 = vmatpush.bf16.msra.mxu0 %v2104
    %3639 = vmatpush.bf16.msra.mxu0 %v2097
    %3640 = vmatpush.bf16.msra.mxu0 %v2090
    %3641 = vmatpush.bf16.msra.mxu0 %v2083
    %3642 = vmatpush.bf16.msra.mxu0 %v2076
    %3643 = vmatmul.bf16.gmra.mxu0 %v3278
    %v3644 = vpop.f32.mrf.mxu0
    %v3645 = vadd.f32 %v3632, %v3644
    %v3646 = vpop.f32.mrf.mxu0
    %3647 = vdwg.mxu0
    %3648 = vmatpush.bf16.msra.mxu0 %v2181
    %3649 = vmatpush.bf16.msra.mxu0 %v2174
    %3650 = vmatpush.bf16.msra.mxu0 %v2167
    %3651 = vmatpush.bf16.msra.mxu0 %v2160
    %3652 = vmatpush.bf16.msra.mxu0 %v2153
    %3653 = vmatpush.bf16.msra.mxu0 %v2146
    %3654 = vmatpush.bf16.msra.mxu0 %v2139
    %3655 = vmatpush.bf16.msra.mxu0 %v2132
    %3656 = vmatmul.bf16.gmra.mxu0 %v3279
    %v3657 = vpop.f32.mrf.mxu0
    %v3658 = vadd.f32 %v3645, %v3657
    %v3659 = vpop.f32.mrf.mxu0
    %3660 = vdwg.mxu0
    %3661 = vmatpush.bf16.msra.mxu0 %v1846
    %3662 = vmatpush.bf16.msra.mxu0 %v1839
    %3663 = vmatpush.bf16.msra.mxu0 %v1832
    %3664 = vmatpush.bf16.msra.mxu0 %v1825
    %3665 = vmatpush.bf16.msra.mxu0 %v1818
    %3666 = vmatpush.bf16.msra.mxu0 %v1811
    %3667 = vmatpush.bf16.msra.mxu0 %v1804
    %3668 = vmatpush.bf16.msra.mxu0 %v1797
    %3669 = vmatmul.bf16.gmra.mxu0 %v3273
    %v3670 = vpop.f32.mrf.mxu0
    %v3671 = vadd.f32 %v3287, %v3670
    %v3672 = vpop.f32.mrf.mxu0
    %3673 = vdwg.mxu0
    %3674 = vmatpush.bf16.msra.mxu0 %v1902
    %3675 = vmatpush.bf16.msra.mxu0 %v1895
    %3676 = vmatpush.bf16.msra.mxu0 %v1888
    %3677 = vmatpush.bf16.msra.mxu0 %v1881
    %3678 = vmatpush.bf16.msra.mxu0 %v1874
    %3679 = vmatpush.bf16.msra.mxu0 %v1867
    %3680 = vmatpush.bf16.msra.mxu0 %v1860
    %3681 = vmatpush.bf16.msra.mxu0 %v1853
    %3682 = vmatmul.bf16.gmra.mxu0 %v3274
    %v3683 = vpop.f32.mrf.mxu0
    %v3684 = vadd.f32 %v3671, %v3683
    %v3685 = vpop.f32.mrf.mxu0
    %3686 = vdwg.mxu0
    %3687 = vmatpush.bf16.msra.mxu0 %v1958
    %3688 = vmatpush.bf16.msra.mxu0 %v1951
    %3689 = vmatpush.bf16.msra.mxu0 %v1944
    %3690 = vmatpush.bf16.msra.mxu0 %v1937
    %3691 = vmatpush.bf16.msra.mxu0 %v1930
    %3692 = vmatpush.bf16.msra.mxu0 %v1923
    %3693 = vmatpush.bf16.msra.mxu0 %v1916
    %3694 = vmatpush.bf16.msra.mxu0 %v1909
    %3695 = vmatmul.bf16.gmra.mxu0 %v3275
    %v3696 = vpop.f32.mrf.mxu0
    %v3697 = vadd.f32 %v3684, %v3696
    %v3698 = vpop.f32.mrf.mxu0
    %3699 = vdwg.mxu0
    %3700 = vmatpush.bf16.msra.mxu0 %v2014
    %3701 = vmatpush.bf16.msra.mxu0 %v2007
    %3702 = vmatpush.bf16.msra.mxu0 %v2000
    %3703 = vmatpush.bf16.msra.mxu0 %v1993
    %3704 = vmatpush.bf16.msra.mxu0 %v1986
    %3705 = vmatpush.bf16.msra.mxu0 %v1979
    %3706 = vmatpush.bf16.msra.mxu0 %v1972
    %3707 = vmatpush.bf16.msra.mxu0 %v1965
    %3708 = vmatmul.bf16.gmra.mxu0 %v3276
    %v3709 = vpop.f32.mrf.mxu0
    %v3710 = vadd.f32 %v3697, %v3709
    %v3711 = vpop.f32.mrf.mxu0
    %3712 = vdwg.mxu0
    %3713 = vmatpush.bf16.msra.mxu0 %v2070
    %3714 = vmatpush.bf16.msra.mxu0 %v2063
    %3715 = vmatpush.bf16.msra.mxu0 %v2056
    %3716 = vmatpush.bf16.msra.mxu0 %v2049
    %3717 = vmatpush.bf16.msra.mxu0 %v2042
    %3718 = vmatpush.bf16.msra.mxu0 %v2035
    %3719 = vmatpush.bf16.msra.mxu0 %v2028
    %3720 = vmatpush.bf16.msra.mxu0 %v2021
    %3721 = vmatmul.bf16.gmra.mxu0 %v3277
    %v3722 = vpop.f32.mrf.mxu0
    %v3723 = vadd.f32 %v3710, %v3722
    %v3724 = vpop.f32.mrf.mxu0
    %3725 = vdwg.mxu0
    %3726 = vmatpush.bf16.msra.mxu0 %v2126
    %3727 = vmatpush.bf16.msra.mxu0 %v2119
    %3728 = vmatpush.bf16.msra.mxu0 %v2112
    %3729 = vmatpush.bf16.msra.mxu0 %v2105
    %3730 = vmatpush.bf16.msra.mxu0 %v2098
    %3731 = vmatpush.bf16.msra.mxu0 %v2091
    %3732 = vmatpush.bf16.msra.mxu0 %v2084
    %3733 = vmatpush.bf16.msra.mxu0 %v2077
    %3734 = vmatmul.bf16.gmra.mxu0 %v3278
    %v3735 = vpop.f32.mrf.mxu0
    %v3736 = vadd.f32 %v3723, %v3735
    %v3737 = vpop.f32.mrf.mxu0
    %3738 = vdwg.mxu0
    %3739 = vmatpush.bf16.msra.mxu0 %v2182
    %3740 = vmatpush.bf16.msra.mxu0 %v2175
    %3741 = vmatpush.bf16.msra.mxu0 %v2168
    %3742 = vmatpush.bf16.msra.mxu0 %v2161
    %3743 = vmatpush.bf16.msra.mxu0 %v2154
    %3744 = vmatpush.bf16.msra.mxu0 %v2147
    %3745 = vmatpush.bf16.msra.mxu0 %v2140
    %3746 = vmatpush.bf16.msra.mxu0 %v2133
    %3747 = vmatmul.bf16.gmra.mxu0 %v3279
    %v3748 = vpop.f32.mrf.mxu0
    %v3749 = vadd.f32 %v3736, %v3748
    %v3750 = vpop.f32.mrf.mxu0
    %3751 = vdwg.mxu0
    %3752 = vmatpush.bf16.msra.mxu0 %v1847
    %3753 = vmatpush.bf16.msra.mxu0 %v1840
    %3754 = vmatpush.bf16.msra.mxu0 %v1833
    %3755 = vmatpush.bf16.msra.mxu0 %v1826
    %3756 = vmatpush.bf16.msra.mxu0 %v1819
    %3757 = vmatpush.bf16.msra.mxu0 %v1812
    %3758 = vmatpush.bf16.msra.mxu0 %v1805
    %3759 = vmatpush.bf16.msra.mxu0 %v1798
    %3760 = vmatmul.bf16.gmra.mxu0 %v3273
    %v3761 = vpop.f32.mrf.mxu0
    %v3762 = vadd.f32 %v3288, %v3761
    %v3763 = vpop.f32.mrf.mxu0
    %3764 = vdwg.mxu0
    %3765 = vmatpush.bf16.msra.mxu0 %v1903
    %3766 = vmatpush.bf16.msra.mxu0 %v1896
    %3767 = vmatpush.bf16.msra.mxu0 %v1889
    %3768 = vmatpush.bf16.msra.mxu0 %v1882
    %3769 = vmatpush.bf16.msra.mxu0 %v1875
    %3770 = vmatpush.bf16.msra.mxu0 %v1868
    %3771 = vmatpush.bf16.msra.mxu0 %v1861
    %3772 = vmatpush.bf16.msra.mxu0 %v1854
    %3773 = vmatmul.bf16.gmra.mxu0 %v3274
    %v3774 = vpop.f32.mrf.mxu0
    %v3775 = vadd.f32 %v3762, %v3774
    %v3776 = vpop.f32.mrf.mxu0
    %3777 = vdwg.mxu0
    %3778 = vmatpush.bf16.msra.mxu0 %v1959
    %3779 = vmatpush.bf16.msra.mxu0 %v1952
    %3780 = vmatpush.bf16.msra.mxu0 %v1945
    %3781 = vmatpush.bf16.msra.mxu0 %v1938
    %3782 = vmatpush.bf16.msra.mxu0 %v1931
    %3783 = vmatpush.bf16.msra.mxu0 %v1924
    %3784 = vmatpush.bf16.msra.mxu0 %v1917
    %3785 = vmatpush.bf16.msra.mxu0 %v1910
    %3786 = vmatmul.bf16.gmra.mxu0 %v3275
    %v3787 = vpop.f32.mrf.mxu0
    %v3788 = vadd.f32 %v3775, %v3787
    %v3789 = vpop.f32.mrf.mxu0
    %3790 = vdwg.mxu0
    %3791 = vmatpush.bf16.msra.mxu0 %v2015
    %3792 = vmatpush.bf16.msra.mxu0 %v2008
    %3793 = vmatpush.bf16.msra.mxu0 %v2001
    %3794 = vmatpush.bf16.msra.mxu0 %v1994
    %3795 = vmatpush.bf16.msra.mxu0 %v1987
    %3796 = vmatpush.bf16.msra.mxu0 %v1980
    %3797 = vmatpush.bf16.msra.mxu0 %v1973
    %3798 = vmatpush.bf16.msra.mxu0 %v1966
    %3799 = vmatmul.bf16.gmra.mxu0 %v3276
    %v3800 = vpop.f32.mrf.mxu0
    %v3801 = vadd.f32 %v3788, %v3800
    %v3802 = vpop.f32.mrf.mxu0
    %3803 = vdwg.mxu0
    %3804 = vmatpush.bf16.msra.mxu0 %v2071
    %3805 = vmatpush.bf16.msra.mxu0 %v2064
    %3806 = vmatpush.bf16.msra.mxu0 %v2057
    %3807 = vmatpush.bf16.msra.mxu0 %v2050
    %3808 = vmatpush.bf16.msra.mxu0 %v2043
    %3809 = vmatpush.bf16.msra.mxu0 %v2036
    %3810 = vmatpush.bf16.msra.mxu0 %v2029
    %3811 = vmatpush.bf16.msra.mxu0 %v2022
    %3812 = vmatmul.bf16.gmra.mxu0 %v3277
    %v3813 = vpop.f32.mrf.mxu0
    %v3814 = vadd.f32 %v3801, %v3813
    %v3815 = vpop.f32.mrf.mxu0
    %3816 = vdwg.mxu0
    %3817 = vmatpush.bf16.msra.mxu0 %v2127
    %3818 = vmatpush.bf16.msra.mxu0 %v2120
    %3819 = vmatpush.bf16.msra.mxu0 %v2113
    %3820 = vmatpush.bf16.msra.mxu0 %v2106
    %3821 = vmatpush.bf16.msra.mxu0 %v2099
    %3822 = vmatpush.bf16.msra.mxu0 %v2092
    %3823 = vmatpush.bf16.msra.mxu0 %v2085
    %3824 = vmatpush.bf16.msra.mxu0 %v2078
    %3825 = vmatmul.bf16.gmra.mxu0 %v3278
    %v3826 = vpop.f32.mrf.mxu0
    %v3827 = vadd.f32 %v3814, %v3826
    %v3828 = vpop.f32.mrf.mxu0
    %3829 = vdwg.mxu0
    %3830 = vmatpush.bf16.msra.mxu0 %v2183
    %3831 = vmatpush.bf16.msra.mxu0 %v2176
    %3832 = vmatpush.bf16.msra.mxu0 %v2169
    %3833 = vmatpush.bf16.msra.mxu0 %v2162
    %3834 = vmatpush.bf16.msra.mxu0 %v2155
    %3835 = vmatpush.bf16.msra.mxu0 %v2148
    %3836 = vmatpush.bf16.msra.mxu0 %v2141
    %3837 = vmatpush.bf16.msra.mxu0 %v2134
    %3838 = vmatmul.bf16.gmra.mxu0 %v3279
    %v3839 = vpop.f32.mrf.mxu0
    %v3840 = vadd.f32 %v3827, %v3839
    %v3841 = vpop.f32.mrf.mxu0
    %3842 = vdwg.mxu0
    %3843 = vmatpush.bf16.msra.mxu0 %v1848
    %3844 = vmatpush.bf16.msra.mxu0 %v1841
    %3845 = vmatpush.bf16.msra.mxu0 %v1834
    %3846 = vmatpush.bf16.msra.mxu0 %v1827
    %3847 = vmatpush.bf16.msra.mxu0 %v1820
    %3848 = vmatpush.bf16.msra.mxu0 %v1813
    %3849 = vmatpush.bf16.msra.mxu0 %v1806
    %3850 = vmatpush.bf16.msra.mxu0 %v1799
    %3851 = vmatmul.bf16.gmra.mxu0 %v3273
    %v3852 = vpop.f32.mrf.mxu0
    %v3853 = vadd.f32 %v3289, %v3852
    %v3854 = vpop.f32.mrf.mxu0
    %3855 = vdwg.mxu0
    %3856 = vmatpush.bf16.msra.mxu0 %v1904
    %3857 = vmatpush.bf16.msra.mxu0 %v1897
    %3858 = vmatpush.bf16.msra.mxu0 %v1890
    %3859 = vmatpush.bf16.msra.mxu0 %v1883
    %3860 = vmatpush.bf16.msra.mxu0 %v1876
    %3861 = vmatpush.bf16.msra.mxu0 %v1869
    %3862 = vmatpush.bf16.msra.mxu0 %v1862
    %3863 = vmatpush.bf16.msra.mxu0 %v1855
    %3864 = vmatmul.bf16.gmra.mxu0 %v3274
    %v3865 = vpop.f32.mrf.mxu0
    %v3866 = vadd.f32 %v3853, %v3865
    %v3867 = vpop.f32.mrf.mxu0
    %3868 = vdwg.mxu0
    %3869 = vmatpush.bf16.msra.mxu0 %v1960
    %3870 = vmatpush.bf16.msra.mxu0 %v1953
    %3871 = vmatpush.bf16.msra.mxu0 %v1946
    %3872 = vmatpush.bf16.msra.mxu0 %v1939
    %3873 = vmatpush.bf16.msra.mxu0 %v1932
    %3874 = vmatpush.bf16.msra.mxu0 %v1925
    %3875 = vmatpush.bf16.msra.mxu0 %v1918
    %3876 = vmatpush.bf16.msra.mxu0 %v1911
    %3877 = vmatmul.bf16.gmra.mxu0 %v3275
    %v3878 = vpop.f32.mrf.mxu0
    %v3879 = vadd.f32 %v3866, %v3878
    %v3880 = vpop.f32.mrf.mxu0
    %3881 = vdwg.mxu0
    %3882 = vmatpush.bf16.msra.mxu0 %v2016
    %3883 = vmatpush.bf16.msra.mxu0 %v2009
    %3884 = vmatpush.bf16.msra.mxu0 %v2002
    %3885 = vmatpush.bf16.msra.mxu0 %v1995
    %3886 = vmatpush.bf16.msra.mxu0 %v1988
    %3887 = vmatpush.bf16.msra.mxu0 %v1981
    %3888 = vmatpush.bf16.msra.mxu0 %v1974
    %3889 = vmatpush.bf16.msra.mxu0 %v1967
    %3890 = vmatmul.bf16.gmra.mxu0 %v3276
    %v3891 = vpop.f32.mrf.mxu0
    %v3892 = vadd.f32 %v3879, %v3891
    %v3893 = vpop.f32.mrf.mxu0
    %3894 = vdwg.mxu0
    %3895 = vmatpush.bf16.msra.mxu0 %v2072
    %3896 = vmatpush.bf16.msra.mxu0 %v2065
    %3897 = vmatpush.bf16.msra.mxu0 %v2058
    %3898 = vmatpush.bf16.msra.mxu0 %v2051
    %3899 = vmatpush.bf16.msra.mxu0 %v2044
    %3900 = vmatpush.bf16.msra.mxu0 %v2037
    %3901 = vmatpush.bf16.msra.mxu0 %v2030
    %3902 = vmatpush.bf16.msra.mxu0 %v2023
    %3903 = vmatmul.bf16.gmra.mxu0 %v3277
    %v3904 = vpop.f32.mrf.mxu0
    %v3905 = vadd.f32 %v3892, %v3904
    %v3906 = vpop.f32.mrf.mxu0
    %3907 = vdwg.mxu0
    %3908 = vmatpush.bf16.msra.mxu0 %v2128
    %3909 = vmatpush.bf16.msra.mxu0 %v2121
    %3910 = vmatpush.bf16.msra.mxu0 %v2114
    %3911 = vmatpush.bf16.msra.mxu0 %v2107
    %3912 = vmatpush.bf16.msra.mxu0 %v2100
    %3913 = vmatpush.bf16.msra.mxu0 %v2093
    %3914 = vmatpush.bf16.msra.mxu0 %v2086
    %3915 = vmatpush.bf16.msra.mxu0 %v2079
    %3916 = vmatmul.bf16.gmra.mxu0 %v3278
    %v3917 = vpop.f32.mrf.mxu0
    %v3918 = vadd.f32 %v3905, %v3917
    %v3919 = vpop.f32.mrf.mxu0
    %3920 = vdwg.mxu0
    %3921 = vmatpush.bf16.msra.mxu0 %v2184
    %3922 = vmatpush.bf16.msra.mxu0 %v2177
    %3923 = vmatpush.bf16.msra.mxu0 %v2170
    %3924 = vmatpush.bf16.msra.mxu0 %v2163
    %3925 = vmatpush.bf16.msra.mxu0 %v2156
    %3926 = vmatpush.bf16.msra.mxu0 %v2149
    %3927 = vmatpush.bf16.msra.mxu0 %v2142
    %3928 = vmatpush.bf16.msra.mxu0 %v2135
    %3929 = vmatmul.bf16.gmra.mxu0 %v3279
    %v3930 = vpop.f32.mrf.mxu0
    %v3931 = vadd.f32 %v3918, %v3930
    %v3932 = vpop.f32.mrf.mxu0
    %3933 = vdwg.mxu0
    %v3934 = vstv %s3272
    %v3935 = vmul.f32 %v3934, %v3385
    %v3936 = vmul.f32 %v3934, %v3476
    %v3937 = vmul.f32 %v3934, %v3567
    %v3938 = vmul.f32 %v3934, %v3658
    %v3939 = vmul.f32 %v3934, %v3749
    %v3940 = vmul.f32 %v3934, %v3840
    %v3941 = vmul.f32 %v3934, %v3931
    %v3942 = vstv %s3272
    %v3943 = vrsqrt.pop %v3942
    %v3944 = vmul.f32 %v3943, %v3942
    %v3945 = vmul.f32 %v3944, %v3943
    %v3946 = vmul.f32 0.5, %v3945
    %v3947 = vsub.f32 1.5, %v3946
    %v3948 = vmul.f32 %v3943, %v3947
    %v3949 = vmul.f32 %v3942, %v3948
    %vm3950 = vcmp.eq.f32.partialorder %v3942, inf
    %v3951 = vsel %vm3950, %v3942, %v3949
    %vm3952 = vcmp.eq.f32.partialorder %v3942, 0.0
    %v3953 = vand.u32 %v3942, 2147483648
    %v3954 = vsel %vm3952, %v3953, %v3951
    %s3955 = vtos %v3954
    %s3956 = ssub.f32 0.0, %s3955
    %v3957 = vstv %s45
    %v3958 = vmul.f32 %v3957, %v3935
    %v3959 = vmul.f32 %v3957, %v3936
    %v3960 = vmul.f32 %v3957, %v3937
    %v3961 = vmul.f32 %v3957, %v3938
    %v3962 = vmul.f32 %v3957, %v3939
    %v3963 = vmul.f32 %v3957, %v3940
    %v3964 = vmul.f32 %v3957, %v3941
    %v3965 = vadd.f32 %v46, %v3958
    %v3966 = vadd.f32 %v47, %v3959
    %v3967 = vadd.f32 %v48, %v3960
    %v3968 = vadd.f32 %v49, %v3961
    %v3969 = vadd.f32 %v50, %v3962
    %v3970 = vadd.f32 %v51, %v3963
    %v3971 = vadd.f32 %v52, %v3964
    %v3972 = vstv %s3956
    %v3973 = vmul.f32 %v3972, %v78
    %v3974 = vmul.f32 %v3972, %v79
    %v3975 = vmul.f32 %v3972, %v80
    %v3976 = vmul.f32 %v3972, %v81
    %v3977 = vmul.f32 %v3972, %v82
    %v3978 = vmul.f32 %v3972, %v83
    %v3979 = vmul.f32 %v3972, %v84
    %v3980 = vadd.f32 %v3965, %v3973
    %v3981 = vadd.f32 %v3966, %v3974
    %v3982 = vadd.f32 %v3967, %v3975
    %v3983 = vadd.f32 %v3968, %v3976
    %v3984 = vadd.f32 %v3969, %v3977
    %v3985 = vadd.f32 %v3970, %v3978
    %v3986 = vadd.f32 %v3971, %v3979
    %3987 = vst [vmem:[%s4] sm:$0xff] %v3980
    %3988 = vst [vmem:[%s4 + $0x8] sm:$0xff] %v3981
    %3989 = vst [vmem:[%s4 + $0x10] sm:$0xff] %v3982
    %3990 = vst [vmem:[%s4 + $0x18] sm:$0xff] %v3983
    %3991 = vst [vmem:[%s4 + $0x20] sm:$0xff] %v3984
    %3992 = vst [vmem:[%s4 + $0x28] sm:$0xff] %v3985
    %3993 = vst [vmem:[%s4 + $0x30] sm:$0xff] %v3986
  $region22: #{ddpm_reverse_forward.1} parent=0 // loop_footer
    %s36 = sadd.s32 1, %s32
  $region23: #{ddpm_reverse_forward.1} parent=0 // loop_footer_branch
    %31 = sbr.rel target = $region19
  $region24: #{ddpm_reverse_forward.1} parent=0 // loop_exit
    _
  // Predicated region
  $region25: #{ddpm_reverse_forward.1} parent=0 // pred_check
    _
  $region26: #{ddpm_reverse_forward.1} parent=0 // pred_check_branch
    %3995 = sbr.rel (0) target = $region28
  $region27: #{ddpm_reverse_forward.1} parent=0 // pred_region
    _
  $region28: #{ddpm_reverse_forward.1} parent=0 // pred_fallthru
    _
  // Predicated region
  $region29: #{ddpm_reverse_forward.1} parent=0 // pred_check
    _
  $region30: #{ddpm_reverse_forward.1} parent=0 // pred_check_branch
    %3997 = sbr.rel (0) target = $region32
  $region31: #{ddpm_reverse_forward.1} parent=0 // pred_region
    _
  $region32: #{ddpm_reverse_forward.1} parent=0 // pred_fallthru
    _

</llo_original>
